<compile_context>
chip_gen: v7x
topology: tpu7x:2x2x1
jax: 0.10.0
libtpu: 0.0.40
codegen_flags: <defaults>
</compile_context>

<pallas_src>
import functools

import jax
import jax.numpy as jnp
import numpy as np
from jax.experimental import pallas as pl
from jax.experimental.pallas import tpu as pltpu

K = 5  # every conv is 5x5, stride 1, valid padding


# ------------------------------ Pallas kernel ------------------------------ #

def _lenet_kernel(x_ref, w1_ref, b1_ref, w2_ref, b2_ref, w3_ref, b3_ref,
                  w4_ref, b4_ref, w5_ref, b5_ref, out_ref,
                  xp_ref, yw_ref, p1_ref, yw2_ref, *, tb):
    f32 = jnp.float32
    R1 = tb * 32   # conv1 row grid: rows = (b, h1), h1 in [0, 32)
    R2 = tb * 16   # pool1 / conv2 row grid: rows = (b, hp) / (b, h2)

    # ---- one-time init of the persistent pad rows / pad lanes ------------- #
    @pl.when(pl.program_id(0) == 0)
    def _init():
        xp_ref[...] = jnp.zeros_like(xp_ref)            # lanes 32..127 + pad rows
        p1_ref[R2:R2 + 8, :] = jnp.zeros((8, 128), f32)  # pad rows only

    # ---- stage 0: input tile into the row-padded, lane-padded scratch ----- #
    # xp layout: rows = b*32 + h (+8 zero pad rows), lanes = w in [0,32), rest 0
    xp_ref[0:R1, 0:32] = x_ref[...]

    # ---- conv1 (1->6) + ReLU as ONE im2col matmul -------------------------- #
    # lhs rows = (b, h1); K = (kh, w) on 5 aligned 128-lane blocks.
    # output lanes = dw*128 + wp*6 + c  (w1 = 2*wp + dw), only h1<28 is valid.
    lhs1 = jnp.concatenate([xp_ref[di:di + R1, :] for di in range(K)], axis=1)
    y1 = jnp.maximum(jnp.dot(lhs1, w1_ref[...], preferred_element_type=f32)
                     + b1_ref[...], 0.0)                         # (R1, 256)

    # pool1 over w: even/odd width phases are the two aligned lane halves
    yw_ref[...] = jnp.maximum(y1[:, 0:128], y1[:, 128:256])      # (R1, 128)
    # pool1 over h: stride-2 row pairs -> rows (b, hp), hp in [0,16) (valid <14)
    p1_ref[0:R2, :] = jnp.maximum(yw_ref[pl.ds(0, R2, stride=2), :],
                                  yw_ref[pl.ds(1, R2, stride=2), :])

    # ---- conv2 (6->16) + ReLU as ONE im2col matmul -------------------------- #
    # lhs rows = (b, h2); K = (kh, wp*6+c) on 5 aligned 128-lane blocks.
    # output lanes = dw2*128 + wq*16 + co  (w2 = 2*wq + dw2), only h2<10 valid.
    lhs2 = jnp.concatenate([p1_ref[di:di + R2, :] for di in range(K)], axis=1)
    y2 = jnp.maximum(jnp.dot(lhs2, w2_ref[...], preferred_element_type=f32)
                     + b2_ref[...], 0.0)                         # (R2, 256)

    # pool2 over w: aligned lane halves; keep rows (b, h2) for the h-pool below
    yw2_ref[...] = jnp.maximum(y2[:, 0:128], y2[:, 128:256])     # (R2, 128)

    # ---- conv3 (16->120) + ReLU: valid output only ------------------------- #
    # Gather each sample's 5x5x16 pool2 window (h-pool fused in) -> (tb, 640)
    # and do ONE matmul with the (640, 128) flattened conv3 weight.
    lhs3 = jnp.concatenate(
        [jnp.maximum(yw2_ref[pl.ds(2 * hq, tb, stride=16), :],
                     yw2_ref[pl.ds(2 * hq + 1, tb, stride=16), :])
         for hq in range(K)], axis=1)                            # (tb, 640)
    z3 = jnp.maximum(jnp.dot(lhs3, w3_ref[...], preferred_element_type=f32)
                     + b3_ref[...], 0.0)                         # (tb, 128)

    # ---- fc1 + fc2 (all operands zero-padded to 128 lanes) ----------------- #
    z4 = jnp.maximum(jnp.dot(z3, w4_ref[...], preferred_element_type=f32)
                     + b4_ref[...], 0.0)                         # (tb, 128)
    out_ref[...] = (jnp.dot(z4, w5_ref[...], preferred_element_type=f32)
                    + b5_ref[...])                               # (tb, 128)


# --------------------------------- wrapper --------------------------------- #

def lenet_forward(prepped, x):
    """x: (B, 1, 32, 32) f32 (NCHW) -> logits (B, 10)."""
    B = x.shape[0]
    tb = max(8, min(32, ((B + 7) // 8) * 8))      # batch tile, multiple of 8
    bpad = ((B + tb - 1) // tb) * tb
    grid_n = bpad // tb

    x = x.astype(jnp.float32)
    if bpad != B:
        x = jnp.pad(x, ((0, bpad - B), (0, 0), (0, 0), (0, 0)))
    x_rows = x.reshape(bpad * 32, 32)   # rows = b*32 + h, lanes = w (C=1)

    kernel = functools.partial(_lenet_kernel, tb=tb)

    def wspec(shape):
        return pl.BlockSpec(shape, lambda i: (0, 0))   # weights: resident block

    out = pl.pallas_call(
        kernel,
        out_shape=jax.ShapeDtypeStruct((bpad, 128), jnp.float32),
        grid=(grid_n,),
        in_specs=[
            pl.BlockSpec((tb * 32, 32), lambda i: (i, 0)),   # input rows
            wspec((640, 256)), wspec((1, 256)),              # conv1 (Toeplitz)
            wspec((640, 256)), wspec((1, 256)),              # conv2 (Toeplitz)
            wspec((640, 128)), wspec((1, 128)),              # conv3 (valid)
            wspec((128, 128)), wspec((1, 128)),              # fc1
            wspec((128, 128)), wspec((1, 128)),              # fc2
        ],
        out_specs=pl.BlockSpec((tb, 128), lambda i: (i, 0)),
        scratch_shapes=[
            pltpu.VMEM((tb * 32 + 8, 128), jnp.float32),   # padded input tile
            pltpu.VMEM((tb * 32, 128), jnp.float32),       # conv1 w-pooled rows
            pltpu.VMEM((tb * 16 + 8, 128), jnp.float32),   # padded pool1 grid
            pltpu.VMEM((tb * 16, 128), jnp.float32),       # conv2 w-pooled rows
        ],
        compiler_params=pltpu.CompilerParams(
            dimension_semantics=("parallel",),
            vmem_limit_bytes=32 * 1024 * 1024,
        ),
    )(x_rows, prepped["w1"], prepped["b1"], prepped["w2"], prepped["b2"],
      prepped["w3"], prepped["b3"], prepped["w4"], prepped["b4"],
      prepped["w5"], prepped["b5"])

    return out[:B, :10]


net_forward = jax.jit(lenet_forward)


# ------------------------------- parameters -------------------------------- #

def init_params(key):
    """Deterministic PyTorch-default-like uniform init (bound = 1/sqrt(fan_in))."""
    ks = jax.random.split(key, 10)

    def uinit(k, shape, fan_in):
        bound = 1.0 / jnp.sqrt(jnp.float32(fan_in))
        return jax.random.uniform(k, shape, jnp.float32, -bound, bound)

    p = {}
    p["conv1_w"] = uinit(ks[0], (6, 1, 5, 5), 1 * 5 * 5)
    p["conv1_b"] = uinit(ks[1], (6,), 1 * 5 * 5)
    p["conv2_w"] = uinit(ks[2], (16, 6, 5, 5), 6 * 5 * 5)
    p["conv2_b"] = uinit(ks[3], (16,), 6 * 5 * 5)
    p["conv3_w"] = uinit(ks[4], (120, 16, 5, 5), 16 * 5 * 5)
    p["conv3_b"] = uinit(ks[5], (120,), 16 * 5 * 5)
    p["fc1_w"] = uinit(ks[6], (84, 120), 120)   # PyTorch (out, in)
    p["fc1_b"] = uinit(ks[7], (84,), 120)
    p["fc2_w"] = uinit(ks[8], (10, 84), 84)
    p["fc2_b"] = uinit(ks[9], (10,), 84)
    return p


def prepare_params(p):
    """One-time weight re-layout (hoisted out of the forward pass).

    conv1/conv2 become block-Toeplitz matrices whose columns are ordered
    (width-phase, pooled-width, channel) so 2x2 width-pooling is a max of two
    aligned 128-lane halves.  conv3 is flattened to the single valid window.
    Everything is zero-padded to 128/256 lanes for dense MXU/VPU work.
    """
    f32 = np.float32
    w1 = np.asarray(p["conv1_w"], f32)   # (6, 1, 5, 5)
    b1 = np.asarray(p["conv1_b"], f32)
    w2 = np.asarray(p["conv2_w"], f32)   # (16, 6, 5, 5)
    b2 = np.asarray(p["conv2_b"], f32)
    w3 = np.asarray(p["conv3_w"], f32)   # (120, 16, 5, 5)
    b3 = np.asarray(p["conv3_b"], f32)
    w4 = np.asarray(p["fc1_w"], f32)     # (84, 120)
    b4 = np.asarray(p["fc1_b"], f32)
    w5 = np.asarray(p["fc2_w"], f32)     # (10, 84)
    b5 = np.asarray(p["fc2_b"], f32)

    # conv1: rows = (kh, w_in) in 5 blocks of 128 (only w_in<32 used),
    #        cols = dw*128 + wp*6 + c  with  w_out = 2*wp + dw.
    W1 = np.zeros((5 * 128, 256), f32)
    B1 = np.zeros((1, 256), f32)
    for dw in range(2):
        for wp in range(14):
            col = dw * 128 + wp * 6
            B1[0, col:col + 6] = b1
            for kh in range(5):
                for kw in range(5):
                    W1[kh * 128 + 2 * wp + dw + kw, col:col + 6] = w1[:, 0, kh, kw]

    # conv2: rows = (kh, wp*6+ci) in 5 blocks of 128,
    #        cols = dw2*128 + wq*16 + co  with  w_out = 2*wq + dw2.
    W2 = np.zeros((5 * 128, 256), f32)
    B2 = np.zeros((1, 256), f32)
    for dw2 in range(2):
        for wq in range(5):
            col = dw2 * 128 + wq * 16
            B2[0, col:col + 16] = b2
            for kh in range(5):
                for kw in range(5):
                    wp = 2 * wq + dw2 + kw
                    row = kh * 128 + wp * 6
                    W2[row:row + 6, col:col + 16] = w2[:, :, kh, kw].T  # (ci, co)

    # conv3 (valid (0,0) output only): rows = (kh, kw*16+ci), cols = co (pad 128)
    W3 = np.zeros((5 * 128, 128), f32)
    B3 = np.zeros((1, 128), f32)
    B3[0, :120] = b3
    for kh in range(5):
        for kw in range(5):
            row = kh * 128 + kw * 16
            W3[row:row + 16, :120] = w3[:, :, kh, kw].T                 # (ci, co)

    W4 = np.zeros((128, 128), f32); W4[:120, :84] = w4.T
    B4 = np.zeros((1, 128), f32);   B4[0, :84] = b4
    W5 = np.zeros((128, 128), f32); W5[:84, :10] = w5.T
    B5 = np.zeros((1, 128), f32);   B5[0, :10] = b5

    j = jnp.asarray
    return {"w1": j(W1), "b1": j(B1), "w2": j(W2), "b2": j(B2),
            "w3": j(W3), "b3": j(B3), "w4": j(W4), "b4": j(B4),
            "w5": j(W5), "b5": j(B5)}


# --------------------------- pure-JAX reference ----------------------------- #

@jax.jit
def reference_forward(params, x):
    def conv(a, w, b):
        y = jax.lax.conv_general_dilated(
            a, w, window_strides=(1, 1), padding="VALID",
            dimension_numbers=("NCHW", "OIHW", "NCHW"))
        return y + b.reshape(1, -1, 1, 1)

    def pool(a):
        return jax.lax.reduce_window(a, -jnp.inf, jax.lax.max,
                                     (1, 1, 2, 2), (1, 1, 2, 2), "VALID")

    a = pool(jax.nn.relu(conv(x, params["conv1_w"], params["conv1_b"])))
    a = pool(jax.nn.relu(conv(a, params["conv2_w"], params["conv2_b"])))
    a = jax.nn.relu(conv(a, params["conv3_w"], params["conv3_b"]))
    a = a.reshape(a.shape[0], -1)
    a = jax.nn.relu(a @ params["fc1_w"].T + params["fc1_b"])
    return a @ params["fc2_w"].T + params["fc2_b"]


# ----------------------------------- main ----------------------------------- #

if __name__ == "__main__":
    key = jax.random.PRNGKey(0)
    pkey, xkey = jax.random.split(key)
    params = init_params(pkey)
    prepped = prepare_params(params)
    x = jax.random.normal(xkey, (2, 1, 32, 32), dtype=jnp.float32)

    out = jax.block_until_ready(net_forward(prepped, x))
    assert out.shape == (2, 10), out.shape
    assert out.dtype == jnp.float32

    ref = jax.block_until_ready(reference_forward(params, x))
    np.testing.assert_allclose(np.asarray(out), np.asarray(ref),
                               rtol=2e-3, atol=2e-3)

    print("KERNEL_OK")
</pallas_src>

<mosaic_0001>
module attributes {stable_mosaic.version = 11 : i64} {
  func.func @_lenet_kernel(%arg0: i32, %arg1: memref<256x32xf32, #tpu.memory_space<vmem>>, %arg2: memref<640x256xf32, #tpu.memory_space<vmem>>, %arg3: memref<1x256xf32, #tpu.memory_space<vmem>>, %arg4: memref<640x256xf32, #tpu.memory_space<vmem>>, %arg5: memref<1x256xf32, #tpu.memory_space<vmem>>, %arg6: memref<640x128xf32, #tpu.memory_space<vmem>>, %arg7: memref<1x128xf32, #tpu.memory_space<vmem>>, %arg8: memref<128x128xf32, #tpu.memory_space<vmem>>, %arg9: memref<1x128xf32, #tpu.memory_space<vmem>>, %arg10: memref<128x128xf32, #tpu.memory_space<vmem>>, %arg11: memref<1x128xf32, #tpu.memory_space<vmem>>, %arg12: memref<8x128xf32, #tpu.memory_space<vmem>>, %arg13: memref<264x128xf32, #tpu.memory_space<vmem>>, %arg14: memref<256x128xf32, #tpu.memory_space<vmem>>, %arg15: memref<136x128xf32, #tpu.memory_space<vmem>>, %arg16: memref<128x128xf32, #tpu.memory_space<vmem>>) attributes {dimension_semantics = [#tpu.dimension_semantics<parallel>], iteration_bounds = array<i64: 1>, scalar_prefetch = 0 : i64, scratch_operands = 4 : i64, tpu.core_type = #tpu.core_type<tc>, window_params = [{transform_indices = @transform_0, window_bounds = array<i64: 256, 32>}, {pipeline_mode = #tpu.pipeline_mode<synchronous>, transform_indices = @transform_1, window_bounds = array<i64: 640, 256>}, {pipeline_mode = #tpu.pipeline_mode<synchronous>, transform_indices = @transform_2, window_bounds = array<i64: 1, 256>}, {pipeline_mode = #tpu.pipeline_mode<synchronous>, transform_indices = @transform_3, window_bounds = array<i64: 640, 256>}, {pipeline_mode = #tpu.pipeline_mode<synchronous>, transform_indices = @transform_4, window_bounds = array<i64: 1, 256>}, {pipeline_mode = #tpu.pipeline_mode<synchronous>, transform_indices = @transform_5, window_bounds = array<i64: 640, 128>}, {pipeline_mode = #tpu.pipeline_mode<synchronous>, transform_indices = @transform_6, window_bounds = array<i64: 1, 128>}, {pipeline_mode = #tpu.pipeline_mode<synchronous>, transform_indices = @transform_7, window_bounds = array<i64: 128, 128>}, {pipeline_mode = #tpu.pipeline_mode<synchronous>, transform_indices = @transform_8, window_bounds = array<i64: 1, 128>}, {pipeline_mode = #tpu.pipeline_mode<synchronous>, transform_indices = @transform_9, window_bounds = array<i64: 128, 128>}, {pipeline_mode = #tpu.pipeline_mode<synchronous>, transform_indices = @transform_10, window_bounds = array<i64: 1, 128>}, {transform_indices = @transform_11, window_bounds = array<i64: 8, 128>}]} {
    %c0_i32 = arith.constant 0 : i32
    %0 = arith.cmpi eq, %arg0, %c0_i32 : i32
    %1 = arith.extui %0 : i1 to i32
    %c0_i32_0 = arith.constant 0 : i32
    %2 = arith.cmpi ne, %1, %c0_i32_0 : i32
    scf.if %2 {
      %cst_75 = arith.constant 0.000000e+00 : f32
      %79 = vector.broadcast %cst_75 : f32 to vector<264x128xf32>
      %c0_76 = arith.constant 0 : index
      %c0_77 = arith.constant 0 : index
      %80 = vector.load %arg13[%c0_76, %c0_77] : memref<264x128xf32, #tpu.memory_space<vmem>>, vector<264x128xf32>
      tpu.vector_store %arg13[%c0_76, %c0_77], %79 {strides = array<i32>} : memref<264x128xf32, #tpu.memory_space<vmem>>, vector<264x128xf32>,
      %cst_78 = arith.constant 0.000000e+00 : f32
      %81 = vector.broadcast %cst_78 : f32 to vector<8x128xf32>
      %c128 = arith.constant 128 : index
      %c0_79 = arith.constant 0 : index
      %82 = vector.load %arg15[%c128, %c0_79] : memref<136x128xf32, #tpu.memory_space<vmem>>, vector<8x128xf32>
      tpu.vector_store %arg15[%c128, %c0_79], %81 {strides = array<i32>} : memref<136x128xf32, #tpu.memory_space<vmem>>, vector<8x128xf32>,
    } else {
    }
    %c0 = arith.constant 0 : index
    %c0_1 = arith.constant 0 : index
    %3 = vector.load %arg1[%c0, %c0_1] : memref<256x32xf32, #tpu.memory_space<vmem>>, vector<256x32xf32>
    %c0_2 = arith.constant 0 : index
    %c0_3 = arith.constant 0 : index
    %4 = vector.load %arg13[%c0_2, %c0_3] : memref<264x128xf32, #tpu.memory_space<vmem>>, vector<256x32xf32>
    tpu.vector_store %arg13[%c0_2, %c0_3], %3 {strides = array<i32>} : memref<264x128xf32, #tpu.memory_space<vmem>>, vector<256x32xf32>,
    %c0_4 = arith.constant 0 : index
    %c0_5 = arith.constant 0 : index
    %5 = vector.load %arg13[%c0_4, %c0_5] : memref<264x128xf32, #tpu.memory_space<vmem>>, vector<256x128xf32>
    %c1 = arith.constant 1 : index
    %c0_6 = arith.constant 0 : index
    %6 = vector.load %arg13[%c1, %c0_6] : memref<264x128xf32, #tpu.memory_space<vmem>>, vector<256x128xf32>
    %c2 = arith.constant 2 : index
    %c0_7 = arith.constant 0 : index
    %7 = vector.load %arg13[%c2, %c0_7] : memref<264x128xf32, #tpu.memory_space<vmem>>, vector<256x128xf32>
    %c3 = arith.constant 3 : index
    %c0_8 = arith.constant 0 : index
    %8 = vector.load %arg13[%c3, %c0_8] : memref<264x128xf32, #tpu.memory_space<vmem>>, vector<256x128xf32>
    %c4 = arith.constant 4 : index
    %c0_9 = arith.constant 0 : index
    %9 = vector.load %arg13[%c4, %c0_9] : memref<264x128xf32, #tpu.memory_space<vmem>>, vector<256x128xf32>
    %10 = tpu.concatenate %5, %6, %7, %8, %9 in 1 : vector<256x128xf32>, vector<256x128xf32>, vector<256x128xf32>, vector<256x128xf32>, vector<256x128xf32> -> vector<256x640xf32>
    %c0_10 = arith.constant 0 : index
    %c0_11 = arith.constant 0 : index
    %11 = vector.load %arg2[%c0_10, %c0_11] : memref<640x256xf32, #tpu.memory_space<vmem>>, vector<640x256xf32>
    %cst = arith.constant dense<0.000000e+00> : vector<256x256xf32>
    %12 = tpu.matmul %10, %11, %cst {dimension_numbers = #tpu.dot_dimension_numbers<[1], [0], [0], [1], [0, 0, 1, 1], [], []>} : vector<256x640xf32>, vector<640x256xf32>, vector<256x256xf32> -> vector<256x256xf32>
    %c0_12 = arith.constant 0 : index
    %c0_13 = arith.constant 0 : index
    %13 = vector.load %arg3[%c0_12, %c0_13] : memref<1x256xf32, #tpu.memory_space<vmem>>, vector<1x256xf32>
    %14 = vector.broadcast %13 : vector<1x256xf32> to vector<256x256xf32>
    %15 = arith.addf %12, %14 : vector<256x256xf32>
    %cst_14 = arith.constant 0.000000e+00 : f32
    %16 = vector.broadcast %cst_14 : f32 to vector<256x256xf32>
    %17 = arith.maximumf %15, %16 : vector<256x256xf32>
    %18 = vector.extract_strided_slice %17 {offsets = [0, 0], sizes = [256, 128], strides = [1, 1]} : vector<256x256xf32> to vector<256x128xf32>
    %19 = vector.extract_strided_slice %17 {offsets = [0, 128], sizes = [256, 128], strides = [1, 1]} : vector<256x256xf32> to vector<256x128xf32>
    %20 = arith.maximumf %18, %19 : vector<256x128xf32>
    %c0_15 = arith.constant 0 : index
    %c0_16 = arith.constant 0 : index
    %21 = vector.load %arg14[%c0_15, %c0_16] : memref<256x128xf32, #tpu.memory_space<vmem>>, vector<256x128xf32>
    tpu.vector_store %arg14[%c0_15, %c0_16], %20 {strides = array<i32>} : memref<256x128xf32, #tpu.memory_space<vmem>>, vector<256x128xf32>,
    %c0_17 = arith.constant 0 : index
    %c0_18 = arith.constant 0 : index
    %22 = tpu.strided_load %arg14[%c0_17, %c0_18] {strides = array<i32: 2, 1>} : memref<256x128xf32, #tpu.memory_space<vmem>>, vector<128x128xf32>
    %c1_19 = arith.constant 1 : index
    %c0_20 = arith.constant 0 : index
    %23 = tpu.strided_load %arg14[%c1_19, %c0_20] {strides = array<i32: 2, 1>} : memref<256x128xf32, #tpu.memory_space<vmem>>, vector<128x128xf32>
    %24 = arith.maximumf %22, %23 : vector<128x128xf32>
    %c0_21 = arith.constant 0 : index
    %c0_22 = arith.constant 0 : index
    %25 = vector.load %arg15[%c0_21, %c0_22] : memref<136x128xf32, #tpu.memory_space<vmem>>, vector<128x128xf32>
    tpu.vector_store %arg15[%c0_21, %c0_22], %24 {strides = array<i32>} : memref<136x128xf32, #tpu.memory_space<vmem>>, vector<128x128xf32>,
    %c0_23 = arith.constant 0 : index
    %c0_24 = arith.constant 0 : index
    %26 = vector.load %arg15[%c0_23, %c0_24] : memref<136x128xf32, #tpu.memory_space<vmem>>, vector<128x128xf32>
    %c1_25 = arith.constant 1 : index
    %c0_26 = arith.constant 0 : index
    %27 = vector.load %arg15[%c1_25, %c0_26] : memref<136x128xf32, #tpu.memory_space<vmem>>, vector<128x128xf32>
    %c2_27 = arith.constant 2 : index
    %c0_28 = arith.constant 0 : index
    %28 = vector.load %arg15[%c2_27, %c0_28] : memref<136x128xf32, #tpu.memory_space<vmem>>, vector<128x128xf32>
    %c3_29 = arith.constant 3 : index
    %c0_30 = arith.constant 0 : index
    %29 = vector.load %arg15[%c3_29, %c0_30] : memref<136x128xf32, #tpu.memory_space<vmem>>, vector<128x128xf32>
    %c4_31 = arith.constant 4 : index
    %c0_32 = arith.constant 0 : index
    %30 = vector.load %arg15[%c4_31, %c0_32] : memref<136x128xf32, #tpu.memory_space<vmem>>, vector<128x128xf32>
    %31 = tpu.concatenate %26, %27, %28, %29, %30 in 1 : vector<128x128xf32>, vector<128x128xf32>, vector<128x128xf32>, vector<128x128xf32>, vector<128x128xf32> -> vector<128x640xf32>
    %c0_33 = arith.constant 0 : index
    %c0_34 = arith.constant 0 : index
    %32 = vector.load %arg4[%c0_33, %c0_34] : memref<640x256xf32, #tpu.memory_space<vmem>>, vector<640x256xf32>
    %cst_35 = arith.constant dense<0.000000e+00> : vector<128x256xf32>
    %33 = tpu.matmul %31, %32, %cst_35 {dimension_numbers = #tpu.dot_dimension_numbers<[1], [0], [0], [1], [0, 0, 1, 1], [], []>} : vector<128x640xf32>, vector<640x256xf32>, vector<128x256xf32> -> vector<128x256xf32>
    %c0_36 = arith.constant 0 : index
    %c0_37 = arith.constant 0 : index
    %34 = vector.load %arg5[%c0_36, %c0_37] : memref<1x256xf32, #tpu.memory_space<vmem>>, vector<1x256xf32>
    %35 = vector.broadcast %34 : vector<1x256xf32> to vector<128x256xf32>
    %36 = arith.addf %33, %35 : vector<128x256xf32>
    %cst_38 = arith.constant 0.000000e+00 : f32
    %37 = vector.broadcast %cst_38 : f32 to vector<128x256xf32>
    %38 = arith.maximumf %36, %37 : vector<128x256xf32>
    %39 = vector.extract_strided_slice %38 {offsets = [0, 0], sizes = [128, 128], strides = [1, 1]} : vector<128x256xf32> to vector<128x128xf32>
    %40 = vector.extract_strided_slice %38 {offsets = [0, 128], sizes = [128, 128], strides = [1, 1]} : vector<128x256xf32> to vector<128x128xf32>
    %41 = arith.maximumf %39, %40 : vector<128x128xf32>
    %c0_39 = arith.constant 0 : index
    %c0_40 = arith.constant 0 : index
    %42 = vector.load %arg16[%c0_39, %c0_40] : memref<128x128xf32, #tpu.memory_space<vmem>>, vector<128x128xf32>
    tpu.vector_store %arg16[%c0_39, %c0_40], %41 {strides = array<i32>} : memref<128x128xf32, #tpu.memory_space<vmem>>, vector<128x128xf32>,
    %c0_41 = arith.constant 0 : index
    %c0_42 = arith.constant 0 : index
    %43 = tpu.strided_load %arg16[%c0_41, %c0_42] {strides = array<i32: 16, 1>} : memref<128x128xf32, #tpu.memory_space<vmem>>, vector<8x128xf32>
    %c1_43 = arith.constant 1 : index
    %c0_44 = arith.constant 0 : index
    %44 = tpu.strided_load %arg16[%c1_43, %c0_44] {strides = array<i32: 16, 1>} : memref<128x128xf32, #tpu.memory_space<vmem>>, vector<8x128xf32>
    %45 = arith.maximumf %43, %44 : vector<8x128xf32>
    %c2_45 = arith.constant 2 : index
    %c0_46 = arith.constant 0 : index
    %46 = tpu.strided_load %arg16[%c2_45, %c0_46] {strides = array<i32: 16, 1>} : memref<128x128xf32, #tpu.memory_space<vmem>>, vector<8x128xf32>
    %c3_47 = arith.constant 3 : index
    %c0_48 = arith.constant 0 : index
    %47 = tpu.strided_load %arg16[%c3_47, %c0_48] {strides = array<i32: 16, 1>} : memref<128x128xf32, #tpu.memory_space<vmem>>, vector<8x128xf32>
    %48 = arith.maximumf %46, %47 : vector<8x128xf32>
    %c4_49 = arith.constant 4 : index
    %c0_50 = arith.constant 0 : index
    %49 = tpu.strided_load %arg16[%c4_49, %c0_50] {strides = array<i32: 16, 1>} : memref<128x128xf32, #tpu.memory_space<vmem>>, vector<8x128xf32>
    %c5 = arith.constant 5 : index
    %c0_51 = arith.constant 0 : index
    %50 = tpu.strided_load %arg16[%c5, %c0_51] {strides = array<i32: 16, 1>} : memref<128x128xf32, #tpu.memory_space<vmem>>, vector<8x128xf32>
    %51 = arith.maximumf %49, %50 : vector<8x128xf32>
    %c6 = arith.constant 6 : index
    %c0_52 = arith.constant 0 : index
    %52 = tpu.strided_load %arg16[%c6, %c0_52] {strides = array<i32: 16, 1>} : memref<128x128xf32, #tpu.memory_space<vmem>>, vector<8x128xf32>
    %c7 = arith.constant 7 : index
    %c0_53 = arith.constant 0 : index
    %53 = tpu.strided_load %arg16[%c7, %c0_53] {strides = array<i32: 16, 1>} : memref<128x128xf32, #tpu.memory_space<vmem>>, vector<8x128xf32>
    %54 = arith.maximumf %52, %53 : vector<8x128xf32>
    %c8 = arith.constant 8 : index
    %c0_54 = arith.constant 0 : index
    %55 = tpu.strided_load %arg16[%c8, %c0_54] {strides = array<i32: 16, 1>} : memref<128x128xf32, #tpu.memory_space<vmem>>, vector<8x128xf32>
    %c9 = arith.constant 9 : index
    %c0_55 = arith.constant 0 : index
    %56 = tpu.strided_load %arg16[%c9, %c0_55] {strides = array<i32: 16, 1>} : memref<128x128xf32, #tpu.memory_space<vmem>>, vector<8x128xf32>
    %57 = arith.maximumf %55, %56 : vector<8x128xf32>
    %58 = tpu.concatenate %45, %48, %51, %54, %57 in 1 : vector<8x128xf32>, vector<8x128xf32>, vector<8x128xf32>, vector<8x128xf32>, vector<8x128xf32> -> vector<8x640xf32>
    %c0_56 = arith.constant 0 : index
    %c0_57 = arith.constant 0 : index
    %59 = vector.load %arg6[%c0_56, %c0_57] : memref<640x128xf32, #tpu.memory_space<vmem>>, vector<640x128xf32>
    %cst_58 = arith.constant dense<0.000000e+00> : vector<8x128xf32>
    %60 = tpu.matmul %58, %59, %cst_58 {dimension_numbers = #tpu.dot_dimension_numbers<[1], [0], [0], [1], [0, 0, 1, 1], [], []>} : vector<8x640xf32>, vector<640x128xf32>, vector<8x128xf32> -> vector<8x128xf32>
    %c0_59 = arith.constant 0 : index
    %c0_60 = arith.constant 0 : index
    %61 = vector.load %arg7[%c0_59, %c0_60] : memref<1x128xf32, #tpu.memory_space<vmem>>, vector<1x128xf32>
    %62 = vector.broadcast %61 : vector<1x128xf32> to vector<8x128xf32>
    %63 = arith.addf %60, %62 : vector<8x128xf32>
    %cst_61 = arith.constant 0.000000e+00 : f32
    %64 = vector.broadcast %cst_61 : f32 to vector<8x128xf32>
    %65 = arith.maximumf %63, %64 : vector<8x128xf32>
    %c0_62 = arith.constant 0 : index
    %c0_63 = arith.constant 0 : index
    %66 = vector.load %arg8[%c0_62, %c0_63] : memref<128x128xf32, #tpu.memory_space<vmem>>, vector<128x128xf32>
    %cst_64 = arith.constant dense<0.000000e+00> : vector<8x128xf32>
    %67 = tpu.matmul %65, %66, %cst_64 {dimension_numbers = #tpu.dot_dimension_numbers<[1], [0], [0], [1], [0, 0, 1, 1], [], []>} : vector<8x128xf32>, vector<128x128xf32>, vector<8x128xf32> -> vector<8x128xf32>
    %c0_65 = arith.constant 0 : index
    %c0_66 = arith.constant 0 : index
    %68 = vector.load %arg9[%c0_65, %c0_66] : memref<1x128xf32, #tpu.memory_space<vmem>>, vector<1x128xf32>
    %69 = vector.broadcast %68 : vector<1x128xf32> to vector<8x128xf32>
    %70 = arith.addf %67, %69 : vector<8x128xf32>
    %cst_67 = arith.constant 0.000000e+00 : f32
    %71 = vector.broadcast %cst_67 : f32 to vector<8x128xf32>
    %72 = arith.maximumf %70, %71 : vector<8x128xf32>
    %c0_68 = arith.constant 0 : index
    %c0_69 = arith.constant 0 : index
    %73 = vector.load %arg10[%c0_68, %c0_69] : memref<128x128xf32, #tpu.memory_space<vmem>>, vector<128x128xf32>
    %cst_70 = arith.constant dense<0.000000e+00> : vector<8x128xf32>
    %74 = tpu.matmul %72, %73, %cst_70 {dimension_numbers = #tpu.dot_dimension_numbers<[1], [0], [0], [1], [0, 0, 1, 1], [], []>} : vector<8x128xf32>, vector<128x128xf32>, vector<8x128xf32> -> vector<8x128xf32>
    %c0_71 = arith.constant 0 : index
    %c0_72 = arith.constant 0 : index
    %75 = vector.load %arg11[%c0_71, %c0_72] : memref<1x128xf32, #tpu.memory_space<vmem>>, vector<1x128xf32>
    %76 = vector.broadcast %75 : vector<1x128xf32> to vector<8x128xf32>
    %77 = arith.addf %74, %76 : vector<8x128xf32>
    %c0_73 = arith.constant 0 : index
    %c0_74 = arith.constant 0 : index
    %78 = vector.load %arg12[%c0_73, %c0_74] : memref<8x128xf32, #tpu.memory_space<vmem>>, vector<8x128xf32>
    tpu.vector_store %arg12[%c0_73, %c0_74], %77 {strides = array<i32>} : memref<8x128xf32, #tpu.memory_space<vmem>>, vector<8x128xf32>,
    return
  }
  func.func @transform_0(%arg0: i32) -> (i32, i32) {
    %c0_i32 = arith.constant 0 : i32
    %c0_i32_0 = arith.constant 0 : i32
    return %arg0, %c0_i32 : i32, i32
  }
  func.func @transform_1(%arg0: i32) -> (i32, i32) {
    %c0_i32 = arith.constant 0 : i32
    %c0_i32_0 = arith.constant 0 : i32
    %c0_i32_1 = arith.constant 0 : i32
    return %c0_i32, %c0_i32_0 : i32, i32
  }
  func.func @transform_2(%arg0: i32) -> (i32, i32) {
    %c0_i32 = arith.constant 0 : i32
    %c0_i32_0 = arith.constant 0 : i32
    %c0_i32_1 = arith.constant 0 : i32
    return %c0_i32, %c0_i32_0 : i32, i32
  }
  func.func @transform_3(%arg0: i32) -> (i32, i32) {
    %c0_i32 = arith.constant 0 : i32
    %c0_i32_0 = arith.constant 0 : i32
    %c0_i32_1 = arith.constant 0 : i32
    return %c0_i32, %c0_i32_0 : i32, i32
  }
  func.func @transform_4(%arg0: i32) -> (i32, i32) {
    %c0_i32 = arith.constant 0 : i32
    %c0_i32_0 = arith.constant 0 : i32
    %c0_i32_1 = arith.constant 0 : i32
    return %c0_i32, %c0_i32_0 : i32, i32
  }
  func.func @transform_5(%arg0: i32) -> (i32, i32) {
    %c0_i32 = arith.constant 0 : i32
    %c0_i32_0 = arith.constant 0 : i32
    %c0_i32_1 = arith.constant 0 : i32
    return %c0_i32, %c0_i32_0 : i32, i32
  }
  func.func @transform_6(%arg0: i32) -> (i32, i32) {
    %c0_i32 = arith.constant 0 : i32
    %c0_i32_0 = arith.constant 0 : i32
    %c0_i32_1 = arith.constant 0 : i32
    return %c0_i32, %c0_i32_0 : i32, i32
  }
  func.func @transform_7(%arg0: i32) -> (i32, i32) {
    %c0_i32 = arith.constant 0 : i32
    %c0_i32_0 = arith.constant 0 : i32
    %c0_i32_1 = arith.constant 0 : i32
    return %c0_i32, %c0_i32_0 : i32, i32
  }
  func.func @transform_8(%arg0: i32) -> (i32, i32) {
    %c0_i32 = arith.constant 0 : i32
    %c0_i32_0 = arith.constant 0 : i32
    %c0_i32_1 = arith.constant 0 : i32
    return %c0_i32, %c0_i32_0 : i32, i32
  }
  func.func @transform_9(%arg0: i32) -> (i32, i32) {
    %c0_i32 = arith.constant 0 : i32
    %c0_i32_0 = arith.constant 0 : i32
    %c0_i32_1 = arith.constant 0 : i32
    return %c0_i32, %c0_i32_0 : i32, i32
  }
  func.func @transform_10(%arg0: i32) -> (i32, i32) {
    %c0_i32 = arith.constant 0 : i32
    %c0_i32_0 = arith.constant 0 : i32
    %c0_i32_1 = arith.constant 0 : i32
    return %c0_i32, %c0_i32_0 : i32, i32
  }
  func.func @transform_11(%arg0: i32) -> (i32, i32) {
    %c0_i32 = arith.constant 0 : i32
    %c0_i32_0 = arith.constant 0 : i32
    return %arg0, %c0_i32 : i32, i32
  }
}

</mosaic_0001>

<llo_original>
// kernel: lenet_forward.1
$region0: #{lenet_forward.1}
  #allocation0 [shape = 'u32[]', space=smem, size = 0x4, offset = 0x4, fixed_abs, tag = 'smem constant byte address 0x4 - core index']
  #allocation1 [shape = 'u32[144,128]{1,0:T(1,128)}', space=vmem, size = 0x12000, scoped, tag = 'internal scratch']
  #allocation2 [shape = 'f32[264,128]{1,0:T(8,128)}', space=vmem, size = 0x21000, scoped, tag = 'scratch operand']
  #allocation3 [shape = 'f32[256,128]{1,0:T(8,128)}', space=vmem, size = 0x20000, scoped, tag = 'scratch operand']
  #allocation4 [shape = 'f32[136,128]{1,0:T(8,128)}', space=vmem, size = 0x11000, scoped, tag = 'scratch operand']
  #allocation5 [shape = 'f32[128,128]{1,0:T(8,128)}', space=vmem, size = 0x10000, scoped, tag = 'scratch operand']
  %s0 = inlined_call_operand.vmem [shape: f32[256,32], index: 0, kind: input, shape index: {}]
  %s1 = inlined_call_operand.hbm [shape: f32[640,256], index: 1, kind: input, shape index: {}]
  %s2 = inlined_call_operand.vmem [shape: f32[1,256], index: 2, kind: input, shape index: {}]
  %s3 = inlined_call_operand.hbm [shape: f32[640,256], index: 3, kind: input, shape index: {}]
  %s4 = inlined_call_operand.vmem [shape: f32[1,256], index: 4, kind: input, shape index: {}]
  %s5 = inlined_call_operand.hbm [shape: f32[640,128], index: 5, kind: input, shape index: {}]
  %s6 = inlined_call_operand.vmem [shape: f32[1,128], index: 6, kind: input, shape index: {}]
  %s7 = inlined_call_operand.vmem [shape: f32[128,128], index: 7, kind: input, shape index: {}]
  %s8 = inlined_call_operand.vmem [shape: f32[1,128], index: 8, kind: input, shape index: {}]
  %s9 = inlined_call_operand.vmem [shape: f32[128,128], index: 9, kind: input, shape index: {}]
  %s10 = inlined_call_operand.vmem [shape: f32[1,128], index: 10, kind: input, shape index: {}]
  %s11 = inlined_call_operand.vmem [shape: f32[8,128], index: 11, kind: output, shape index: {}]
  %s12 = sld [smem:[#allocation0]]
  $region70: #{lenet_forward.1} parent=0
    _
  %s14 = ssub.s32 1, %s12
  %s15 = scalar_select 0, %s14, %s12
  $region1: #{lenet_forward.1} parent=0
    #allocation6 [shape = 'u8[655360]{0}', space=vmem, size = 0xa0000, scoped, tag = 'input window, operand 1, single buffered']
    #allocation7 [shape = 's32[1]{0}', space=sflag, size = 0x4, scoped, tag = 'scoped memory for lenet_forward.1']
    #allocation8 [shape = 'u8[655360]{0}', space=vmem, size = 0xa0000, scoped, tag = 'input window, operand 3, single buffered']
    #allocation9 [shape = 's32[1]{0}', space=sflag, size = 0x4, scoped, tag = 'scoped memory for lenet_forward.1']
    #allocation10 [shape = 'u8[327680]{0}', space=vmem, size = 0x50000, scoped, tag = 'input window, operand 5, single buffered']
    %16 = vsyncpa [#allocation7], 0
    %17 = vsyncpa [#allocation9], 0
    // Predicated region
    $region2: #{lenet_forward.1} parent=1 // pred_check
      _
    $region3: #{lenet_forward.1} parent=1 // pred_check_branch
      %19 = sbr.rel (0) target = $region5
    $region4: #{lenet_forward.1} parent=1 // pred_region
      _
    $region5: #{lenet_forward.1} parent=1 // pred_fallthru
      _
    // Predicated region
    $region6: #{lenet_forward.1} parent=1 // pred_check
      _
    $region7: #{lenet_forward.1} parent=1 // pred_check_branch
      %21 = sbr.rel (0) target = $region9
    $region8: #{lenet_forward.1} parent=1 // pred_region
      %s23 = ssub.s32 20480, 20480
      %24 = vsyncadd [#allocation7], %s23
      %s25 = sshll.u32 [#allocation6], 4
      %s26 = int_to_ptr.vmem [resolvable:$true] %s25
      %31 = dma.hbm_to_vmem [thread:$0]  %s1, 20480, %s26, [#allocation7], 256, 256, 16
    $region9: #{lenet_forward.1} parent=1 // pred_fallthru
      _
    // Predicated region
    $region10: #{lenet_forward.1} parent=1 // pred_check
      _
    $region11: #{lenet_forward.1} parent=1 // pred_check_branch
      %33 = sbr.rel (0) target = $region13
    $region12: #{lenet_forward.1} parent=1 // pred_region
      _
    $region13: #{lenet_forward.1} parent=1 // pred_fallthru
      _
    // Predicated region
    $region14: #{lenet_forward.1} parent=1 // pred_check
      _
    $region15: #{lenet_forward.1} parent=1 // pred_check_branch
      %35 = sbr.rel (0) target = $region17
    $region16: #{lenet_forward.1} parent=1 // pred_region
      %s37 = ssub.s32 20480, 20480
      %38 = vsyncadd [#allocation9], %s37
      %s39 = sshll.u32 [#allocation8], 4
      %s40 = int_to_ptr.vmem [resolvable:$true] %s39
      %45 = dma.hbm_to_vmem [thread:$0]  %s3, 20480, %s40, [#allocation9], 256, 256, 16
    $region17: #{lenet_forward.1} parent=1 // pred_fallthru
      _
    // Predicated region
    $region18: #{lenet_forward.1} parent=1 // pred_check
      _
    $region19: #{lenet_forward.1} parent=1 // pred_check_branch
      %47 = sbr.rel (0) target = $region21
    $region20: #{lenet_forward.1} parent=1 // pred_region
      _
    $region21: #{lenet_forward.1} parent=1 // pred_fallthru
      _
    // Predicated region
    $region22: #{lenet_forward.1} parent=1 // pred_check
      _
    $region23: #{lenet_forward.1} parent=1 // pred_check_branch
      %49 = sbr.rel (0) target = $region25
    $region24: #{lenet_forward.1} parent=1 // pred_region
      %s51 = ssub.s32 10240, 10240
      %52 = vsyncadd [#allocation9], %s51
      %s53 = sshll.u32 [#allocation10], 4
      %s54 = int_to_ptr.vmem [resolvable:$true] %s53
      %59 = dma.hbm_to_vmem [thread:$0]  %s5, 10240, %s54, [#allocation9], 128, 128, 8
    $region25: #{lenet_forward.1} parent=1 // pred_fallthru
      _
    // Predicated region
    $region26: #{lenet_forward.1} parent=1 // pred_check
      _
    $region27: #{lenet_forward.1} parent=1 // pred_check_branch
      %61 = sbr.rel (0) target = $region29
    $region28: #{lenet_forward.1} parent=1 // pred_region
      _
    $region29: #{lenet_forward.1} parent=1 // pred_fallthru
      _
    // Predicated region
    $region30: #{lenet_forward.1} parent=1 // pred_check
      _
    $region31: #{lenet_forward.1} parent=1 // pred_check_branch
      %63 = sbr.rel (0) target = $region33
    $region32: #{lenet_forward.1} parent=1 // pred_region
      _
    $region33: #{lenet_forward.1} parent=1 // pred_fallthru
      _
    // Predicated region
    $region34: #{lenet_forward.1} parent=1 // pred_check
      _
    $region35: #{lenet_forward.1} parent=1 // pred_check_branch
      %65 = sbr.rel (0) target = $region37
    $region36: #{lenet_forward.1} parent=1 // pred_region
      _
    $region37: #{lenet_forward.1} parent=1 // pred_fallthru
      _
    // Predicated region
    $region38: #{lenet_forward.1} parent=1 // pred_check
      _
    $region39: #{lenet_forward.1} parent=1 // pred_check_branch
      %67 = sbr.rel (0) target = $region41
    $region40: #{lenet_forward.1} parent=1 // pred_region
      _
    $region41: #{lenet_forward.1} parent=1 // pred_fallthru
      _
    // Predicated region
    $region42: #{lenet_forward.1} parent=1 // pred_check
      _
    $region43: #{lenet_forward.1} parent=1 // pred_check_branch
      %69 = sbr.rel (0) target = $region45
    $region44: #{lenet_forward.1} parent=1 // pred_region
      _
    $region45: #{lenet_forward.1} parent=1 // pred_fallthru
      _
    // Predicated region
    $region46: #{lenet_forward.1} parent=1 // pred_check
      _
    $region47: #{lenet_forward.1} parent=1 // pred_check_branch
      %71 = sbr.rel (0) target = $region49
    $region48: #{lenet_forward.1} parent=1 // pred_region
      %72 = dma.done [#allocation7], 20480
    $region49: #{lenet_forward.1} parent=1 // pred_fallthru
      _
    // Predicated region
    $region50: #{lenet_forward.1} parent=1 // pred_check
      _
    $region51: #{lenet_forward.1} parent=1 // pred_check_branch
      %74 = sbr.rel (0) target = $region53
    $region52: #{lenet_forward.1} parent=1 // pred_region
      %75 = dma.done [#allocation9], 20480
    $region53: #{lenet_forward.1} parent=1 // pred_fallthru
      _
    // Predicated region
    $region54: #{lenet_forward.1} parent=1 // pred_check
      _
    $region55: #{lenet_forward.1} parent=1 // pred_check_branch
      %77 = sbr.rel (0) target = $region57
    $region56: #{lenet_forward.1} parent=1 // pred_region
      %78 = dma.done [#allocation9], 10240
    $region57: #{lenet_forward.1} parent=1 // pred_fallthru
      _
    %p79 = scmp.eq.s32.totalorder 0, 0
    // Predicated region
    $region58: #{lenet_forward.1} parent=1 // pred_check
      %p80 = pneg %p79
    $region59: #{lenet_forward.1} parent=1 // pred_check_branch
      %82 = sbr.rel (%p80) target = $region61
    $region60: #{lenet_forward.1} parent=1 // pred_region
      %83 = vst [vmem:[#allocation2] sm:$0xff] 0.0
      %84 = vst [vmem:[#allocation2 + $0x8] sm:$0xff] 0.0
      %85 = vst [vmem:[#allocation2 + $0x10] sm:$0xff] 0.0
      %86 = vst [vmem:[#allocation2 + $0x18] sm:$0xff] 0.0
      %87 = vst [vmem:[#allocation2 + $0x20] sm:$0xff] 0.0
      %88 = vst [vmem:[#allocation2 + $0x28] sm:$0xff] 0.0
      %89 = vst [vmem:[#allocation2 + $0x30] sm:$0xff] 0.0
      %90 = vst [vmem:[#allocation2 + $0x38] sm:$0xff] 0.0
      %91 = vst [vmem:[#allocation2 + $0x40] sm:$0xff] 0.0
      %92 = vst [vmem:[#allocation2 + $0x48] sm:$0xff] 0.0
      %93 = vst [vmem:[#allocation2 + $0x50] sm:$0xff] 0.0
      %94 = vst [vmem:[#allocation2 + $0x58] sm:$0xff] 0.0
      %95 = vst [vmem:[#allocation2 + $0x60] sm:$0xff] 0.0
      %96 = vst [vmem:[#allocation2 + $0x68] sm:$0xff] 0.0
      %97 = vst [vmem:[#allocation2 + $0x70] sm:$0xff] 0.0
      %98 = vst [vmem:[#allocation2 + $0x78] sm:$0xff] 0.0
      %99 = vst [vmem:[#allocation2 + $0x80] sm:$0xff] 0.0
      %100 = vst [vmem:[#allocation2 + $0x88] sm:$0xff] 0.0
      %101 = vst [vmem:[#allocation2 + $0x90] sm:$0xff] 0.0
      %102 = vst [vmem:[#allocation2 + $0x98] sm:$0xff] 0.0
      %103 = vst [vmem:[#allocation2 + $0xa0] sm:$0xff] 0.0
      %104 = vst [vmem:[#allocation2 + $0xa8] sm:$0xff] 0.0
      %105 = vst [vmem:[#allocation2 + $0xb0] sm:$0xff] 0.0
      %106 = vst [vmem:[#allocation2 + $0xb8] sm:$0xff] 0.0
      %107 = vst [vmem:[#allocation2 + $0xc0] sm:$0xff] 0.0
      %108 = vst [vmem:[#allocation2 + $0xc8] sm:$0xff] 0.0
      %109 = vst [vmem:[#allocation2 + $0xd0] sm:$0xff] 0.0
      %110 = vst [vmem:[#allocation2 + $0xd8] sm:$0xff] 0.0
      %111 = vst [vmem:[#allocation2 + $0xe0] sm:$0xff] 0.0
      %112 = vst [vmem:[#allocation2 + $0xe8] sm:$0xff] 0.0
      %113 = vst [vmem:[#allocation2 + $0xf0] sm:$0xff] 0.0
      %114 = vst [vmem:[#allocation2 + $0xf8] sm:$0xff] 0.0
      %115 = vst [vmem:[#allocation2 + $0x100] sm:$0xff] 0.0
      %116 = vst [vmem:[#allocation4 + $0x80] sm:$0xff] 0.0
    $region61: #{lenet_forward.1} parent=1 // pred_fallthru
      _
    %v117 = vld [vmem:[%s0] sm:$0xff]
    %v118 = vld [vmem:[%s0 + $0x8] sm:$0xff]
    %v119 = vld [vmem:[%s0 + $0x10] sm:$0xff]
    %v120 = vld [vmem:[%s0 + $0x18] sm:$0xff]
    %v121 = vld [vmem:[%s0 + $0x20] sm:$0xff]
    %v122 = vld [vmem:[%s0 + $0x28] sm:$0xff]
    %v123 = vld [vmem:[%s0 + $0x30] sm:$0xff]
    %v124 = vld [vmem:[%s0 + $0x38] sm:$0xff]
    %v125 = vld [vmem:[%s0 + $0x40] sm:$0xff]
    %v126 = vld [vmem:[%s0 + $0x48] sm:$0xff]
    %v127 = vld [vmem:[%s0 + $0x50] sm:$0xff]
    %v128 = vld [vmem:[%s0 + $0x58] sm:$0xff]
    %v129 = vld [vmem:[%s0 + $0x60] sm:$0xff]
    %v130 = vld [vmem:[%s0 + $0x68] sm:$0xff]
    %v131 = vld [vmem:[%s0 + $0x70] sm:$0xff]
    %v132 = vld [vmem:[%s0 + $0x78] sm:$0xff]
    %v133 = vld [vmem:[%s0 + $0x80] sm:$0xff]
    %v134 = vld [vmem:[%s0 + $0x88] sm:$0xff]
    %v135 = vld [vmem:[%s0 + $0x90] sm:$0xff]
    %v136 = vld [vmem:[%s0 + $0x98] sm:$0xff]
    %v137 = vld [vmem:[%s0 + $0xa0] sm:$0xff]
    %v138 = vld [vmem:[%s0 + $0xa8] sm:$0xff]
    %v139 = vld [vmem:[%s0 + $0xb0] sm:$0xff]
    %v140 = vld [vmem:[%s0 + $0xb8] sm:$0xff]
    %v141 = vld [vmem:[%s0 + $0xc0] sm:$0xff]
    %v142 = vld [vmem:[%s0 + $0xc8] sm:$0xff]
    %v143 = vld [vmem:[%s0 + $0xd0] sm:$0xff]
    %v144 = vld [vmem:[%s0 + $0xd8] sm:$0xff]
    %v145 = vld [vmem:[%s0 + $0xe0] sm:$0xff]
    %v146 = vld [vmem:[%s0 + $0xe8] sm:$0xff]
    %v147 = vld [vmem:[%s0 + $0xf0] sm:$0xff]
    %v148 = vld [vmem:[%s0 + $0xf8] sm:$0xff]
    %vm149 = vcmask 261120
    %150 = vst.msk [vmem:[#allocation2] sm:$0xff] %vm149, %v117
    %151 = vst.msk [vmem:[#allocation2 + $0x8] sm:$0xff] %vm149, %v118
    %152 = vst.msk [vmem:[#allocation2 + $0x10] sm:$0xff] %vm149, %v119
    %153 = vst.msk [vmem:[#allocation2 + $0x18] sm:$0xff] %vm149, %v120
    %154 = vst.msk [vmem:[#allocation2 + $0x20] sm:$0xff] %vm149, %v121
    %155 = vst.msk [vmem:[#allocation2 + $0x28] sm:$0xff] %vm149, %v122
    %156 = vst.msk [vmem:[#allocation2 + $0x30] sm:$0xff] %vm149, %v123
    %157 = vst.msk [vmem:[#allocation2 + $0x38] sm:$0xff] %vm149, %v124
    %158 = vst.msk [vmem:[#allocation2 + $0x40] sm:$0xff] %vm149, %v125
    %159 = vst.msk [vmem:[#allocation2 + $0x48] sm:$0xff] %vm149, %v126
    %160 = vst.msk [vmem:[#allocation2 + $0x50] sm:$0xff] %vm149, %v127
    %161 = vst.msk [vmem:[#allocation2 + $0x58] sm:$0xff] %vm149, %v128
    %162 = vst.msk [vmem:[#allocation2 + $0x60] sm:$0xff] %vm149, %v129
    %163 = vst.msk [vmem:[#allocation2 + $0x68] sm:$0xff] %vm149, %v130
    %164 = vst.msk [vmem:[#allocation2 + $0x70] sm:$0xff] %vm149, %v131
    %165 = vst.msk [vmem:[#allocation2 + $0x78] sm:$0xff] %vm149, %v132
    %166 = vst.msk [vmem:[#allocation2 + $0x80] sm:$0xff] %vm149, %v133
    %167 = vst.msk [vmem:[#allocation2 + $0x88] sm:$0xff] %vm149, %v134
    %168 = vst.msk [vmem:[#allocation2 + $0x90] sm:$0xff] %vm149, %v135
    %169 = vst.msk [vmem:[#allocation2 + $0x98] sm:$0xff] %vm149, %v136
    %170 = vst.msk [vmem:[#allocation2 + $0xa0] sm:$0xff] %vm149, %v137
    %171 = vst.msk [vmem:[#allocation2 + $0xa8] sm:$0xff] %vm149, %v138
    %172 = vst.msk [vmem:[#allocation2 + $0xb0] sm:$0xff] %vm149, %v139
    %173 = vst.msk [vmem:[#allocation2 + $0xb8] sm:$0xff] %vm149, %v140
    %174 = vst.msk [vmem:[#allocation2 + $0xc0] sm:$0xff] %vm149, %v141
    %175 = vst.msk [vmem:[#allocation2 + $0xc8] sm:$0xff] %vm149, %v142
    %176 = vst.msk [vmem:[#allocation2 + $0xd0] sm:$0xff] %vm149, %v143
    %177 = vst.msk [vmem:[#allocation2 + $0xd8] sm:$0xff] %vm149, %v144
    %178 = vst.msk [vmem:[#allocation2 + $0xe0] sm:$0xff] %vm149, %v145
    %179 = vst.msk [vmem:[#allocation2 + $0xe8] sm:$0xff] %vm149, %v146
    %180 = vst.msk [vmem:[#allocation2 + $0xf0] sm:$0xff] %vm149, %v147
    %181 = vst.msk [vmem:[#allocation2 + $0xf8] sm:$0xff] %vm149, %v148
    %v182 = vld [vmem:[#allocation2] sm:$0xff]
    %v183 = vld [vmem:[#allocation2 + $0x8] sm:$0xff]
    %v184 = vld [vmem:[#allocation2 + $0x10] sm:$0xff]
    %v185 = vld [vmem:[#allocation2 + $0x18] sm:$0xff]
    %v186 = vld [vmem:[#allocation2 + $0x20] sm:$0xff]
    %v187 = vld [vmem:[#allocation2 + $0x28] sm:$0xff]
    %v188 = vld [vmem:[#allocation2 + $0x30] sm:$0xff]
    %v189 = vld [vmem:[#allocation2 + $0x38] sm:$0xff]
    %v190 = vld [vmem:[#allocation2 + $0x40] sm:$0xff]
    %v191 = vld [vmem:[#allocation2 + $0x48] sm:$0xff]
    %v192 = vld [vmem:[#allocation2 + $0x50] sm:$0xff]
    %v193 = vld [vmem:[#allocation2 + $0x58] sm:$0xff]
    %v194 = vld [vmem:[#allocation2 + $0x60] sm:$0xff]
    %v195 = vld [vmem:[#allocation2 + $0x68] sm:$0xff]
    %v196 = vld [vmem:[#allocation2 + $0x70] sm:$0xff]
    %v197 = vld [vmem:[#allocation2 + $0x78] sm:$0xff]
    %v198 = vld [vmem:[#allocation2 + $0x80] sm:$0xff]
    %v199 = vld [vmem:[#allocation2 + $0x88] sm:$0xff]
    %v200 = vld [vmem:[#allocation2 + $0x90] sm:$0xff]
    %v201 = vld [vmem:[#allocation2 + $0x98] sm:$0xff]
    %v202 = vld [vmem:[#allocation2 + $0xa0] sm:$0xff]
    %v203 = vld [vmem:[#allocation2 + $0xa8] sm:$0xff]
    %v204 = vld [vmem:[#allocation2 + $0xb0] sm:$0xff]
    %v205 = vld [vmem:[#allocation2 + $0xb8] sm:$0xff]
    %v206 = vld [vmem:[#allocation2 + $0xc0] sm:$0xff]
    %v207 = vld [vmem:[#allocation2 + $0xc8] sm:$0xff]
    %v208 = vld [vmem:[#allocation2 + $0xd0] sm:$0xff]
    %v209 = vld [vmem:[#allocation2 + $0xd8] sm:$0xff]
    %v210 = vld [vmem:[#allocation2 + $0xe0] sm:$0xff]
    %v211 = vld [vmem:[#allocation2 + $0xe8] sm:$0xff]
    %v212 = vld [vmem:[#allocation2 + $0xf0] sm:$0xff]
    %v213 = vld [vmem:[#allocation2 + $0xf8] sm:$0xff]
    %v214 = vld [vmem:[#allocation2 + $0x1] sm:$0xff]
    %v215 = vld [vmem:[#allocation2 + $0x9] sm:$0xff]
    %v216 = vld [vmem:[#allocation2 + $0x11] sm:$0xff]
    %v217 = vld [vmem:[#allocation2 + $0x19] sm:$0xff]
    %v218 = vld [vmem:[#allocation2 + $0x21] sm:$0xff]
    %v219 = vld [vmem:[#allocation2 + $0x29] sm:$0xff]
    %v220 = vld [vmem:[#allocation2 + $0x31] sm:$0xff]
    %v221 = vld [vmem:[#allocation2 + $0x39] sm:$0xff]
    %v222 = vld [vmem:[#allocation2 + $0x41] sm:$0xff]
    %v223 = vld [vmem:[#allocation2 + $0x49] sm:$0xff]
    %v224 = vld [vmem:[#allocation2 + $0x51] sm:$0xff]
    %v225 = vld [vmem:[#allocation2 + $0x59] sm:$0xff]
    %v226 = vld [vmem:[#allocation2 + $0x61] sm:$0xff]
    %v227 = vld [vmem:[#allocation2 + $0x69] sm:$0xff]
    %v228 = vld [vmem:[#allocation2 + $0x71] sm:$0xff]
    %v229 = vld [vmem:[#allocation2 + $0x79] sm:$0xff]
    %v230 = vld [vmem:[#allocation2 + $0x81] sm:$0xff]
    %v231 = vld [vmem:[#allocation2 + $0x89] sm:$0xff]
    %v232 = vld [vmem:[#allocation2 + $0x91] sm:$0xff]
    %v233 = vld [vmem:[#allocation2 + $0x99] sm:$0xff]
    %v234 = vld [vmem:[#allocation2 + $0xa1] sm:$0xff]
    %v235 = vld [vmem:[#allocation2 + $0xa9] sm:$0xff]
    %v236 = vld [vmem:[#allocation2 + $0xb1] sm:$0xff]
    %v237 = vld [vmem:[#allocation2 + $0xb9] sm:$0xff]
    %v238 = vld [vmem:[#allocation2 + $0xc1] sm:$0xff]
    %v239 = vld [vmem:[#allocation2 + $0xc9] sm:$0xff]
    %v240 = vld [vmem:[#allocation2 + $0xd1] sm:$0xff]
    %v241 = vld [vmem:[#allocation2 + $0xd9] sm:$0xff]
    %v242 = vld [vmem:[#allocation2 + $0xe1] sm:$0xff]
    %v243 = vld [vmem:[#allocation2 + $0xe9] sm:$0xff]
    %v244 = vld [vmem:[#allocation2 + $0xf1] sm:$0xff]
    %v245 = vld [vmem:[#allocation2 + $0xf9] sm:$0xff]
    %v246 = vld [vmem:[#allocation2 + $0x2] sm:$0xff]
    %v247 = vld [vmem:[#allocation2 + $0xa] sm:$0xff]
    %v248 = vld [vmem:[#allocation2 + $0x12] sm:$0xff]
    %v249 = vld [vmem:[#allocation2 + $0x1a] sm:$0xff]
    %v250 = vld [vmem:[#allocation2 + $0x22] sm:$0xff]
    %v251 = vld [vmem:[#allocation2 + $0x2a] sm:$0xff]
    %v252 = vld [vmem:[#allocation2 + $0x32] sm:$0xff]
    %v253 = vld [vmem:[#allocation2 + $0x3a] sm:$0xff]
    %v254 = vld [vmem:[#allocation2 + $0x42] sm:$0xff]
    %v255 = vld [vmem:[#allocation2 + $0x4a] sm:$0xff]
    %v256 = vld [vmem:[#allocation2 + $0x52] sm:$0xff]
    %v257 = vld [vmem:[#allocation2 + $0x5a] sm:$0xff]
    %v258 = vld [vmem:[#allocation2 + $0x62] sm:$0xff]
    %v259 = vld [vmem:[#allocation2 + $0x6a] sm:$0xff]
    %v260 = vld [vmem:[#allocation2 + $0x72] sm:$0xff]
    %v261 = vld [vmem:[#allocation2 + $0x7a] sm:$0xff]
    %v262 = vld [vmem:[#allocation2 + $0x82] sm:$0xff]
    %v263 = vld [vmem:[#allocation2 + $0x8a] sm:$0xff]
    %v264 = vld [vmem:[#allocation2 + $0x92] sm:$0xff]
    %v265 = vld [vmem:[#allocation2 + $0x9a] sm:$0xff]
    %v266 = vld [vmem:[#allocation2 + $0xa2] sm:$0xff]
    %v267 = vld [vmem:[#allocation2 + $0xaa] sm:$0xff]
    %v268 = vld [vmem:[#allocation2 + $0xb2] sm:$0xff]
    %v269 = vld [vmem:[#allocation2 + $0xba] sm:$0xff]
    %v270 = vld [vmem:[#allocation2 + $0xc2] sm:$0xff]
    %v271 = vld [vmem:[#allocation2 + $0xca] sm:$0xff]
    %v272 = vld [vmem:[#allocation2 + $0xd2] sm:$0xff]
    %v273 = vld [vmem:[#allocation2 + $0xda] sm:$0xff]
    %v274 = vld [vmem:[#allocation2 + $0xe2] sm:$0xff]
    %v275 = vld [vmem:[#allocation2 + $0xea] sm:$0xff]
    %v276 = vld [vmem:[#allocation2 + $0xf2] sm:$0xff]
    %v277 = vld [vmem:[#allocation2 + $0xfa] sm:$0xff]
    %v278 = vld [vmem:[#allocation2 + $0x3] sm:$0xff]
    %v279 = vld [vmem:[#allocation2 + $0xb] sm:$0xff]
    %v280 = vld [vmem:[#allocation2 + $0x13] sm:$0xff]
    %v281 = vld [vmem:[#allocation2 + $0x1b] sm:$0xff]
    %v282 = vld [vmem:[#allocation2 + $0x23] sm:$0xff]
    %v283 = vld [vmem:[#allocation2 + $0x2b] sm:$0xff]
    %v284 = vld [vmem:[#allocation2 + $0x33] sm:$0xff]
    %v285 = vld [vmem:[#allocation2 + $0x3b] sm:$0xff]
    %v286 = vld [vmem:[#allocation2 + $0x43] sm:$0xff]
    %v287 = vld [vmem:[#allocation2 + $0x4b] sm:$0xff]
    %v288 = vld [vmem:[#allocation2 + $0x53] sm:$0xff]
    %v289 = vld [vmem:[#allocation2 + $0x5b] sm:$0xff]
    %v290 = vld [vmem:[#allocation2 + $0x63] sm:$0xff]
    %v291 = vld [vmem:[#allocation2 + $0x6b] sm:$0xff]
    %v292 = vld [vmem:[#allocation2 + $0x73] sm:$0xff]
    %v293 = vld [vmem:[#allocation2 + $0x7b] sm:$0xff]
    %v294 = vld [vmem:[#allocation2 + $0x83] sm:$0xff]
    %v295 = vld [vmem:[#allocation2 + $0x8b] sm:$0xff]
    %v296 = vld [vmem:[#allocation2 + $0x93] sm:$0xff]
    %v297 = vld [vmem:[#allocation2 + $0x9b] sm:$0xff]
    %v298 = vld [vmem:[#allocation2 + $0xa3] sm:$0xff]
    %v299 = vld [vmem:[#allocation2 + $0xab] sm:$0xff]
    %v300 = vld [vmem:[#allocation2 + $0xb3] sm:$0xff]
    %v301 = vld [vmem:[#allocation2 + $0xbb] sm:$0xff]
    %v302 = vld [vmem:[#allocation2 + $0xc3] sm:$0xff]
    %v303 = vld [vmem:[#allocation2 + $0xcb] sm:$0xff]
    %v304 = vld [vmem:[#allocation2 + $0xd3] sm:$0xff]
    %v305 = vld [vmem:[#allocation2 + $0xdb] sm:$0xff]
    %v306 = vld [vmem:[#allocation2 + $0xe3] sm:$0xff]
    %v307 = vld [vmem:[#allocation2 + $0xeb] sm:$0xff]
    %v308 = vld [vmem:[#allocation2 + $0xf3] sm:$0xff]
    %v309 = vld [vmem:[#allocation2 + $0xfb] sm:$0xff]
    %v310 = vld [vmem:[#allocation2 + $0x4] sm:$0xff]
    %v311 = vld [vmem:[#allocation2 + $0xc] sm:$0xff]
    %v312 = vld [vmem:[#allocation2 + $0x14] sm:$0xff]
    %v313 = vld [vmem:[#allocation2 + $0x1c] sm:$0xff]
    %v314 = vld [vmem:[#allocation2 + $0x24] sm:$0xff]
    %v315 = vld [vmem:[#allocation2 + $0x2c] sm:$0xff]
    %v316 = vld [vmem:[#allocation2 + $0x34] sm:$0xff]
    %v317 = vld [vmem:[#allocation2 + $0x3c] sm:$0xff]
    %v318 = vld [vmem:[#allocation2 + $0x44] sm:$0xff]
    %v319 = vld [vmem:[#allocation2 + $0x4c] sm:$0xff]
    %v320 = vld [vmem:[#allocation2 + $0x54] sm:$0xff]
    %v321 = vld [vmem:[#allocation2 + $0x5c] sm:$0xff]
    %v322 = vld [vmem:[#allocation2 + $0x64] sm:$0xff]
    %v323 = vld [vmem:[#allocation2 + $0x6c] sm:$0xff]
    %v324 = vld [vmem:[#allocation2 + $0x74] sm:$0xff]
    %v325 = vld [vmem:[#allocation2 + $0x7c] sm:$0xff]
    %v326 = vld [vmem:[#allocation2 + $0x84] sm:$0xff]
    %v327 = vld [vmem:[#allocation2 + $0x8c] sm:$0xff]
    %v328 = vld [vmem:[#allocation2 + $0x94] sm:$0xff]
    %v329 = vld [vmem:[#allocation2 + $0x9c] sm:$0xff]
    %v330 = vld [vmem:[#allocation2 + $0xa4] sm:$0xff]
    %v331 = vld [vmem:[#allocation2 + $0xac] sm:$0xff]
    %v332 = vld [vmem:[#allocation2 + $0xb4] sm:$0xff]
    %v333 = vld [vmem:[#allocation2 + $0xbc] sm:$0xff]
    %v334 = vld [vmem:[#allocation2 + $0xc4] sm:$0xff]
    %v335 = vld [vmem:[#allocation2 + $0xcc] sm:$0xff]
    %v336 = vld [vmem:[#allocation2 + $0xd4] sm:$0xff]
    %v337 = vld [vmem:[#allocation2 + $0xdc] sm:$0xff]
    %v338 = vld [vmem:[#allocation2 + $0xe4] sm:$0xff]
    %v339 = vld [vmem:[#allocation2 + $0xec] sm:$0xff]
    %v340 = vld [vmem:[#allocation2 + $0xf4] sm:$0xff]
    %v341 = vld [vmem:[#allocation2 + $0xfc] sm:$0xff]
    %v342 = vld [vmem:[#allocation6] sm:$0xff]
    %v343 = vld [vmem:[#allocation6 + $0x8] sm:$0xff]
    %v344 = vld [vmem:[#allocation6 + $0x10] sm:$0xff]
    %v345 = vld [vmem:[#allocation6 + $0x18] sm:$0xff]
    %v346 = vld [vmem:[#allocation6 + $0x20] sm:$0xff]
    %v347 = vld [vmem:[#allocation6 + $0x28] sm:$0xff]
    %v348 = vld [vmem:[#allocation6 + $0x30] sm:$0xff]
    %v349 = vld [vmem:[#allocation6 + $0x38] sm:$0xff]
    %v350 = vld [vmem:[#allocation6 + $0x40] sm:$0xff]
    %v351 = vld [vmem:[#allocation6 + $0x48] sm:$0xff]
    %v352 = vld [vmem:[#allocation6 + $0x50] sm:$0xff]
    %v353 = vld [vmem:[#allocation6 + $0x58] sm:$0xff]
    %v354 = vld [vmem:[#allocation6 + $0x60] sm:$0xff]
    %v355 = vld [vmem:[#allocation6 + $0x68] sm:$0xff]
    %v356 = vld [vmem:[#allocation6 + $0x70] sm:$0xff]
    %v357 = vld [vmem:[#allocation6 + $0x78] sm:$0xff]
    %v358 = vld [vmem:[#allocation6 + $0x80] sm:$0xff]
    %v359 = vld [vmem:[#allocation6 + $0x88] sm:$0xff]
    %v360 = vld [vmem:[#allocation6 + $0x90] sm:$0xff]
    %v361 = vld [vmem:[#allocation6 + $0x98] sm:$0xff]
    %v362 = vld [vmem:[#allocation6 + $0xa0] sm:$0xff]
    %v363 = vld [vmem:[#allocation6 + $0xa8] sm:$0xff]
    %v364 = vld [vmem:[#allocation6 + $0xb0] sm:$0xff]
    %v365 = vld [vmem:[#allocation6 + $0xb8] sm:$0xff]
    %v366 = vld [vmem:[#allocation6 + $0xc0] sm:$0xff]
    %v367 = vld [vmem:[#allocation6 + $0xc8] sm:$0xff]
    %v368 = vld [vmem:[#allocation6 + $0xd0] sm:$0xff]
    %v369 = vld [vmem:[#allocation6 + $0xd8] sm:$0xff]
    %v370 = vld [vmem:[#allocation6 + $0xe0] sm:$0xff]
    %v371 = vld [vmem:[#allocation6 + $0xe8] sm:$0xff]
    %v372 = vld [vmem:[#allocation6 + $0xf0] sm:$0xff]
    %v373 = vld [vmem:[#allocation6 + $0xf8] sm:$0xff]
    %v374 = vld [vmem:[#allocation6 + $0x100] sm:$0xff]
    %v375 = vld [vmem:[#allocation6 + $0x108] sm:$0xff]
    %v376 = vld [vmem:[#allocation6 + $0x110] sm:$0xff]
    %v377 = vld [vmem:[#allocation6 + $0x118] sm:$0xff]
    %v378 = vld [vmem:[#allocation6 + $0x120] sm:$0xff]
    %v379 = vld [vmem:[#allocation6 + $0x128] sm:$0xff]
    %v380 = vld [vmem:[#allocation6 + $0x130] sm:$0xff]
    %v381 = vld [vmem:[#allocation6 + $0x138] sm:$0xff]
    %v382 = vld [vmem:[#allocation6 + $0x140] sm:$0xff]
    %v383 = vld [vmem:[#allocation6 + $0x148] sm:$0xff]
    %v384 = vld [vmem:[#allocation6 + $0x150] sm:$0xff]
    %v385 = vld [vmem:[#allocation6 + $0x158] sm:$0xff]
    %v386 = vld [vmem:[#allocation6 + $0x160] sm:$0xff]
    %v387 = vld [vmem:[#allocation6 + $0x168] sm:$0xff]
    %v388 = vld [vmem:[#allocation6 + $0x170] sm:$0xff]
    %v389 = vld [vmem:[#allocation6 + $0x178] sm:$0xff]
    %v390 = vld [vmem:[#allocation6 + $0x180] sm:$0xff]
    %v391 = vld [vmem:[#allocation6 + $0x188] sm:$0xff]
    %v392 = vld [vmem:[#allocation6 + $0x190] sm:$0xff]
    %v393 = vld [vmem:[#allocation6 + $0x198] sm:$0xff]
    %v394 = vld [vmem:[#allocation6 + $0x1a0] sm:$0xff]
    %v395 = vld [vmem:[#allocation6 + $0x1a8] sm:$0xff]
    %v396 = vld [vmem:[#allocation6 + $0x1b0] sm:$0xff]
    %v397 = vld [vmem:[#allocation6 + $0x1b8] sm:$0xff]
    %v398 = vld [vmem:[#allocation6 + $0x1c0] sm:$0xff]
    %v399 = vld [vmem:[#allocation6 + $0x1c8] sm:$0xff]
    %v400 = vld [vmem:[#allocation6 + $0x1d0] sm:$0xff]
    %v401 = vld [vmem:[#allocation6 + $0x1d8] sm:$0xff]
    %v402 = vld [vmem:[#allocation6 + $0x1e0] sm:$0xff]
    %v403 = vld [vmem:[#allocation6 + $0x1e8] sm:$0xff]
    %v404 = vld [vmem:[#allocation6 + $0x1f0] sm:$0xff]
    %v405 = vld [vmem:[#allocation6 + $0x1f8] sm:$0xff]
    %v406 = vld [vmem:[#allocation6 + $0x200] sm:$0xff]
    %v407 = vld [vmem:[#allocation6 + $0x208] sm:$0xff]
    %v408 = vld [vmem:[#allocation6 + $0x210] sm:$0xff]
    %v409 = vld [vmem:[#allocation6 + $0x218] sm:$0xff]
    %v410 = vld [vmem:[#allocation6 + $0x220] sm:$0xff]
    %v411 = vld [vmem:[#allocation6 + $0x228] sm:$0xff]
    %v412 = vld [vmem:[#allocation6 + $0x230] sm:$0xff]
    %v413 = vld [vmem:[#allocation6 + $0x238] sm:$0xff]
    %v414 = vld [vmem:[#allocation6 + $0x240] sm:$0xff]
    %v415 = vld [vmem:[#allocation6 + $0x248] sm:$0xff]
    %v416 = vld [vmem:[#allocation6 + $0x250] sm:$0xff]
    %v417 = vld [vmem:[#allocation6 + $0x258] sm:$0xff]
    %v418 = vld [vmem:[#allocation6 + $0x260] sm:$0xff]
    %v419 = vld [vmem:[#allocation6 + $0x268] sm:$0xff]
    %v420 = vld [vmem:[#allocation6 + $0x270] sm:$0xff]
    %v421 = vld [vmem:[#allocation6 + $0x278] sm:$0xff]
    %v422 = vld [vmem:[#allocation6 + $0x280] sm:$0xff]
    %v423 = vld [vmem:[#allocation6 + $0x288] sm:$0xff]
    %v424 = vld [vmem:[#allocation6 + $0x290] sm:$0xff]
    %v425 = vld [vmem:[#allocation6 + $0x298] sm:$0xff]
    %v426 = vld [vmem:[#allocation6 + $0x2a0] sm:$0xff]
    %v427 = vld [vmem:[#allocation6 + $0x2a8] sm:$0xff]
    %v428 = vld [vmem:[#allocation6 + $0x2b0] sm:$0xff]
    %v429 = vld [vmem:[#allocation6 + $0x2b8] sm:$0xff]
    %v430 = vld [vmem:[#allocation6 + $0x2c0] sm:$0xff]
    %v431 = vld [vmem:[#allocation6 + $0x2c8] sm:$0xff]
    %v432 = vld [vmem:[#allocation6 + $0x2d0] sm:$0xff]
    %v433 = vld [vmem:[#allocation6 + $0x2d8] sm:$0xff]
    %v434 = vld [vmem:[#allocation6 + $0x2e0] sm:$0xff]
    %v435 = vld [vmem:[#allocation6 + $0x2e8] sm:$0xff]
    %v436 = vld [vmem:[#allocation6 + $0x2f0] sm:$0xff]
    %v437 = vld [vmem:[#allocation6 + $0x2f8] sm:$0xff]
    %v438 = vld [vmem:[#allocation6 + $0x300] sm:$0xff]
    %v439 = vld [vmem:[#allocation6 + $0x308] sm:$0xff]
    %v440 = vld [vmem:[#allocation6 + $0x310] sm:$0xff]
    %v441 = vld [vmem:[#allocation6 + $0x318] sm:$0xff]
    %v442 = vld [vmem:[#allocation6 + $0x320] sm:$0xff]
    %v443 = vld [vmem:[#allocation6 + $0x328] sm:$0xff]
    %v444 = vld [vmem:[#allocation6 + $0x330] sm:$0xff]
    %v445 = vld [vmem:[#allocation6 + $0x338] sm:$0xff]
    %v446 = vld [vmem:[#allocation6 + $0x340] sm:$0xff]
    %v447 = vld [vmem:[#allocation6 + $0x348] sm:$0xff]
    %v448 = vld [vmem:[#allocation6 + $0x350] sm:$0xff]
    %v449 = vld [vmem:[#allocation6 + $0x358] sm:$0xff]
    %v450 = vld [vmem:[#allocation6 + $0x360] sm:$0xff]
    %v451 = vld [vmem:[#allocation6 + $0x368] sm:$0xff]
    %v452 = vld [vmem:[#allocation6 + $0x370] sm:$0xff]
    %v453 = vld [vmem:[#allocation6 + $0x378] sm:$0xff]
    %v454 = vld [vmem:[#allocation6 + $0x380] sm:$0xff]
    %v455 = vld [vmem:[#allocation6 + $0x388] sm:$0xff]
    %v456 = vld [vmem:[#allocation6 + $0x390] sm:$0xff]
    %v457 = vld [vmem:[#allocation6 + $0x398] sm:$0xff]
    %v458 = vld [vmem:[#allocation6 + $0x3a0] sm:$0xff]
    %v459 = vld [vmem:[#allocation6 + $0x3a8] sm:$0xff]
    %v460 = vld [vmem:[#allocation6 + $0x3b0] sm:$0xff]
    %v461 = vld [vmem:[#allocation6 + $0x3b8] sm:$0xff]
    %v462 = vld [vmem:[#allocation6 + $0x3c0] sm:$0xff]
    %v463 = vld [vmem:[#allocation6 + $0x3c8] sm:$0xff]
    %v464 = vld [vmem:[#allocation6 + $0x3d0] sm:$0xff]
    %v465 = vld [vmem:[#allocation6 + $0x3d8] sm:$0xff]
    %v466 = vld [vmem:[#allocation6 + $0x3e0] sm:$0xff]
    %v467 = vld [vmem:[#allocation6 + $0x3e8] sm:$0xff]
    %v468 = vld [vmem:[#allocation6 + $0x3f0] sm:$0xff]
    %v469 = vld [vmem:[#allocation6 + $0x3f8] sm:$0xff]
    %v470 = vld [vmem:[#allocation6 + $0x400] sm:$0xff]
    %v471 = vld [vmem:[#allocation6 + $0x408] sm:$0xff]
    %v472 = vld [vmem:[#allocation6 + $0x410] sm:$0xff]
    %v473 = vld [vmem:[#allocation6 + $0x418] sm:$0xff]
    %v474 = vld [vmem:[#allocation6 + $0x420] sm:$0xff]
    %v475 = vld [vmem:[#allocation6 + $0x428] sm:$0xff]
    %v476 = vld [vmem:[#allocation6 + $0x430] sm:$0xff]
    %v477 = vld [vmem:[#allocation6 + $0x438] sm:$0xff]
    %v478 = vld [vmem:[#allocation6 + $0x440] sm:$0xff]
    %v479 = vld [vmem:[#allocation6 + $0x448] sm:$0xff]
    %v480 = vld [vmem:[#allocation6 + $0x450] sm:$0xff]
    %v481 = vld [vmem:[#allocation6 + $0x458] sm:$0xff]
    %v482 = vld [vmem:[#allocation6 + $0x460] sm:$0xff]
    %v483 = vld [vmem:[#allocation6 + $0x468] sm:$0xff]
    %v484 = vld [vmem:[#allocation6 + $0x470] sm:$0xff]
    %v485 = vld [vmem:[#allocation6 + $0x478] sm:$0xff]
    %v486 = vld [vmem:[#allocation6 + $0x480] sm:$0xff]
    %v487 = vld [vmem:[#allocation6 + $0x488] sm:$0xff]
    %v488 = vld [vmem:[#allocation6 + $0x490] sm:$0xff]
    %v489 = vld [vmem:[#allocation6 + $0x498] sm:$0xff]
    %v490 = vld [vmem:[#allocation6 + $0x4a0] sm:$0xff]
    %v491 = vld [vmem:[#allocation6 + $0x4a8] sm:$0xff]
    %v492 = vld [vmem:[#allocation6 + $0x4b0] sm:$0xff]
    %v493 = vld [vmem:[#allocation6 + $0x4b8] sm:$0xff]
    %v494 = vld [vmem:[#allocation6 + $0x4c0] sm:$0xff]
    %v495 = vld [vmem:[#allocation6 + $0x4c8] sm:$0xff]
    %v496 = vld [vmem:[#allocation6 + $0x4d0] sm:$0xff]
    %v497 = vld [vmem:[#allocation6 + $0x4d8] sm:$0xff]
    %v498 = vld [vmem:[#allocation6 + $0x4e0] sm:$0xff]
    %v499 = vld [vmem:[#allocation6 + $0x4e8] sm:$0xff]
    %v500 = vld [vmem:[#allocation6 + $0x4f0] sm:$0xff]
    %v501 = vld [vmem:[#allocation6 + $0x4f8] sm:$0xff]
    %v502 = vld [vmem:[%s2] sm:$0x3]
    %v504 = vlaneseq
    %v505 = vshrl.u32 %v504, 7
    %v506 = vsub.s32 0, %v505
    %v507 = vrot.slane %v502, %v506
    %v508 = vlaneseq
    %v509 = vshrl.u32 %v508, 7
    %v510 = vsub.s32 1, %v509
    %v511 = vrot.slane %v502, %v510
    %514 = vmatprep.subr.mxu0 %v343
    %515 = vmatpush1.msra.mxu0 %v342
    %516 = vmatprep.subr.mxu0 %v345
    %517 = vmatpush1.msra.mxu0 %v344
    %518 = vmatprep.subr.mxu0 %v347
    %519 = vmatpush1.msra.mxu0 %v346
    %520 = vmatprep.subr.mxu0 %v349
    %521 = vmatpush1.msra.mxu0 %v348
    %522 = vmatprep.subr.mxu0 %v351
    %523 = vmatpush1.msra.mxu0 %v350
    %524 = vmatprep.subr.mxu0 %v353
    %525 = vmatpush1.msra.mxu0 %v352
    %526 = vmatprep.subr.mxu0 %v355
    %527 = vmatpush1.msra.mxu0 %v354
    %528 = vmatprep.subr.mxu0 %v357
    %529 = vmatpush1.msra.mxu0 %v356
    %530 = vmatprep.subr.mxu0 %v359
    %531 = vmatpush1.msra.mxu0 %v358
    %532 = vmatprep.subr.mxu0 %v361
    %533 = vmatpush1.msra.mxu0 %v360
    %534 = vmatprep.subr.mxu0 %v363
    %535 = vmatpush1.msra.mxu0 %v362
    %536 = vmatprep.subr.mxu0 %v365
    %537 = vmatpush1.msra.mxu0 %v364
    %538 = vmatprep.subr.mxu0 %v367
    %539 = vmatpush1.msra.mxu0 %v366
    %540 = vmatprep.subr.mxu0 %v369
    %541 = vmatpush1.msra.mxu0 %v368
    %542 = vmatprep.subr.mxu0 %v371
    %543 = vmatpush1.msra.mxu0 %v370
    %544 = vmatprep.subr.mxu0 %v373
    %545 = vmatpush1.msra.mxu0 %v372
    %546 = vmatprep.subr.mxu0 %v375
    %547 = vmatpush1.msra.mxu0 %v374
    %548 = vmatprep.subr.mxu0 %v377
    %549 = vmatpush1.msra.mxu0 %v376
    %550 = vmatprep.subr.mxu0 %v379
    %551 = vmatpush1.msra.mxu0 %v378
    %552 = vmatprep.subr.mxu0 %v381
    %553 = vmatpush1.msra.mxu0 %v380
    %554 = vmatprep.subr.mxu0 %v383
    %555 = vmatpush1.msra.mxu0 %v382
    %556 = vmatprep.subr.mxu0 %v385
    %557 = vmatpush1.msra.mxu0 %v384
    %558 = vmatprep.subr.mxu0 %v387
    %559 = vmatpush1.msra.mxu0 %v386
    %560 = vmatprep.subr.mxu0 %v389
    %561 = vmatpush1.msra.mxu0 %v388
    %562 = vmatprep.subr.mxu0 %v391
    %563 = vmatpush1.msra.mxu0 %v390
    %564 = vmatprep.subr.mxu0 %v393
    %565 = vmatpush1.msra.mxu0 %v392
    %566 = vmatprep.subr.mxu0 %v395
    %567 = vmatpush1.msra.mxu0 %v394
    %568 = vmatprep.subr.mxu0 %v397
    %569 = vmatpush1.msra.mxu0 %v396
    %570 = vmatprep.subr.mxu0 %v399
    %571 = vmatpush1.msra.mxu0 %v398
    %572 = vmatprep.subr.mxu0 %v401
    %573 = vmatpush1.msra.mxu0 %v400
    %574 = vmatprep.subr.mxu0 %v403
    %575 = vmatpush1.msra.mxu0 %v402
    %576 = vmatprep.subr.mxu0 %v405
    %577 = vmatpush1.msra.mxu0 %v404
    %578 = vmatprep.mubr.f32.mxu0 %v214
    %579 = vmatmul.mubr.f32.gmra.mrb[0].mxu0 %v182
    %v580 = vpop.f32.mrb[0].mxu0
    %v581 = vadd.f32 %v507, %v580
    %v582 = vpop.f32.mrb[0].mxu0
    %v583 = vadd.f32 %v511, %v582
    %584 = vmatprep.mubr.f32.mxu0 %v215
    %585 = vmatmul.mubr.f32.gmra.mrb[0].mxu0 %v183
    %v586 = vpop.f32.mrb[0].mxu0
    %v587 = vadd.f32 %v507, %v586
    %v588 = vpop.f32.mrb[0].mxu0
    %v589 = vadd.f32 %v511, %v588
    %590 = vmatprep.mubr.f32.mxu0 %v216
    %591 = vmatmul.mubr.f32.gmra.mrb[0].mxu0 %v184
    %v592 = vpop.f32.mrb[0].mxu0
    %v593 = vadd.f32 %v507, %v592
    %v594 = vpop.f32.mrb[0].mxu0
    %v595 = vadd.f32 %v511, %v594
    %596 = vmatprep.mubr.f32.mxu0 %v217
    %597 = vmatmul.mubr.f32.gmra.mrb[0].mxu0 %v185
    %v598 = vpop.f32.mrb[0].mxu0
    %v599 = vadd.f32 %v507, %v598
    %v600 = vpop.f32.mrb[0].mxu0
    %v601 = vadd.f32 %v511, %v600
    %602 = vmatprep.mubr.f32.mxu0 %v218
    %603 = vmatmul.mubr.f32.gmra.mrb[0].mxu0 %v186
    %v604 = vpop.f32.mrb[0].mxu0
    %v605 = vadd.f32 %v507, %v604
    %v606 = vpop.f32.mrb[0].mxu0
    %v607 = vadd.f32 %v511, %v606
    %608 = vmatprep.mubr.f32.mxu0 %v219
    %609 = vmatmul.mubr.f32.gmra.mrb[0].mxu0 %v187
    %v610 = vpop.f32.mrb[0].mxu0
    %v611 = vadd.f32 %v507, %v610
    %v612 = vpop.f32.mrb[0].mxu0
    %v613 = vadd.f32 %v511, %v612
    %614 = vmatprep.mubr.f32.mxu0 %v220
    %615 = vmatmul.mubr.f32.gmra.mrb[0].mxu0 %v188
    %v616 = vpop.f32.mrb[0].mxu0
    %v617 = vadd.f32 %v507, %v616
    %v618 = vpop.f32.mrb[0].mxu0
    %v619 = vadd.f32 %v511, %v618
    %620 = vmatprep.mubr.f32.mxu0 %v221
    %621 = vmatmul.mubr.f32.gmra.mrb[0].mxu0 %v189
    %v622 = vpop.f32.mrb[0].mxu0
    %v623 = vadd.f32 %v507, %v622
    %v624 = vpop.f32.mrb[0].mxu0
    %v625 = vadd.f32 %v511, %v624
    %626 = vmatprep.mubr.f32.mxu0 %v222
    %627 = vmatmul.mubr.f32.gmra.mrb[0].mxu0 %v190
    %v628 = vpop.f32.mrb[0].mxu0
    %v629 = vadd.f32 %v507, %v628
    %v630 = vpop.f32.mrb[0].mxu0
    %v631 = vadd.f32 %v511, %v630
    %632 = vmatprep.mubr.f32.mxu0 %v223
    %633 = vmatmul.mubr.f32.gmra.mrb[0].mxu0 %v191
    %v634 = vpop.f32.mrb[0].mxu0
    %v635 = vadd.f32 %v507, %v634
    %v636 = vpop.f32.mrb[0].mxu0
    %v637 = vadd.f32 %v511, %v636
    %638 = vmatprep.mubr.f32.mxu0 %v224
    %639 = vmatmul.mubr.f32.gmra.mrb[0].mxu0 %v192
    %v640 = vpop.f32.mrb[0].mxu0
    %v641 = vadd.f32 %v507, %v640
    %v642 = vpop.f32.mrb[0].mxu0
    %v643 = vadd.f32 %v511, %v642
    %644 = vmatprep.mubr.f32.mxu0 %v225
    %645 = vmatmul.mubr.f32.gmra.mrb[0].mxu0 %v193
    %v646 = vpop.f32.mrb[0].mxu0
    %v647 = vadd.f32 %v507, %v646
    %v648 = vpop.f32.mrb[0].mxu0
    %v649 = vadd.f32 %v511, %v648
    %650 = vmatprep.mubr.f32.mxu0 %v226
    %651 = vmatmul.mubr.f32.gmra.mrb[0].mxu0 %v194
    %v652 = vpop.f32.mrb[0].mxu0
    %v653 = vadd.f32 %v507, %v652
    %v654 = vpop.f32.mrb[0].mxu0
    %v655 = vadd.f32 %v511, %v654
    %656 = vmatprep.mubr.f32.mxu0 %v227
    %657 = vmatmul.mubr.f32.gmra.mrb[0].mxu0 %v195
    %v658 = vpop.f32.mrb[0].mxu0
    %v659 = vadd.f32 %v507, %v658
    %v660 = vpop.f32.mrb[0].mxu0
    %v661 = vadd.f32 %v511, %v660
    %662 = vmatprep.mubr.f32.mxu0 %v228
    %663 = vmatmul.mubr.f32.gmra.mrb[0].mxu0 %v196
    %v664 = vpop.f32.mrb[0].mxu0
    %v665 = vadd.f32 %v507, %v664
    %v666 = vpop.f32.mrb[0].mxu0
    %v667 = vadd.f32 %v511, %v666
    %668 = vmatprep.mubr.f32.mxu0 %v229
    %669 = vmatmul.mubr.f32.gmra.mrb[0].mxu0 %v197
    %v670 = vpop.f32.mrb[0].mxu0
    %v671 = vadd.f32 %v507, %v670
    %v672 = vpop.f32.mrb[0].mxu0
    %v673 = vadd.f32 %v511, %v672
    %674 = vmatprep.mubr.f32.mxu0 %v230
    %675 = vmatmul.mubr.f32.gmra.mrb[0].mxu0 %v198
    %v676 = vpop.f32.mrb[0].mxu0
    %v677 = vadd.f32 %v507, %v676
    %v678 = vpop.f32.mrb[0].mxu0
    %v679 = vadd.f32 %v511, %v678
    %680 = vmatprep.mubr.f32.mxu0 %v231
    %681 = vmatmul.mubr.f32.gmra.mrb[0].mxu0 %v199
    %v682 = vpop.f32.mrb[0].mxu0
    %v683 = vadd.f32 %v507, %v682
    %v684 = vpop.f32.mrb[0].mxu0
    %v685 = vadd.f32 %v511, %v684
    %686 = vmatprep.mubr.f32.mxu0 %v232
    %687 = vmatmul.mubr.f32.gmra.mrb[0].mxu0 %v200
    %v688 = vpop.f32.mrb[0].mxu0
    %v689 = vadd.f32 %v507, %v688
    %v690 = vpop.f32.mrb[0].mxu0
    %v691 = vadd.f32 %v511, %v690
    %692 = vmatprep.mubr.f32.mxu0 %v233
    %693 = vmatmul.mubr.f32.gmra.mrb[0].mxu0 %v201
    %v694 = vpop.f32.mrb[0].mxu0
    %v695 = vadd.f32 %v507, %v694
    %v696 = vpop.f32.mrb[0].mxu0
    %v697 = vadd.f32 %v511, %v696
    %698 = vmatprep.mubr.f32.mxu0 %v234
    %699 = vmatmul.mubr.f32.gmra.mrb[0].mxu0 %v202
    %v700 = vpop.f32.mrb[0].mxu0
    %v701 = vadd.f32 %v507, %v700
    %v702 = vpop.f32.mrb[0].mxu0
    %v703 = vadd.f32 %v511, %v702
    %704 = vmatprep.mubr.f32.mxu0 %v235
    %705 = vmatmul.mubr.f32.gmra.mrb[0].mxu0 %v203
    %v706 = vpop.f32.mrb[0].mxu0
    %v707 = vadd.f32 %v507, %v706
    %v708 = vpop.f32.mrb[0].mxu0
    %v709 = vadd.f32 %v511, %v708
    %710 = vmatprep.mubr.f32.mxu0 %v236
    %711 = vmatmul.mubr.f32.gmra.mrb[0].mxu0 %v204
    %v712 = vpop.f32.mrb[0].mxu0
    %v713 = vadd.f32 %v507, %v712
    %v714 = vpop.f32.mrb[0].mxu0
    %v715 = vadd.f32 %v511, %v714
    %716 = vmatprep.mubr.f32.mxu0 %v237
    %717 = vmatmul.mubr.f32.gmra.mrb[0].mxu0 %v205
    %v718 = vpop.f32.mrb[0].mxu0
    %v719 = vadd.f32 %v507, %v718
    %v720 = vpop.f32.mrb[0].mxu0
    %v721 = vadd.f32 %v511, %v720
    %722 = vmatprep.mubr.f32.mxu0 %v238
    %723 = vmatmul.mubr.f32.gmra.mrb[0].mxu0 %v206
    %v724 = vpop.f32.mrb[0].mxu0
    %v725 = vadd.f32 %v507, %v724
    %v726 = vpop.f32.mrb[0].mxu0
    %v727 = vadd.f32 %v511, %v726
    %728 = vmatprep.mubr.f32.mxu0 %v239
    %729 = vmatmul.mubr.f32.gmra.mrb[0].mxu0 %v207
    %v730 = vpop.f32.mrb[0].mxu0
    %v731 = vadd.f32 %v507, %v730
    %v732 = vpop.f32.mrb[0].mxu0
    %v733 = vadd.f32 %v511, %v732
    %734 = vmatprep.mubr.f32.mxu0 %v240
    %735 = vmatmul.mubr.f32.gmra.mrb[0].mxu0 %v208
    %v736 = vpop.f32.mrb[0].mxu0
    %v737 = vadd.f32 %v507, %v736
    %v738 = vpop.f32.mrb[0].mxu0
    %v739 = vadd.f32 %v511, %v738
    %740 = vmatprep.mubr.f32.mxu0 %v241
    %741 = vmatmul.mubr.f32.gmra.mrb[0].mxu0 %v209
    %v742 = vpop.f32.mrb[0].mxu0
    %v743 = vadd.f32 %v507, %v742
    %v744 = vpop.f32.mrb[0].mxu0
    %v745 = vadd.f32 %v511, %v744
    %746 = vmatprep.mubr.f32.mxu0 %v242
    %747 = vmatmul.mubr.f32.gmra.mrb[0].mxu0 %v210
    %v748 = vpop.f32.mrb[0].mxu0
    %v749 = vadd.f32 %v507, %v748
    %v750 = vpop.f32.mrb[0].mxu0
    %v751 = vadd.f32 %v511, %v750
    %752 = vmatprep.mubr.f32.mxu0 %v243
    %753 = vmatmul.mubr.f32.gmra.mrb[0].mxu0 %v211
    %v754 = vpop.f32.mrb[0].mxu0
    %v755 = vadd.f32 %v507, %v754
    %v756 = vpop.f32.mrb[0].mxu0
    %v757 = vadd.f32 %v511, %v756
    %758 = vmatprep.mubr.f32.mxu0 %v244
    %759 = vmatmul.mubr.f32.gmra.mrb[0].mxu0 %v212
    %v760 = vpop.f32.mrb[0].mxu0
    %v761 = vadd.f32 %v507, %v760
    %v762 = vpop.f32.mrb[0].mxu0
    %v763 = vadd.f32 %v511, %v762
    %764 = vmatprep.mubr.f32.mxu0 %v245
    %765 = vmatmul.mubr.f32.gmra.mrb[0].mxu0 %v213
    %v766 = vpop.f32.mrb[0].mxu0
    %v767 = vadd.f32 %v507, %v766
    %v768 = vpop.f32.mrb[0].mxu0
    %v769 = vadd.f32 %v511, %v768
    %770 = vdwg.mxu0
    %771 = vmatprep.subr.mxu0 %v407
    %772 = vmatpush1.msra.mxu0 %v406
    %773 = vmatprep.subr.mxu0 %v409
    %774 = vmatpush1.msra.mxu0 %v408
    %775 = vmatprep.subr.mxu0 %v411
    %776 = vmatpush1.msra.mxu0 %v410
    %777 = vmatprep.subr.mxu0 %v413
    %778 = vmatpush1.msra.mxu0 %v412
    %779 = vmatprep.subr.mxu0 %v415
    %780 = vmatpush1.msra.mxu0 %v414
    %781 = vmatprep.subr.mxu0 %v417
    %782 = vmatpush1.msra.mxu0 %v416
    %783 = vmatprep.subr.mxu0 %v419
    %784 = vmatpush1.msra.mxu0 %v418
    %785 = vmatprep.subr.mxu0 %v421
    %786 = vmatpush1.msra.mxu0 %v420
    %787 = vmatprep.subr.mxu0 %v423
    %788 = vmatpush1.msra.mxu0 %v422
    %789 = vmatprep.subr.mxu0 %v425
    %790 = vmatpush1.msra.mxu0 %v424
    %791 = vmatprep.subr.mxu0 %v427
    %792 = vmatpush1.msra.mxu0 %v426
    %793 = vmatprep.subr.mxu0 %v429
    %794 = vmatpush1.msra.mxu0 %v428
    %795 = vmatprep.subr.mxu0 %v431
    %796 = vmatpush1.msra.mxu0 %v430
    %797 = vmatprep.subr.mxu0 %v433
    %798 = vmatpush1.msra.mxu0 %v432
    %799 = vmatprep.subr.mxu0 %v435
    %800 = vmatpush1.msra.mxu0 %v434
    %801 = vmatprep.subr.mxu0 %v437
    %802 = vmatpush1.msra.mxu0 %v436
    %803 = vmatprep.subr.mxu0 %v439
    %804 = vmatpush1.msra.mxu0 %v438
    %805 = vmatprep.subr.mxu0 %v441
    %806 = vmatpush1.msra.mxu0 %v440
    %807 = vmatprep.subr.mxu0 %v443
    %808 = vmatpush1.msra.mxu0 %v442
    %809 = vmatprep.subr.mxu0 %v445
    %810 = vmatpush1.msra.mxu0 %v444
    %811 = vmatprep.subr.mxu0 %v447
    %812 = vmatpush1.msra.mxu0 %v446
    %813 = vmatprep.subr.mxu0 %v449
    %814 = vmatpush1.msra.mxu0 %v448
    %815 = vmatprep.subr.mxu0 %v451
    %816 = vmatpush1.msra.mxu0 %v450
    %817 = vmatprep.subr.mxu0 %v453
    %818 = vmatpush1.msra.mxu0 %v452
    %819 = vmatprep.subr.mxu0 %v455
    %820 = vmatpush1.msra.mxu0 %v454
    %821 = vmatprep.subr.mxu0 %v457
    %822 = vmatpush1.msra.mxu0 %v456
    %823 = vmatprep.subr.mxu0 %v459
    %824 = vmatpush1.msra.mxu0 %v458
    %825 = vmatprep.subr.mxu0 %v461
    %826 = vmatpush1.msra.mxu0 %v460
    %827 = vmatprep.subr.mxu0 %v463
    %828 = vmatpush1.msra.mxu0 %v462
    %829 = vmatprep.subr.mxu0 %v465
    %830 = vmatpush1.msra.mxu0 %v464
    %831 = vmatprep.subr.mxu0 %v467
    %832 = vmatpush1.msra.mxu0 %v466
    %833 = vmatprep.subr.mxu0 %v469
    %834 = vmatpush1.msra.mxu0 %v468
    %835 = vmatprep.mubr.f32.mxu0 %v278
    %836 = vmatmul.mubr.f32.gmra.mrb[0].mxu0 %v246
    %v837 = vpop.f32.mrb[0].mxu0
    %v838 = vadd.f32 %v581, %v837
    %v839 = vpop.f32.mrb[0].mxu0
    %v840 = vadd.f32 %v583, %v839
    %841 = vmatprep.mubr.f32.mxu0 %v279
    %842 = vmatmul.mubr.f32.gmra.mrb[0].mxu0 %v247
    %v843 = vpop.f32.mrb[0].mxu0
    %v844 = vadd.f32 %v587, %v843
    %v845 = vpop.f32.mrb[0].mxu0
    %v846 = vadd.f32 %v589, %v845
    %847 = vmatprep.mubr.f32.mxu0 %v280
    %848 = vmatmul.mubr.f32.gmra.mrb[0].mxu0 %v248
    %v849 = vpop.f32.mrb[0].mxu0
    %v850 = vadd.f32 %v593, %v849
    %v851 = vpop.f32.mrb[0].mxu0
    %v852 = vadd.f32 %v595, %v851
    %853 = vmatprep.mubr.f32.mxu0 %v281
    %854 = vmatmul.mubr.f32.gmra.mrb[0].mxu0 %v249
    %v855 = vpop.f32.mrb[0].mxu0
    %v856 = vadd.f32 %v599, %v855
    %v857 = vpop.f32.mrb[0].mxu0
    %v858 = vadd.f32 %v601, %v857
    %859 = vmatprep.mubr.f32.mxu0 %v282
    %860 = vmatmul.mubr.f32.gmra.mrb[0].mxu0 %v250
    %v861 = vpop.f32.mrb[0].mxu0
    %v862 = vadd.f32 %v605, %v861
    %v863 = vpop.f32.mrb[0].mxu0
    %v864 = vadd.f32 %v607, %v863
    %865 = vmatprep.mubr.f32.mxu0 %v283
    %866 = vmatmul.mubr.f32.gmra.mrb[0].mxu0 %v251
    %v867 = vpop.f32.mrb[0].mxu0
    %v868 = vadd.f32 %v611, %v867
    %v869 = vpop.f32.mrb[0].mxu0
    %v870 = vadd.f32 %v613, %v869
    %871 = vmatprep.mubr.f32.mxu0 %v284
    %872 = vmatmul.mubr.f32.gmra.mrb[0].mxu0 %v252
    %v873 = vpop.f32.mrb[0].mxu0
    %v874 = vadd.f32 %v617, %v873
    %v875 = vpop.f32.mrb[0].mxu0
    %v876 = vadd.f32 %v619, %v875
    %877 = vmatprep.mubr.f32.mxu0 %v285
    %878 = vmatmul.mubr.f32.gmra.mrb[0].mxu0 %v253
    %v879 = vpop.f32.mrb[0].mxu0
    %v880 = vadd.f32 %v623, %v879
    %v881 = vpop.f32.mrb[0].mxu0
    %v882 = vadd.f32 %v625, %v881
    %883 = vmatprep.mubr.f32.mxu0 %v286
    %884 = vmatmul.mubr.f32.gmra.mrb[0].mxu0 %v254
    %v885 = vpop.f32.mrb[0].mxu0
    %v886 = vadd.f32 %v629, %v885
    %v887 = vpop.f32.mrb[0].mxu0
    %v888 = vadd.f32 %v631, %v887
    %889 = vmatprep.mubr.f32.mxu0 %v287
    %890 = vmatmul.mubr.f32.gmra.mrb[0].mxu0 %v255
    %v891 = vpop.f32.mrb[0].mxu0
    %v892 = vadd.f32 %v635, %v891
    %v893 = vpop.f32.mrb[0].mxu0
    %v894 = vadd.f32 %v637, %v893
    %895 = vmatprep.mubr.f32.mxu0 %v288
    %896 = vmatmul.mubr.f32.gmra.mrb[0].mxu0 %v256
    %v897 = vpop.f32.mrb[0].mxu0
    %v898 = vadd.f32 %v641, %v897
    %v899 = vpop.f32.mrb[0].mxu0
    %v900 = vadd.f32 %v643, %v899
    %901 = vmatprep.mubr.f32.mxu0 %v289
    %902 = vmatmul.mubr.f32.gmra.mrb[0].mxu0 %v257
    %v903 = vpop.f32.mrb[0].mxu0
    %v904 = vadd.f32 %v647, %v903
    %v905 = vpop.f32.mrb[0].mxu0
    %v906 = vadd.f32 %v649, %v905
    %907 = vmatprep.mubr.f32.mxu0 %v290
    %908 = vmatmul.mubr.f32.gmra.mrb[0].mxu0 %v258
    %v909 = vpop.f32.mrb[0].mxu0
    %v910 = vadd.f32 %v653, %v909
    %v911 = vpop.f32.mrb[0].mxu0
    %v912 = vadd.f32 %v655, %v911
    %913 = vmatprep.mubr.f32.mxu0 %v291
    %914 = vmatmul.mubr.f32.gmra.mrb[0].mxu0 %v259
    %v915 = vpop.f32.mrb[0].mxu0
    %v916 = vadd.f32 %v659, %v915
    %v917 = vpop.f32.mrb[0].mxu0
    %v918 = vadd.f32 %v661, %v917
    %919 = vmatprep.mubr.f32.mxu0 %v292
    %920 = vmatmul.mubr.f32.gmra.mrb[0].mxu0 %v260
    %v921 = vpop.f32.mrb[0].mxu0
    %v922 = vadd.f32 %v665, %v921
    %v923 = vpop.f32.mrb[0].mxu0
    %v924 = vadd.f32 %v667, %v923
    %925 = vmatprep.mubr.f32.mxu0 %v293
    %926 = vmatmul.mubr.f32.gmra.mrb[0].mxu0 %v261
    %v927 = vpop.f32.mrb[0].mxu0
    %v928 = vadd.f32 %v671, %v927
    %v929 = vpop.f32.mrb[0].mxu0
    %v930 = vadd.f32 %v673, %v929
    %931 = vmatprep.mubr.f32.mxu0 %v294
    %932 = vmatmul.mubr.f32.gmra.mrb[0].mxu0 %v262
    %v933 = vpop.f32.mrb[0].mxu0
    %v934 = vadd.f32 %v677, %v933
    %v935 = vpop.f32.mrb[0].mxu0
    %v936 = vadd.f32 %v679, %v935
    %937 = vmatprep.mubr.f32.mxu0 %v295
    %938 = vmatmul.mubr.f32.gmra.mrb[0].mxu0 %v263
    %v939 = vpop.f32.mrb[0].mxu0
    %v940 = vadd.f32 %v683, %v939
    %v941 = vpop.f32.mrb[0].mxu0
    %v942 = vadd.f32 %v685, %v941
    %943 = vmatprep.mubr.f32.mxu0 %v296
    %944 = vmatmul.mubr.f32.gmra.mrb[0].mxu0 %v264
    %v945 = vpop.f32.mrb[0].mxu0
    %v946 = vadd.f32 %v689, %v945
    %v947 = vpop.f32.mrb[0].mxu0
    %v948 = vadd.f32 %v691, %v947
    %949 = vmatprep.mubr.f32.mxu0 %v297
    %950 = vmatmul.mubr.f32.gmra.mrb[0].mxu0 %v265
    %v951 = vpop.f32.mrb[0].mxu0
    %v952 = vadd.f32 %v695, %v951
    %v953 = vpop.f32.mrb[0].mxu0
    %v954 = vadd.f32 %v697, %v953
    %955 = vmatprep.mubr.f32.mxu0 %v298
    %956 = vmatmul.mubr.f32.gmra.mrb[0].mxu0 %v266
    %v957 = vpop.f32.mrb[0].mxu0
    %v958 = vadd.f32 %v701, %v957
    %v959 = vpop.f32.mrb[0].mxu0
    %v960 = vadd.f32 %v703, %v959
    %961 = vmatprep.mubr.f32.mxu0 %v299
    %962 = vmatmul.mubr.f32.gmra.mrb[0].mxu0 %v267
    %v963 = vpop.f32.mrb[0].mxu0
    %v964 = vadd.f32 %v707, %v963
    %v965 = vpop.f32.mrb[0].mxu0
    %v966 = vadd.f32 %v709, %v965
    %967 = vmatprep.mubr.f32.mxu0 %v300
    %968 = vmatmul.mubr.f32.gmra.mrb[0].mxu0 %v268
    %v969 = vpop.f32.mrb[0].mxu0
    %v970 = vadd.f32 %v713, %v969
    %v971 = vpop.f32.mrb[0].mxu0
    %v972 = vadd.f32 %v715, %v971
    %973 = vmatprep.mubr.f32.mxu0 %v301
    %974 = vmatmul.mubr.f32.gmra.mrb[0].mxu0 %v269
    %v975 = vpop.f32.mrb[0].mxu0
    %v976 = vadd.f32 %v719, %v975
    %v977 = vpop.f32.mrb[0].mxu0
    %v978 = vadd.f32 %v721, %v977
    %979 = vmatprep.mubr.f32.mxu0 %v302
    %980 = vmatmul.mubr.f32.gmra.mrb[0].mxu0 %v270
    %v981 = vpop.f32.mrb[0].mxu0
    %v982 = vadd.f32 %v725, %v981
    %v983 = vpop.f32.mrb[0].mxu0
    %v984 = vadd.f32 %v727, %v983
    %985 = vmatprep.mubr.f32.mxu0 %v303
    %986 = vmatmul.mubr.f32.gmra.mrb[0].mxu0 %v271
    %v987 = vpop.f32.mrb[0].mxu0
    %v988 = vadd.f32 %v731, %v987
    %v989 = vpop.f32.mrb[0].mxu0
    %v990 = vadd.f32 %v733, %v989
    %991 = vmatprep.mubr.f32.mxu0 %v304
    %992 = vmatmul.mubr.f32.gmra.mrb[0].mxu0 %v272
    %v993 = vpop.f32.mrb[0].mxu0
    %v994 = vadd.f32 %v737, %v993
    %v995 = vpop.f32.mrb[0].mxu0
    %v996 = vadd.f32 %v739, %v995
    %997 = vmatprep.mubr.f32.mxu0 %v305
    %998 = vmatmul.mubr.f32.gmra.mrb[0].mxu0 %v273
    %v999 = vpop.f32.mrb[0].mxu0
    %v1000 = vadd.f32 %v743, %v999
    %v1001 = vpop.f32.mrb[0].mxu0
    %v1002 = vadd.f32 %v745, %v1001
    %1003 = vmatprep.mubr.f32.mxu0 %v306
    %1004 = vmatmul.mubr.f32.gmra.mrb[0].mxu0 %v274
    %v1005 = vpop.f32.mrb[0].mxu0
    %v1006 = vadd.f32 %v749, %v1005
    %v1007 = vpop.f32.mrb[0].mxu0
    %v1008 = vadd.f32 %v751, %v1007
    %1009 = vmatprep.mubr.f32.mxu0 %v307
    %1010 = vmatmul.mubr.f32.gmra.mrb[0].mxu0 %v275
    %v1011 = vpop.f32.mrb[0].mxu0
    %v1012 = vadd.f32 %v755, %v1011
    %v1013 = vpop.f32.mrb[0].mxu0
    %v1014 = vadd.f32 %v757, %v1013
    %1015 = vmatprep.mubr.f32.mxu0 %v308
    %1016 = vmatmul.mubr.f32.gmra.mrb[0].mxu0 %v276
    %v1017 = vpop.f32.mrb[0].mxu0
    %v1018 = vadd.f32 %v761, %v1017
    %v1019 = vpop.f32.mrb[0].mxu0
    %v1020 = vadd.f32 %v763, %v1019
    %1021 = vmatprep.mubr.f32.mxu0 %v309
    %1022 = vmatmul.mubr.f32.gmra.mrb[0].mxu0 %v277
    %v1023 = vpop.f32.mrb[0].mxu0
    %v1024 = vadd.f32 %v767, %v1023
    %v1025 = vpop.f32.mrb[0].mxu0
    %v1026 = vadd.f32 %v769, %v1025
    %1027 = vdwg.mxu0
    %1028 = vmatprep.subr.mxu0 %v471
    %1029 = vmatpush1.msra.mxu0 %v470
    %1030 = vmatprep.subr.mxu0 %v473
    %1031 = vmatpush1.msra.mxu0 %v472
    %1032 = vmatprep.subr.mxu0 %v475
    %1033 = vmatpush1.msra.mxu0 %v474
    %1034 = vmatprep.subr.mxu0 %v477
    %1035 = vmatpush1.msra.mxu0 %v476
    %1036 = vmatprep.subr.mxu0 %v479
    %1037 = vmatpush1.msra.mxu0 %v478
    %1038 = vmatprep.subr.mxu0 %v481
    %1039 = vmatpush1.msra.mxu0 %v480
    %1040 = vmatprep.subr.mxu0 %v483
    %1041 = vmatpush1.msra.mxu0 %v482
    %1042 = vmatprep.subr.mxu0 %v485
    %1043 = vmatpush1.msra.mxu0 %v484
    %1044 = vmatprep.subr.mxu0 %v487
    %1045 = vmatpush1.msra.mxu0 %v486
    %1046 = vmatprep.subr.mxu0 %v489
    %1047 = vmatpush1.msra.mxu0 %v488
    %1048 = vmatprep.subr.mxu0 %v491
    %1049 = vmatpush1.msra.mxu0 %v490
    %1050 = vmatprep.subr.mxu0 %v493
    %1051 = vmatpush1.msra.mxu0 %v492
    %1052 = vmatprep.subr.mxu0 %v495
    %1053 = vmatpush1.msra.mxu0 %v494
    %1054 = vmatprep.subr.mxu0 %v497
    %1055 = vmatpush1.msra.mxu0 %v496
    %1056 = vmatprep.subr.mxu0 %v499
    %1057 = vmatpush1.msra.mxu0 %v498
    %1058 = vmatprep.subr.mxu0 %v501
    %1059 = vmatpush1.msra.mxu0 %v500
    %1060 = vmatprep.subr.mxu0 0.0
    %1061 = vmatpush1.msra.mxu0 0.0
    %1062 = vmatprep.subr.mxu0 0.0
    %1063 = vmatpush1.msra.mxu0 0.0
    %1064 = vmatprep.subr.mxu0 0.0
    %1065 = vmatpush1.msra.mxu0 0.0
    %1066 = vmatprep.subr.mxu0 0.0
    %1067 = vmatpush1.msra.mxu0 0.0
    %1068 = vmatprep.subr.mxu0 0.0
    %1069 = vmatpush1.msra.mxu0 0.0
    %1070 = vmatprep.subr.mxu0 0.0
    %1071 = vmatpush1.msra.mxu0 0.0
    %1072 = vmatprep.subr.mxu0 0.0
    %1073 = vmatpush1.msra.mxu0 0.0
    %1074 = vmatprep.subr.mxu0 0.0
    %1075 = vmatpush1.msra.mxu0 0.0
    %1076 = vmatprep.subr.mxu0 0.0
    %1077 = vmatpush1.msra.mxu0 0.0
    %1078 = vmatprep.subr.mxu0 0.0
    %1079 = vmatpush1.msra.mxu0 0.0
    %1080 = vmatprep.subr.mxu0 0.0
    %1081 = vmatpush1.msra.mxu0 0.0
    %1082 = vmatprep.subr.mxu0 0.0
    %1083 = vmatpush1.msra.mxu0 0.0
    %1084 = vmatprep.subr.mxu0 0.0
    %1085 = vmatpush1.msra.mxu0 0.0
    %1086 = vmatprep.subr.mxu0 0.0
    %1087 = vmatpush1.msra.mxu0 0.0
    %1088 = vmatprep.subr.mxu0 0.0
    %1089 = vmatpush1.msra.mxu0 0.0
    %1090 = vmatprep.subr.mxu0 0.0
    %1091 = vmatpush1.msra.mxu0 0.0
    %1092 = vmatprep.mubr.f32.mxu0 0.0
    %1093 = vmatmul.mubr.f32.gmra.mrb[0].mxu0 %v310
    %v1094 = vpop.f32.mrb[0].mxu0
    %v1095 = vadd.f32 %v838, %v1094
    %v1096 = vpop.f32.mrb[0].mxu0
    %v1097 = vadd.f32 %v840, %v1096
    %1098 = vmatprep.mubr.f32.mxu0 0.0
    %1099 = vmatmul.mubr.f32.gmra.mrb[0].mxu0 %v311
    %v1100 = vpop.f32.mrb[0].mxu0
    %v1101 = vadd.f32 %v844, %v1100
    %v1102 = vpop.f32.mrb[0].mxu0
    %v1103 = vadd.f32 %v846, %v1102
    %1104 = vmatprep.mubr.f32.mxu0 0.0
    %1105 = vmatmul.mubr.f32.gmra.mrb[0].mxu0 %v312
    %v1106 = vpop.f32.mrb[0].mxu0
    %v1107 = vadd.f32 %v850, %v1106
    %v1108 = vpop.f32.mrb[0].mxu0
    %v1109 = vadd.f32 %v852, %v1108
    %1110 = vmatprep.mubr.f32.mxu0 0.0
    %1111 = vmatmul.mubr.f32.gmra.mrb[0].mxu0 %v313
    %v1112 = vpop.f32.mrb[0].mxu0
    %v1113 = vadd.f32 %v856, %v1112
    %v1114 = vpop.f32.mrb[0].mxu0
    %v1115 = vadd.f32 %v858, %v1114
    %1116 = vmatprep.mubr.f32.mxu0 0.0
    %1117 = vmatmul.mubr.f32.gmra.mrb[0].mxu0 %v314
    %v1118 = vpop.f32.mrb[0].mxu0
    %v1119 = vadd.f32 %v862, %v1118
    %v1120 = vpop.f32.mrb[0].mxu0
    %v1121 = vadd.f32 %v864, %v1120
    %1122 = vmatprep.mubr.f32.mxu0 0.0
    %1123 = vmatmul.mubr.f32.gmra.mrb[0].mxu0 %v315
    %v1124 = vpop.f32.mrb[0].mxu0
    %v1125 = vadd.f32 %v868, %v1124
    %v1126 = vpop.f32.mrb[0].mxu0
    %v1127 = vadd.f32 %v870, %v1126
    %1128 = vmatprep.mubr.f32.mxu0 0.0
    %1129 = vmatmul.mubr.f32.gmra.mrb[0].mxu0 %v316
    %v1130 = vpop.f32.mrb[0].mxu0
    %v1131 = vadd.f32 %v874, %v1130
    %v1132 = vpop.f32.mrb[0].mxu0
    %v1133 = vadd.f32 %v876, %v1132
    %1134 = vmatprep.mubr.f32.mxu0 0.0
    %1135 = vmatmul.mubr.f32.gmra.mrb[0].mxu0 %v317
    %v1136 = vpop.f32.mrb[0].mxu0
    %v1137 = vadd.f32 %v880, %v1136
    %v1138 = vpop.f32.mrb[0].mxu0
    %v1139 = vadd.f32 %v882, %v1138
    %1140 = vmatprep.mubr.f32.mxu0 0.0
    %1141 = vmatmul.mubr.f32.gmra.mrb[0].mxu0 %v318
    %v1142 = vpop.f32.mrb[0].mxu0
    %v1143 = vadd.f32 %v886, %v1142
    %v1144 = vpop.f32.mrb[0].mxu0
    %v1145 = vadd.f32 %v888, %v1144
    %1146 = vmatprep.mubr.f32.mxu0 0.0
    %1147 = vmatmul.mubr.f32.gmra.mrb[0].mxu0 %v319
    %v1148 = vpop.f32.mrb[0].mxu0
    %v1149 = vadd.f32 %v892, %v1148
    %v1150 = vpop.f32.mrb[0].mxu0
    %v1151 = vadd.f32 %v894, %v1150
    %1152 = vmatprep.mubr.f32.mxu0 0.0
    %1153 = vmatmul.mubr.f32.gmra.mrb[0].mxu0 %v320
    %v1154 = vpop.f32.mrb[0].mxu0
    %v1155 = vadd.f32 %v898, %v1154
    %v1156 = vpop.f32.mrb[0].mxu0
    %v1157 = vadd.f32 %v900, %v1156
    %1158 = vmatprep.mubr.f32.mxu0 0.0
    %1159 = vmatmul.mubr.f32.gmra.mrb[0].mxu0 %v321
    %v1160 = vpop.f32.mrb[0].mxu0
    %v1161 = vadd.f32 %v904, %v1160
    %v1162 = vpop.f32.mrb[0].mxu0
    %v1163 = vadd.f32 %v906, %v1162
    %1164 = vmatprep.mubr.f32.mxu0 0.0
    %1165 = vmatmul.mubr.f32.gmra.mrb[0].mxu0 %v322
    %v1166 = vpop.f32.mrb[0].mxu0
    %v1167 = vadd.f32 %v910, %v1166
    %v1168 = vpop.f32.mrb[0].mxu0
    %v1169 = vadd.f32 %v912, %v1168
    %1170 = vmatprep.mubr.f32.mxu0 0.0
    %1171 = vmatmul.mubr.f32.gmra.mrb[0].mxu0 %v323
    %v1172 = vpop.f32.mrb[0].mxu0
    %v1173 = vadd.f32 %v916, %v1172
    %v1174 = vpop.f32.mrb[0].mxu0
    %v1175 = vadd.f32 %v918, %v1174
    %1176 = vmatprep.mubr.f32.mxu0 0.0
    %1177 = vmatmul.mubr.f32.gmra.mrb[0].mxu0 %v324
    %v1178 = vpop.f32.mrb[0].mxu0
    %v1179 = vadd.f32 %v922, %v1178
    %v1180 = vpop.f32.mrb[0].mxu0
    %v1181 = vadd.f32 %v924, %v1180
    %1182 = vmatprep.mubr.f32.mxu0 0.0
    %1183 = vmatmul.mubr.f32.gmra.mrb[0].mxu0 %v325
    %v1184 = vpop.f32.mrb[0].mxu0
    %v1185 = vadd.f32 %v928, %v1184
    %v1186 = vpop.f32.mrb[0].mxu0
    %v1187 = vadd.f32 %v930, %v1186
    %1188 = vmatprep.mubr.f32.mxu0 0.0
    %1189 = vmatmul.mubr.f32.gmra.mrb[0].mxu0 %v326
    %v1190 = vpop.f32.mrb[0].mxu0
    %v1191 = vadd.f32 %v934, %v1190
    %v1192 = vpop.f32.mrb[0].mxu0
    %v1193 = vadd.f32 %v936, %v1192
    %1194 = vmatprep.mubr.f32.mxu0 0.0
    %1195 = vmatmul.mubr.f32.gmra.mrb[0].mxu0 %v327
    %v1196 = vpop.f32.mrb[0].mxu0
    %v1197 = vadd.f32 %v940, %v1196
    %v1198 = vpop.f32.mrb[0].mxu0
    %v1199 = vadd.f32 %v942, %v1198
    %1200 = vmatprep.mubr.f32.mxu0 0.0
    %1201 = vmatmul.mubr.f32.gmra.mrb[0].mxu0 %v328
    %v1202 = vpop.f32.mrb[0].mxu0
    %v1203 = vadd.f32 %v946, %v1202
    %v1204 = vpop.f32.mrb[0].mxu0
    %v1205 = vadd.f32 %v948, %v1204
    %1206 = vmatprep.mubr.f32.mxu0 0.0
    %1207 = vmatmul.mubr.f32.gmra.mrb[0].mxu0 %v329
    %v1208 = vpop.f32.mrb[0].mxu0
    %v1209 = vadd.f32 %v952, %v1208
    %v1210 = vpop.f32.mrb[0].mxu0
    %v1211 = vadd.f32 %v954, %v1210
    %1212 = vmatprep.mubr.f32.mxu0 0.0
    %1213 = vmatmul.mubr.f32.gmra.mrb[0].mxu0 %v330
    %v1214 = vpop.f32.mrb[0].mxu0
    %v1215 = vadd.f32 %v958, %v1214
    %v1216 = vpop.f32.mrb[0].mxu0
    %v1217 = vadd.f32 %v960, %v1216
    %1218 = vmatprep.mubr.f32.mxu0 0.0
    %1219 = vmatmul.mubr.f32.gmra.mrb[0].mxu0 %v331
    %v1220 = vpop.f32.mrb[0].mxu0
    %v1221 = vadd.f32 %v964, %v1220
    %v1222 = vpop.f32.mrb[0].mxu0
    %v1223 = vadd.f32 %v966, %v1222
    %1224 = vmatprep.mubr.f32.mxu0 0.0
    %1225 = vmatmul.mubr.f32.gmra.mrb[0].mxu0 %v332
    %v1226 = vpop.f32.mrb[0].mxu0
    %v1227 = vadd.f32 %v970, %v1226
    %v1228 = vpop.f32.mrb[0].mxu0
    %v1229 = vadd.f32 %v972, %v1228
    %1230 = vmatprep.mubr.f32.mxu0 0.0
    %1231 = vmatmul.mubr.f32.gmra.mrb[0].mxu0 %v333
    %v1232 = vpop.f32.mrb[0].mxu0
    %v1233 = vadd.f32 %v976, %v1232
    %v1234 = vpop.f32.mrb[0].mxu0
    %v1235 = vadd.f32 %v978, %v1234
    %1236 = vmatprep.mubr.f32.mxu0 0.0
    %1237 = vmatmul.mubr.f32.gmra.mrb[0].mxu0 %v334
    %v1238 = vpop.f32.mrb[0].mxu0
    %v1239 = vadd.f32 %v982, %v1238
    %v1240 = vpop.f32.mrb[0].mxu0
    %v1241 = vadd.f32 %v984, %v1240
    %1242 = vmatprep.mubr.f32.mxu0 0.0
    %1243 = vmatmul.mubr.f32.gmra.mrb[0].mxu0 %v335
    %v1244 = vpop.f32.mrb[0].mxu0
    %v1245 = vadd.f32 %v988, %v1244
    %v1246 = vpop.f32.mrb[0].mxu0
    %v1247 = vadd.f32 %v990, %v1246
    %1248 = vmatprep.mubr.f32.mxu0 0.0
    %1249 = vmatmul.mubr.f32.gmra.mrb[0].mxu0 %v336
    %v1250 = vpop.f32.mrb[0].mxu0
    %v1251 = vadd.f32 %v994, %v1250
    %v1252 = vpop.f32.mrb[0].mxu0
    %v1253 = vadd.f32 %v996, %v1252
    %1254 = vmatprep.mubr.f32.mxu0 0.0
    %1255 = vmatmul.mubr.f32.gmra.mrb[0].mxu0 %v337
    %v1256 = vpop.f32.mrb[0].mxu0
    %v1257 = vadd.f32 %v1000, %v1256
    %v1258 = vpop.f32.mrb[0].mxu0
    %v1259 = vadd.f32 %v1002, %v1258
    %1260 = vmatprep.mubr.f32.mxu0 0.0
    %1261 = vmatmul.mubr.f32.gmra.mrb[0].mxu0 %v338
    %v1262 = vpop.f32.mrb[0].mxu0
    %v1263 = vadd.f32 %v1006, %v1262
    %v1264 = vpop.f32.mrb[0].mxu0
    %v1265 = vadd.f32 %v1008, %v1264
    %1266 = vmatprep.mubr.f32.mxu0 0.0
    %1267 = vmatmul.mubr.f32.gmra.mrb[0].mxu0 %v339
    %v1268 = vpop.f32.mrb[0].mxu0
    %v1269 = vadd.f32 %v1012, %v1268
    %v1270 = vpop.f32.mrb[0].mxu0
    %v1271 = vadd.f32 %v1014, %v1270
    %1272 = vmatprep.mubr.f32.mxu0 0.0
    %1273 = vmatmul.mubr.f32.gmra.mrb[0].mxu0 %v340
    %v1274 = vpop.f32.mrb[0].mxu0
    %v1275 = vadd.f32 %v1018, %v1274
    %v1276 = vpop.f32.mrb[0].mxu0
    %v1277 = vadd.f32 %v1020, %v1276
    %1278 = vmatprep.mubr.f32.mxu0 0.0
    %1279 = vmatmul.mubr.f32.gmra.mrb[0].mxu0 %v341
    %v1280 = vpop.f32.mrb[0].mxu0
    %v1281 = vadd.f32 %v1024, %v1280
    %v1282 = vpop.f32.mrb[0].mxu0
    %v1283 = vadd.f32 %v1026, %v1282
    %1284 = vdwg.mxu0
    %v1285 = vmax.f32 %v1095, 0.0
    %v1286 = vmax.f32 %v1097, 0.0
    %v1287 = vmax.f32 %v1101, 0.0
    %v1288 = vmax.f32 %v1103, 0.0
    %v1289 = vmax.f32 %v1107, 0.0
    %v1290 = vmax.f32 %v1109, 0.0
    %v1291 = vmax.f32 %v1113, 0.0
    %v1292 = vmax.f32 %v1115, 0.0
    %v1293 = vmax.f32 %v1119, 0.0
    %v1294 = vmax.f32 %v1121, 0.0
    %v1295 = vmax.f32 %v1125, 0.0
    %v1296 = vmax.f32 %v1127, 0.0
    %v1297 = vmax.f32 %v1131, 0.0
    %v1298 = vmax.f32 %v1133, 0.0
    %v1299 = vmax.f32 %v1137, 0.0
    %v1300 = vmax.f32 %v1139, 0.0
    %v1301 = vmax.f32 %v1143, 0.0
    %v1302 = vmax.f32 %v1145, 0.0
    %v1303 = vmax.f32 %v1149, 0.0
    %v1304 = vmax.f32 %v1151, 0.0
    %v1305 = vmax.f32 %v1155, 0.0
    %v1306 = vmax.f32 %v1157, 0.0
    %v1307 = vmax.f32 %v1161, 0.0
    %v1308 = vmax.f32 %v1163, 0.0
    %v1309 = vmax.f32 %v1167, 0.0
    %v1310 = vmax.f32 %v1169, 0.0
    %v1311 = vmax.f32 %v1173, 0.0
    %v1312 = vmax.f32 %v1175, 0.0
    %v1313 = vmax.f32 %v1179, 0.0
    %v1314 = vmax.f32 %v1181, 0.0
    %v1315 = vmax.f32 %v1185, 0.0
    %v1316 = vmax.f32 %v1187, 0.0
    %v1317 = vmax.f32 %v1191, 0.0
    %v1318 = vmax.f32 %v1193, 0.0
    %v1319 = vmax.f32 %v1197, 0.0
    %v1320 = vmax.f32 %v1199, 0.0
    %v1321 = vmax.f32 %v1203, 0.0
    %v1322 = vmax.f32 %v1205, 0.0
    %v1323 = vmax.f32 %v1209, 0.0
    %v1324 = vmax.f32 %v1211, 0.0
    %v1325 = vmax.f32 %v1215, 0.0
    %v1326 = vmax.f32 %v1217, 0.0
    %v1327 = vmax.f32 %v1221, 0.0
    %v1328 = vmax.f32 %v1223, 0.0
    %v1329 = vmax.f32 %v1227, 0.0
    %v1330 = vmax.f32 %v1229, 0.0
    %v1331 = vmax.f32 %v1233, 0.0
    %v1332 = vmax.f32 %v1235, 0.0
    %v1333 = vmax.f32 %v1239, 0.0
    %v1334 = vmax.f32 %v1241, 0.0
    %v1335 = vmax.f32 %v1245, 0.0
    %v1336 = vmax.f32 %v1247, 0.0
    %v1337 = vmax.f32 %v1251, 0.0
    %v1338 = vmax.f32 %v1253, 0.0
    %v1339 = vmax.f32 %v1257, 0.0
    %v1340 = vmax.f32 %v1259, 0.0
    %v1341 = vmax.f32 %v1263, 0.0
    %v1342 = vmax.f32 %v1265, 0.0
    %v1343 = vmax.f32 %v1269, 0.0
    %v1344 = vmax.f32 %v1271, 0.0
    %v1345 = vmax.f32 %v1275, 0.0
    %v1346 = vmax.f32 %v1277, 0.0
    %v1347 = vmax.f32 %v1281, 0.0
    %v1348 = vmax.f32 %v1283, 0.0
    %v1349 = vmax.f32 %v1285, %v1286
    %v1350 = vmax.f32 %v1287, %v1288
    %v1351 = vmax.f32 %v1289, %v1290
    %v1352 = vmax.f32 %v1291, %v1292
    %v1353 = vmax.f32 %v1293, %v1294
    %v1354 = vmax.f32 %v1295, %v1296
    %v1355 = vmax.f32 %v1297, %v1298
    %v1356 = vmax.f32 %v1299, %v1300
    %v1357 = vmax.f32 %v1301, %v1302
    %v1358 = vmax.f32 %v1303, %v1304
    %v1359 = vmax.f32 %v1305, %v1306
    %v1360 = vmax.f32 %v1307, %v1308
    %v1361 = vmax.f32 %v1309, %v1310
    %v1362 = vmax.f32 %v1311, %v1312
    %v1363 = vmax.f32 %v1313, %v1314
    %v1364 = vmax.f32 %v1315, %v1316
    %v1365 = vmax.f32 %v1317, %v1318
    %v1366 = vmax.f32 %v1319, %v1320
    %v1367 = vmax.f32 %v1321, %v1322
    %v1368 = vmax.f32 %v1323, %v1324
    %v1369 = vmax.f32 %v1325, %v1326
    %v1370 = vmax.f32 %v1327, %v1328
    %v1371 = vmax.f32 %v1329, %v1330
    %v1372 = vmax.f32 %v1331, %v1332
    %v1373 = vmax.f32 %v1333, %v1334
    %v1374 = vmax.f32 %v1335, %v1336
    %v1375 = vmax.f32 %v1337, %v1338
    %v1376 = vmax.f32 %v1339, %v1340
    %v1377 = vmax.f32 %v1341, %v1342
    %v1378 = vmax.f32 %v1343, %v1344
    %v1379 = vmax.f32 %v1345, %v1346
    %v1380 = vmax.f32 %v1347, %v1348
    %1381 = vst [vmem:[#allocation3] sm:$0xff] %v1349
    %1382 = vst [vmem:[#allocation3 + $0x8] sm:$0xff] %v1350
    %1383 = vst [vmem:[#allocation3 + $0x10] sm:$0xff] %v1351
    %1384 = vst [vmem:[#allocation3 + $0x18] sm:$0xff] %v1352
    %1385 = vst [vmem:[#allocation3 + $0x20] sm:$0xff] %v1353
    %1386 = vst [vmem:[#allocation3 + $0x28] sm:$0xff] %v1354
    %1387 = vst [vmem:[#allocation3 + $0x30] sm:$0xff] %v1355
    %1388 = vst [vmem:[#allocation3 + $0x38] sm:$0xff] %v1356
    %1389 = vst [vmem:[#allocation3 + $0x40] sm:$0xff] %v1357
    %1390 = vst [vmem:[#allocation3 + $0x48] sm:$0xff] %v1358
    %1391 = vst [vmem:[#allocation3 + $0x50] sm:$0xff] %v1359
    %1392 = vst [vmem:[#allocation3 + $0x58] sm:$0xff] %v1360
    %1393 = vst [vmem:[#allocation3 + $0x60] sm:$0xff] %v1361
    %1394 = vst [vmem:[#allocation3 + $0x68] sm:$0xff] %v1362
    %1395 = vst [vmem:[#allocation3 + $0x70] sm:$0xff] %v1363
    %1396 = vst [vmem:[#allocation3 + $0x78] sm:$0xff] %v1364
    %1397 = vst [vmem:[#allocation3 + $0x80] sm:$0xff] %v1365
    %1398 = vst [vmem:[#allocation3 + $0x88] sm:$0xff] %v1366
    %1399 = vst [vmem:[#allocation3 + $0x90] sm:$0xff] %v1367
    %1400 = vst [vmem:[#allocation3 + $0x98] sm:$0xff] %v1368
    %1401 = vst [vmem:[#allocation3 + $0xa0] sm:$0xff] %v1369
    %1402 = vst [vmem:[#allocation3 + $0xa8] sm:$0xff] %v1370
    %1403 = vst [vmem:[#allocation3 + $0xb0] sm:$0xff] %v1371
    %1404 = vst [vmem:[#allocation3 + $0xb8] sm:$0xff] %v1372
    %1405 = vst [vmem:[#allocation3 + $0xc0] sm:$0xff] %v1373
    %1406 = vst [vmem:[#allocation3 + $0xc8] sm:$0xff] %v1374
    %1407 = vst [vmem:[#allocation3 + $0xd0] sm:$0xff] %v1375
    %1408 = vst [vmem:[#allocation3 + $0xd8] sm:$0xff] %v1376
    %1409 = vst [vmem:[#allocation3 + $0xe0] sm:$0xff] %v1377
    %1410 = vst [vmem:[#allocation3 + $0xe8] sm:$0xff] %v1378
    %1411 = vst [vmem:[#allocation3 + $0xf0] sm:$0xff] %v1379
    %1412 = vst [vmem:[#allocation3 + $0xf8] sm:$0xff] %v1380
    %v1413 = vld [vmem:[#allocation3] ss:$2 sm:$0xff]
    %s1414 = scalar_lea.vmem [#allocation3], 16
    %v1415 = vld [vmem:[%s1414] ss:$2 sm:$0xff]
    %s1416 = scalar_lea.vmem [#allocation3], 32
    %v1417 = vld [vmem:[%s1416] ss:$2 sm:$0xff]
    %s1418 = scalar_lea.vmem [#allocation3], 48
    %v1419 = vld [vmem:[%s1418] ss:$2 sm:$0xff]
    %s1420 = scalar_lea.vmem [#allocation3], 64
    %v1421 = vld [vmem:[%s1420] ss:$2 sm:$0xff]
    %s1422 = scalar_lea.vmem [#allocation3], 80
    %v1423 = vld [vmem:[%s1422] ss:$2 sm:$0xff]
    %s1424 = scalar_lea.vmem [#allocation3], 96
    %v1425 = vld [vmem:[%s1424] ss:$2 sm:$0xff]
    %s1426 = scalar_lea.vmem [#allocation3], 112
    %v1427 = vld [vmem:[%s1426] ss:$2 sm:$0xff]
    %s1428 = scalar_lea.vmem [#allocation3], 128
    %v1429 = vld [vmem:[%s1428] ss:$2 sm:$0xff]
    %s1430 = scalar_lea.vmem [#allocation3], 144
    %v1431 = vld [vmem:[%s1430] ss:$2 sm:$0xff]
    %s1432 = scalar_lea.vmem [#allocation3], 160
    %v1433 = vld [vmem:[%s1432] ss:$2 sm:$0xff]
    %s1434 = scalar_lea.vmem [#allocation3], 176
    %v1435 = vld [vmem:[%s1434] ss:$2 sm:$0xff]
    %s1436 = scalar_lea.vmem [#allocation3], 192
    %v1437 = vld [vmem:[%s1436] ss:$2 sm:$0xff]
    %s1438 = scalar_lea.vmem [#allocation3], 208
    %v1439 = vld [vmem:[%s1438] ss:$2 sm:$0xff]
    %s1440 = scalar_lea.vmem [#allocation3], 224
    %v1441 = vld [vmem:[%s1440] ss:$2 sm:$0xff]
    %s1442 = scalar_lea.vmem [#allocation3], 240
    %v1443 = vld [vmem:[%s1442] ss:$2 sm:$0xff]
    %s1444 = scalar_lea.vmem [#allocation3], 1
    %v1445 = vld [vmem:[%s1444] ss:$2 sm:$0xff]
    %s1446 = scalar_lea.vmem [#allocation3], 17
    %v1447 = vld [vmem:[%s1446] ss:$2 sm:$0xff]
    %s1448 = scalar_lea.vmem [#allocation3], 33
    %v1449 = vld [vmem:[%s1448] ss:$2 sm:$0xff]
    %s1450 = scalar_lea.vmem [#allocation3], 49
    %v1451 = vld [vmem:[%s1450] ss:$2 sm:$0xff]
    %s1452 = scalar_lea.vmem [#allocation3], 65
    %v1453 = vld [vmem:[%s1452] ss:$2 sm:$0xff]
    %s1454 = scalar_lea.vmem [#allocation3], 81
    %v1455 = vld [vmem:[%s1454] ss:$2 sm:$0xff]
    %s1456 = scalar_lea.vmem [#allocation3], 97
    %v1457 = vld [vmem:[%s1456] ss:$2 sm:$0xff]
    %s1458 = scalar_lea.vmem [#allocation3], 113
    %v1459 = vld [vmem:[%s1458] ss:$2 sm:$0xff]
    %s1460 = scalar_lea.vmem [#allocation3], 129
    %v1461 = vld [vmem:[%s1460] ss:$2 sm:$0xff]
    %s1462 = scalar_lea.vmem [#allocation3], 145
    %v1463 = vld [vmem:[%s1462] ss:$2 sm:$0xff]
    %s1464 = scalar_lea.vmem [#allocation3], 161
    %v1465 = vld [vmem:[%s1464] ss:$2 sm:$0xff]
    %s1466 = scalar_lea.vmem [#allocation3], 177
    %v1467 = vld [vmem:[%s1466] ss:$2 sm:$0xff]
    %s1468 = scalar_lea.vmem [#allocation3], 193
    %v1469 = vld [vmem:[%s1468] ss:$2 sm:$0xff]
    %s1470 = scalar_lea.vmem [#allocation3], 209
    %v1471 = vld [vmem:[%s1470] ss:$2 sm:$0xff]
    %s1472 = scalar_lea.vmem [#allocation3], 225
    %v1473 = vld [vmem:[%s1472] ss:$2 sm:$0xff]
    %s1474 = scalar_lea.vmem [#allocation3], 241
    %v1475 = vld [vmem:[%s1474] ss:$2 sm:$0xff]
    %v1476 = vmax.f32 %v1413, %v1445
    %v1477 = vmax.f32 %v1415, %v1447
    %v1478 = vmax.f32 %v1417, %v1449
    %v1479 = vmax.f32 %v1419, %v1451
    %v1480 = vmax.f32 %v1421, %v1453
    %v1481 = vmax.f32 %v1423, %v1455
    %v1482 = vmax.f32 %v1425, %v1457
    %v1483 = vmax.f32 %v1427, %v1459
    %v1484 = vmax.f32 %v1429, %v1461
    %v1485 = vmax.f32 %v1431, %v1463
    %v1486 = vmax.f32 %v1433, %v1465
    %v1487 = vmax.f32 %v1435, %v1467
    %v1488 = vmax.f32 %v1437, %v1469
    %v1489 = vmax.f32 %v1439, %v1471
    %v1490 = vmax.f32 %v1441, %v1473
    %v1491 = vmax.f32 %v1443, %v1475
    %1492 = vst [vmem:[#allocation4] sm:$0xff] %v1476
    %1493 = vst [vmem:[#allocation4 + $0x8] sm:$0xff] %v1477
    %1494 = vst [vmem:[#allocation4 + $0x10] sm:$0xff] %v1478
    %1495 = vst [vmem:[#allocation4 + $0x18] sm:$0xff] %v1479
    %1496 = vst [vmem:[#allocation4 + $0x20] sm:$0xff] %v1480
    %1497 = vst [vmem:[#allocation4 + $0x28] sm:$0xff] %v1481
    %1498 = vst [vmem:[#allocation4 + $0x30] sm:$0xff] %v1482
    %1499 = vst [vmem:[#allocation4 + $0x38] sm:$0xff] %v1483
    %1500 = vst [vmem:[#allocation4 + $0x40] sm:$0xff] %v1484
    %1501 = vst [vmem:[#allocation4 + $0x48] sm:$0xff] %v1485
    %1502 = vst [vmem:[#allocation4 + $0x50] sm:$0xff] %v1486
    %1503 = vst [vmem:[#allocation4 + $0x58] sm:$0xff] %v1487
    %1504 = vst [vmem:[#allocation4 + $0x60] sm:$0xff] %v1488
    %1505 = vst [vmem:[#allocation4 + $0x68] sm:$0xff] %v1489
    %1506 = vst [vmem:[#allocation4 + $0x70] sm:$0xff] %v1490
    %1507 = vst [vmem:[#allocation4 + $0x78] sm:$0xff] %v1491
    %v1508 = vld [vmem:[#allocation4] sm:$0xff]
    %v1509 = vld [vmem:[#allocation4 + $0x8] sm:$0xff]
    %v1510 = vld [vmem:[#allocation4 + $0x10] sm:$0xff]
    %v1511 = vld [vmem:[#allocation4 + $0x18] sm:$0xff]
    %v1512 = vld [vmem:[#allocation4 + $0x20] sm:$0xff]
    %v1513 = vld [vmem:[#allocation4 + $0x28] sm:$0xff]
    %v1514 = vld [vmem:[#allocation4 + $0x30] sm:$0xff]
    %v1515 = vld [vmem:[#allocation4 + $0x38] sm:$0xff]
    %v1516 = vld [vmem:[#allocation4 + $0x40] sm:$0xff]
    %v1517 = vld [vmem:[#allocation4 + $0x48] sm:$0xff]
    %v1518 = vld [vmem:[#allocation4 + $0x50] sm:$0xff]
    %v1519 = vld [vmem:[#allocation4 + $0x58] sm:$0xff]
    %v1520 = vld [vmem:[#allocation4 + $0x60] sm:$0xff]
    %v1521 = vld [vmem:[#allocation4 + $0x68] sm:$0xff]
    %v1522 = vld [vmem:[#allocation4 + $0x70] sm:$0xff]
    %v1523 = vld [vmem:[#allocation4 + $0x78] sm:$0xff]
    %v1524 = vld [vmem:[#allocation4 + $0x1] sm:$0xff]
    %v1525 = vld [vmem:[#allocation4 + $0x9] sm:$0xff]
    %v1526 = vld [vmem:[#allocation4 + $0x11] sm:$0xff]
    %v1527 = vld [vmem:[#allocation4 + $0x19] sm:$0xff]
    %v1528 = vld [vmem:[#allocation4 + $0x21] sm:$0xff]
    %v1529 = vld [vmem:[#allocation4 + $0x29] sm:$0xff]
    %v1530 = vld [vmem:[#allocation4 + $0x31] sm:$0xff]
    %v1531 = vld [vmem:[#allocation4 + $0x39] sm:$0xff]
    %v1532 = vld [vmem:[#allocation4 + $0x41] sm:$0xff]
    %v1533 = vld [vmem:[#allocation4 + $0x49] sm:$0xff]
    %v1534 = vld [vmem:[#allocation4 + $0x51] sm:$0xff]
    %v1535 = vld [vmem:[#allocation4 + $0x59] sm:$0xff]
    %v1536 = vld [vmem:[#allocation4 + $0x61] sm:$0xff]
    %v1537 = vld [vmem:[#allocation4 + $0x69] sm:$0xff]
    %v1538 = vld [vmem:[#allocation4 + $0x71] sm:$0xff]
    %v1539 = vld [vmem:[#allocation4 + $0x79] sm:$0xff]
    %v1540 = vld [vmem:[#allocation4 + $0x2] sm:$0xff]
    %v1541 = vld [vmem:[#allocation4 + $0xa] sm:$0xff]
    %v1542 = vld [vmem:[#allocation4 + $0x12] sm:$0xff]
    %v1543 = vld [vmem:[#allocation4 + $0x1a] sm:$0xff]
    %v1544 = vld [vmem:[#allocation4 + $0x22] sm:$0xff]
    %v1545 = vld [vmem:[#allocation4 + $0x2a] sm:$0xff]
    %v1546 = vld [vmem:[#allocation4 + $0x32] sm:$0xff]
    %v1547 = vld [vmem:[#allocation4 + $0x3a] sm:$0xff]
    %v1548 = vld [vmem:[#allocation4 + $0x42] sm:$0xff]
    %v1549 = vld [vmem:[#allocation4 + $0x4a] sm:$0xff]
    %v1550 = vld [vmem:[#allocation4 + $0x52] sm:$0xff]
    %v1551 = vld [vmem:[#allocation4 + $0x5a] sm:$0xff]
    %v1552 = vld [vmem:[#allocation4 + $0x62] sm:$0xff]
    %v1553 = vld [vmem:[#allocation4 + $0x6a] sm:$0xff]
    %v1554 = vld [vmem:[#allocation4 + $0x72] sm:$0xff]
    %v1555 = vld [vmem:[#allocation4 + $0x7a] sm:$0xff]
    %v1556 = vld [vmem:[#allocation4 + $0x3] sm:$0xff]
    %v1557 = vld [vmem:[#allocation4 + $0xb] sm:$0xff]
    %v1558 = vld [vmem:[#allocation4 + $0x13] sm:$0xff]
    %v1559 = vld [vmem:[#allocation4 + $0x1b] sm:$0xff]
    %v1560 = vld [vmem:[#allocation4 + $0x23] sm:$0xff]
    %v1561 = vld [vmem:[#allocation4 + $0x2b] sm:$0xff]
    %v1562 = vld [vmem:[#allocation4 + $0x33] sm:$0xff]
    %v1563 = vld [vmem:[#allocation4 + $0x3b] sm:$0xff]
    %v1564 = vld [vmem:[#allocation4 + $0x43] sm:$0xff]
    %v1565 = vld [vmem:[#allocation4 + $0x4b] sm:$0xff]
    %v1566 = vld [vmem:[#allocation4 + $0x53] sm:$0xff]
    %v1567 = vld [vmem:[#allocation4 + $0x5b] sm:$0xff]
    %v1568 = vld [vmem:[#allocation4 + $0x63] sm:$0xff]
    %v1569 = vld [vmem:[#allocation4 + $0x6b] sm:$0xff]
    %v1570 = vld [vmem:[#allocation4 + $0x73] sm:$0xff]
    %v1571 = vld [vmem:[#allocation4 + $0x7b] sm:$0xff]
    %v1572 = vld [vmem:[#allocation4 + $0x4] sm:$0xff]
    %v1573 = vld [vmem:[#allocation4 + $0xc] sm:$0xff]
    %v1574 = vld [vmem:[#allocation4 + $0x14] sm:$0xff]
    %v1575 = vld [vmem:[#allocation4 + $0x1c] sm:$0xff]
    %v1576 = vld [vmem:[#allocation4 + $0x24] sm:$0xff]
    %v1577 = vld [vmem:[#allocation4 + $0x2c] sm:$0xff]
    %v1578 = vld [vmem:[#allocation4 + $0x34] sm:$0xff]
    %v1579 = vld [vmem:[#allocation4 + $0x3c] sm:$0xff]
    %v1580 = vld [vmem:[#allocation4 + $0x44] sm:$0xff]
    %v1581 = vld [vmem:[#allocation4 + $0x4c] sm:$0xff]
    %v1582 = vld [vmem:[#allocation4 + $0x54] sm:$0xff]
    %v1583 = vld [vmem:[#allocation4 + $0x5c] sm:$0xff]
    %v1584 = vld [vmem:[#allocation4 + $0x64] sm:$0xff]
    %v1585 = vld [vmem:[#allocation4 + $0x6c] sm:$0xff]
    %v1586 = vld [vmem:[#allocation4 + $0x74] sm:$0xff]
    %v1587 = vld [vmem:[#allocation4 + $0x7c] sm:$0xff]
    %v1588 = vld [vmem:[#allocation8] sm:$0xff]
    %v1589 = vld [vmem:[#allocation8 + $0x8] sm:$0xff]
    %v1590 = vld [vmem:[#allocation8 + $0x10] sm:$0xff]
    %v1591 = vld [vmem:[#allocation8 + $0x18] sm:$0xff]
    %v1592 = vld [vmem:[#allocation8 + $0x20] sm:$0xff]
    %v1593 = vld [vmem:[#allocation8 + $0x28] sm:$0xff]
    %v1594 = vld [vmem:[#allocation8 + $0x30] sm:$0xff]
    %v1595 = vld [vmem:[#allocation8 + $0x38] sm:$0xff]
    %v1596 = vld [vmem:[#allocation8 + $0x40] sm:$0xff]
    %v1597 = vld [vmem:[#allocation8 + $0x48] sm:$0xff]
    %v1598 = vld [vmem:[#allocation8 + $0x50] sm:$0xff]
    %v1599 = vld [vmem:[#allocation8 + $0x58] sm:$0xff]
    %v1600 = vld [vmem:[#allocation8 + $0x60] sm:$0xff]
    %v1601 = vld [vmem:[#allocation8 + $0x68] sm:$0xff]
    %v1602 = vld [vmem:[#allocation8 + $0x70] sm:$0xff]
    %v1603 = vld [vmem:[#allocation8 + $0x78] sm:$0xff]
    %v1604 = vld [vmem:[#allocation8 + $0x80] sm:$0xff]
    %v1605 = vld [vmem:[#allocation8 + $0x88] sm:$0xff]
    %v1606 = vld [vmem:[#allocation8 + $0x90] sm:$0xff]
    %v1607 = vld [vmem:[#allocation8 + $0x98] sm:$0xff]
    %v1608 = vld [vmem:[#allocation8 + $0xa0] sm:$0xff]
    %v1609 = vld [vmem:[#allocation8 + $0xa8] sm:$0xff]
    %v1610 = vld [vmem:[#allocation8 + $0xb0] sm:$0xff]
    %v1611 = vld [vmem:[#allocation8 + $0xb8] sm:$0xff]
    %v1612 = vld [vmem:[#allocation8 + $0xc0] sm:$0xff]
    %v1613 = vld [vmem:[#allocation8 + $0xc8] sm:$0xff]
    %v1614 = vld [vmem:[#allocation8 + $0xd0] sm:$0xff]
    %v1615 = vld [vmem:[#allocation8 + $0xd8] sm:$0xff]
    %v1616 = vld [vmem:[#allocation8 + $0xe0] sm:$0xff]
    %v1617 = vld [vmem:[#allocation8 + $0xe8] sm:$0xff]
    %v1618 = vld [vmem:[#allocation8 + $0xf0] sm:$0xff]
    %v1619 = vld [vmem:[#allocation8 + $0xf8] sm:$0xff]
    %v1620 = vld [vmem:[#allocation8 + $0x100] sm:$0xff]
    %v1621 = vld [vmem:[#allocation8 + $0x108] sm:$0xff]
    %v1622 = vld [vmem:[#allocation8 + $0x110] sm:$0xff]
    %v1623 = vld [vmem:[#allocation8 + $0x118] sm:$0xff]
    %v1624 = vld [vmem:[#allocation8 + $0x120] sm:$0xff]
    %v1625 = vld [vmem:[#allocation8 + $0x128] sm:$0xff]
    %v1626 = vld [vmem:[#allocation8 + $0x130] sm:$0xff]
    %v1627 = vld [vmem:[#allocation8 + $0x138] sm:$0xff]
    %v1628 = vld [vmem:[#allocation8 + $0x140] sm:$0xff]
    %v1629 = vld [vmem:[#allocation8 + $0x148] sm:$0xff]
    %v1630 = vld [vmem:[#allocation8 + $0x150] sm:$0xff]
    %v1631 = vld [vmem:[#allocation8 + $0x158] sm:$0xff]
    %v1632 = vld [vmem:[#allocation8 + $0x160] sm:$0xff]
    %v1633 = vld [vmem:[#allocation8 + $0x168] sm:$0xff]
    %v1634 = vld [vmem:[#allocation8 + $0x170] sm:$0xff]
    %v1635 = vld [vmem:[#allocation8 + $0x178] sm:$0xff]
    %v1636 = vld [vmem:[#allocation8 + $0x180] sm:$0xff]
    %v1637 = vld [vmem:[#allocation8 + $0x188] sm:$0xff]
    %v1638 = vld [vmem:[#allocation8 + $0x190] sm:$0xff]
    %v1639 = vld [vmem:[#allocation8 + $0x198] sm:$0xff]
    %v1640 = vld [vmem:[#allocation8 + $0x1a0] sm:$0xff]
    %v1641 = vld [vmem:[#allocation8 + $0x1a8] sm:$0xff]
    %v1642 = vld [vmem:[#allocation8 + $0x1b0] sm:$0xff]
    %v1643 = vld [vmem:[#allocation8 + $0x1b8] sm:$0xff]
    %v1644 = vld [vmem:[#allocation8 + $0x1c0] sm:$0xff]
    %v1645 = vld [vmem:[#allocation8 + $0x1c8] sm:$0xff]
    %v1646 = vld [vmem:[#allocation8 + $0x1d0] sm:$0xff]
    %v1647 = vld [vmem:[#allocation8 + $0x1d8] sm:$0xff]
    %v1648 = vld [vmem:[#allocation8 + $0x1e0] sm:$0xff]
    %v1649 = vld [vmem:[#allocation8 + $0x1e8] sm:$0xff]
    %v1650 = vld [vmem:[#allocation8 + $0x1f0] sm:$0xff]
    %v1651 = vld [vmem:[#allocation8 + $0x1f8] sm:$0xff]
    %v1652 = vld [vmem:[#allocation8 + $0x200] sm:$0xff]
    %v1653 = vld [vmem:[#allocation8 + $0x208] sm:$0xff]
    %v1654 = vld [vmem:[#allocation8 + $0x210] sm:$0xff]
    %v1655 = vld [vmem:[#allocation8 + $0x218] sm:$0xff]
    %v1656 = vld [vmem:[#allocation8 + $0x220] sm:$0xff]
    %v1657 = vld [vmem:[#allocation8 + $0x228] sm:$0xff]
    %v1658 = vld [vmem:[#allocation8 + $0x230] sm:$0xff]
    %v1659 = vld [vmem:[#allocation8 + $0x238] sm:$0xff]
    %v1660 = vld [vmem:[#allocation8 + $0x240] sm:$0xff]
    %v1661 = vld [vmem:[#allocation8 + $0x248] sm:$0xff]
    %v1662 = vld [vmem:[#allocation8 + $0x250] sm:$0xff]
    %v1663 = vld [vmem:[#allocation8 + $0x258] sm:$0xff]
    %v1664 = vld [vmem:[#allocation8 + $0x260] sm:$0xff]
    %v1665 = vld [vmem:[#allocation8 + $0x268] sm:$0xff]
    %v1666 = vld [vmem:[#allocation8 + $0x270] sm:$0xff]
    %v1667 = vld [vmem:[#allocation8 + $0x278] sm:$0xff]
    %v1668 = vld [vmem:[#allocation8 + $0x280] sm:$0xff]
    %v1669 = vld [vmem:[#allocation8 + $0x288] sm:$0xff]
    %v1670 = vld [vmem:[#allocation8 + $0x290] sm:$0xff]
    %v1671 = vld [vmem:[#allocation8 + $0x298] sm:$0xff]
    %v1672 = vld [vmem:[#allocation8 + $0x2a0] sm:$0xff]
    %v1673 = vld [vmem:[#allocation8 + $0x2a8] sm:$0xff]
    %v1674 = vld [vmem:[#allocation8 + $0x2b0] sm:$0xff]
    %v1675 = vld [vmem:[#allocation8 + $0x2b8] sm:$0xff]
    %v1676 = vld [vmem:[#allocation8 + $0x2c0] sm:$0xff]
    %v1677 = vld [vmem:[#allocation8 + $0x2c8] sm:$0xff]
    %v1678 = vld [vmem:[#allocation8 + $0x2d0] sm:$0xff]
    %v1679 = vld [vmem:[#allocation8 + $0x2d8] sm:$0xff]
    %v1680 = vld [vmem:[#allocation8 + $0x2e0] sm:$0xff]
    %v1681 = vld [vmem:[#allocation8 + $0x2e8] sm:$0xff]
    %v1682 = vld [vmem:[#allocation8 + $0x2f0] sm:$0xff]
    %v1683 = vld [vmem:[#allocation8 + $0x2f8] sm:$0xff]
    %v1684 = vld [vmem:[#allocation8 + $0x300] sm:$0xff]
    %v1685 = vld [vmem:[#allocation8 + $0x308] sm:$0xff]
    %v1686 = vld [vmem:[#allocation8 + $0x310] sm:$0xff]
    %v1687 = vld [vmem:[#allocation8 + $0x318] sm:$0xff]
    %v1688 = vld [vmem:[#allocation8 + $0x320] sm:$0xff]
    %v1689 = vld [vmem:[#allocation8 + $0x328] sm:$0xff]
    %v1690 = vld [vmem:[#allocation8 + $0x330] sm:$0xff]
    %v1691 = vld [vmem:[#allocation8 + $0x338] sm:$0xff]
    %v1692 = vld [vmem:[#allocation8 + $0x340] sm:$0xff]
    %v1693 = vld [vmem:[#allocation8 + $0x348] sm:$0xff]
    %v1694 = vld [vmem:[#allocation8 + $0x350] sm:$0xff]
    %v1695 = vld [vmem:[#allocation8 + $0x358] sm:$0xff]
    %v1696 = vld [vmem:[#allocation8 + $0x360] sm:$0xff]
    %v1697 = vld [vmem:[#allocation8 + $0x368] sm:$0xff]
    %v1698 = vld [vmem:[#allocation8 + $0x370] sm:$0xff]
    %v1699 = vld [vmem:[#allocation8 + $0x378] sm:$0xff]
    %v1700 = vld [vmem:[#allocation8 + $0x380] sm:$0xff]
    %v1701 = vld [vmem:[#allocation8 + $0x388] sm:$0xff]
    %v1702 = vld [vmem:[#allocation8 + $0x390] sm:$0xff]
    %v1703 = vld [vmem:[#allocation8 + $0x398] sm:$0xff]
    %v1704 = vld [vmem:[#allocation8 + $0x3a0] sm:$0xff]
    %v1705 = vld [vmem:[#allocation8 + $0x3a8] sm:$0xff]
    %v1706 = vld [vmem:[#allocation8 + $0x3b0] sm:$0xff]
    %v1707 = vld [vmem:[#allocation8 + $0x3b8] sm:$0xff]
    %v1708 = vld [vmem:[#allocation8 + $0x3c0] sm:$0xff]
    %v1709 = vld [vmem:[#allocation8 + $0x3c8] sm:$0xff]
    %v1710 = vld [vmem:[#allocation8 + $0x3d0] sm:$0xff]
    %v1711 = vld [vmem:[#allocation8 + $0x3d8] sm:$0xff]
    %v1712 = vld [vmem:[#allocation8 + $0x3e0] sm:$0xff]
    %v1713 = vld [vmem:[#allocation8 + $0x3e8] sm:$0xff]
    %v1714 = vld [vmem:[#allocation8 + $0x3f0] sm:$0xff]
    %v1715 = vld [vmem:[#allocation8 + $0x3f8] sm:$0xff]
    %v1716 = vld [vmem:[#allocation8 + $0x400] sm:$0xff]
    %v1717 = vld [vmem:[#allocation8 + $0x408] sm:$0xff]
    %v1718 = vld [vmem:[#allocation8 + $0x410] sm:$0xff]
    %v1719 = vld [vmem:[#allocation8 + $0x418] sm:$0xff]
    %v1720 = vld [vmem:[#allocation8 + $0x420] sm:$0xff]
    %v1721 = vld [vmem:[#allocation8 + $0x428] sm:$0xff]
    %v1722 = vld [vmem:[#allocation8 + $0x430] sm:$0xff]
    %v1723 = vld [vmem:[#allocation8 + $0x438] sm:$0xff]
    %v1724 = vld [vmem:[#allocation8 + $0x440] sm:$0xff]
    %v1725 = vld [vmem:[#allocation8 + $0x448] sm:$0xff]
    %v1726 = vld [vmem:[#allocation8 + $0x450] sm:$0xff]
    %v1727 = vld [vmem:[#allocation8 + $0x458] sm:$0xff]
    %v1728 = vld [vmem:[#allocation8 + $0x460] sm:$0xff]
    %v1729 = vld [vmem:[#allocation8 + $0x468] sm:$0xff]
    %v1730 = vld [vmem:[#allocation8 + $0x470] sm:$0xff]
    %v1731 = vld [vmem:[#allocation8 + $0x478] sm:$0xff]
    %v1732 = vld [vmem:[#allocation8 + $0x480] sm:$0xff]
    %v1733 = vld [vmem:[#allocation8 + $0x488] sm:$0xff]
    %v1734 = vld [vmem:[#allocation8 + $0x490] sm:$0xff]
    %v1735 = vld [vmem:[#allocation8 + $0x498] sm:$0xff]
    %v1736 = vld [vmem:[#allocation8 + $0x4a0] sm:$0xff]
    %v1737 = vld [vmem:[#allocation8 + $0x4a8] sm:$0xff]
    %v1738 = vld [vmem:[#allocation8 + $0x4b0] sm:$0xff]
    %v1739 = vld [vmem:[#allocation8 + $0x4b8] sm:$0xff]
    %v1740 = vld [vmem:[#allocation8 + $0x4c0] sm:$0xff]
    %v1741 = vld [vmem:[#allocation8 + $0x4c8] sm:$0xff]
    %v1742 = vld [vmem:[#allocation8 + $0x4d0] sm:$0xff]
    %v1743 = vld [vmem:[#allocation8 + $0x4d8] sm:$0xff]
    %v1744 = vld [vmem:[#allocation8 + $0x4e0] sm:$0xff]
    %v1745 = vld [vmem:[#allocation8 + $0x4e8] sm:$0xff]
    %v1746 = vld [vmem:[#allocation8 + $0x4f0] sm:$0xff]
    %v1747 = vld [vmem:[#allocation8 + $0x4f8] sm:$0xff]
    %v1748 = vld [vmem:[%s4] sm:$0x3]
    %v1750 = vlaneseq
    %v1751 = vshrl.u32 %v1750, 7
    %v1752 = vsub.s32 0, %v1751
    %v1753 = vrot.slane %v1748, %v1752
    %v1754 = vlaneseq
    %v1755 = vshrl.u32 %v1754, 7
    %v1756 = vsub.s32 1, %v1755
    %v1757 = vrot.slane %v1748, %v1756
    %1760 = vmatprep.subr.mxu0 %v1589
    %1761 = vmatpush1.msra.mxu0 %v1588
    %1762 = vmatprep.subr.mxu0 %v1591
    %1763 = vmatpush1.msra.mxu0 %v1590
    %1764 = vmatprep.subr.mxu0 %v1593
    %1765 = vmatpush1.msra.mxu0 %v1592
    %1766 = vmatprep.subr.mxu0 %v1595
    %1767 = vmatpush1.msra.mxu0 %v1594
    %1768 = vmatprep.subr.mxu0 %v1597
    %1769 = vmatpush1.msra.mxu0 %v1596
    %1770 = vmatprep.subr.mxu0 %v1599
    %1771 = vmatpush1.msra.mxu0 %v1598
    %1772 = vmatprep.subr.mxu0 %v1601
    %1773 = vmatpush1.msra.mxu0 %v1600
    %1774 = vmatprep.subr.mxu0 %v1603
    %1775 = vmatpush1.msra.mxu0 %v1602
    %1776 = vmatprep.subr.mxu0 %v1605
    %1777 = vmatpush1.msra.mxu0 %v1604
    %1778 = vmatprep.subr.mxu0 %v1607
    %1779 = vmatpush1.msra.mxu0 %v1606
    %1780 = vmatprep.subr.mxu0 %v1609
    %1781 = vmatpush1.msra.mxu0 %v1608
    %1782 = vmatprep.subr.mxu0 %v1611
    %1783 = vmatpush1.msra.mxu0 %v1610
    %1784 = vmatprep.subr.mxu0 %v1613
    %1785 = vmatpush1.msra.mxu0 %v1612
    %1786 = vmatprep.subr.mxu0 %v1615
    %1787 = vmatpush1.msra.mxu0 %v1614
    %1788 = vmatprep.subr.mxu0 %v1617
    %1789 = vmatpush1.msra.mxu0 %v1616
    %1790 = vmatprep.subr.mxu0 %v1619
    %1791 = vmatpush1.msra.mxu0 %v1618
    %1792 = vmatprep.subr.mxu0 %v1621
    %1793 = vmatpush1.msra.mxu0 %v1620
    %1794 = vmatprep.subr.mxu0 %v1623
    %1795 = vmatpush1.msra.mxu0 %v1622
    %1796 = vmatprep.subr.mxu0 %v1625
    %1797 = vmatpush1.msra.mxu0 %v1624
    %1798 = vmatprep.subr.mxu0 %v1627
    %1799 = vmatpush1.msra.mxu0 %v1626
    %1800 = vmatprep.subr.mxu0 %v1629
    %1801 = vmatpush1.msra.mxu0 %v1628
    %1802 = vmatprep.subr.mxu0 %v1631
    %1803 = vmatpush1.msra.mxu0 %v1630
    %1804 = vmatprep.subr.mxu0 %v1633
    %1805 = vmatpush1.msra.mxu0 %v1632
    %1806 = vmatprep.subr.mxu0 %v1635
    %1807 = vmatpush1.msra.mxu0 %v1634
    %1808 = vmatprep.subr.mxu0 %v1637
    %1809 = vmatpush1.msra.mxu0 %v1636
    %1810 = vmatprep.subr.mxu0 %v1639
    %1811 = vmatpush1.msra.mxu0 %v1638
    %1812 = vmatprep.subr.mxu0 %v1641
    %1813 = vmatpush1.msra.mxu0 %v1640
    %1814 = vmatprep.subr.mxu0 %v1643
    %1815 = vmatpush1.msra.mxu0 %v1642
    %1816 = vmatprep.subr.mxu0 %v1645
    %1817 = vmatpush1.msra.mxu0 %v1644
    %1818 = vmatprep.subr.mxu0 %v1647
    %1819 = vmatpush1.msra.mxu0 %v1646
    %1820 = vmatprep.subr.mxu0 %v1649
    %1821 = vmatpush1.msra.mxu0 %v1648
    %1822 = vmatprep.subr.mxu0 %v1651
    %1823 = vmatpush1.msra.mxu0 %v1650
    %1824 = vmatprep.mubr.f32.mxu0 %v1524
    %1825 = vmatmul.mubr.f32.gmra.mrb[0].mxu0 %v1508
    %v1826 = vpop.f32.mrb[0].mxu0
    %v1827 = vadd.f32 %v1753, %v1826
    %v1828 = vpop.f32.mrb[0].mxu0
    %v1829 = vadd.f32 %v1757, %v1828
    %1830 = vmatprep.mubr.f32.mxu0 %v1525
    %1831 = vmatmul.mubr.f32.gmra.mrb[0].mxu0 %v1509
    %v1832 = vpop.f32.mrb[0].mxu0
    %v1833 = vadd.f32 %v1753, %v1832
    %v1834 = vpop.f32.mrb[0].mxu0
    %v1835 = vadd.f32 %v1757, %v1834
    %1836 = vmatprep.mubr.f32.mxu0 %v1526
    %1837 = vmatmul.mubr.f32.gmra.mrb[0].mxu0 %v1510
    %v1838 = vpop.f32.mrb[0].mxu0
    %v1839 = vadd.f32 %v1753, %v1838
    %v1840 = vpop.f32.mrb[0].mxu0
    %v1841 = vadd.f32 %v1757, %v1840
    %1842 = vmatprep.mubr.f32.mxu0 %v1527
    %1843 = vmatmul.mubr.f32.gmra.mrb[0].mxu0 %v1511
    %v1844 = vpop.f32.mrb[0].mxu0
    %v1845 = vadd.f32 %v1753, %v1844
    %v1846 = vpop.f32.mrb[0].mxu0
    %v1847 = vadd.f32 %v1757, %v1846
    %1848 = vmatprep.mubr.f32.mxu0 %v1528
    %1849 = vmatmul.mubr.f32.gmra.mrb[0].mxu0 %v1512
    %v1850 = vpop.f32.mrb[0].mxu0
    %v1851 = vadd.f32 %v1753, %v1850
    %v1852 = vpop.f32.mrb[0].mxu0
    %v1853 = vadd.f32 %v1757, %v1852
    %1854 = vmatprep.mubr.f32.mxu0 %v1529
    %1855 = vmatmul.mubr.f32.gmra.mrb[0].mxu0 %v1513
    %v1856 = vpop.f32.mrb[0].mxu0
    %v1857 = vadd.f32 %v1753, %v1856
    %v1858 = vpop.f32.mrb[0].mxu0
    %v1859 = vadd.f32 %v1757, %v1858
    %1860 = vmatprep.mubr.f32.mxu0 %v1530
    %1861 = vmatmul.mubr.f32.gmra.mrb[0].mxu0 %v1514
    %v1862 = vpop.f32.mrb[0].mxu0
    %v1863 = vadd.f32 %v1753, %v1862
    %v1864 = vpop.f32.mrb[0].mxu0
    %v1865 = vadd.f32 %v1757, %v1864
    %1866 = vmatprep.mubr.f32.mxu0 %v1531
    %1867 = vmatmul.mubr.f32.gmra.mrb[0].mxu0 %v1515
    %v1868 = vpop.f32.mrb[0].mxu0
    %v1869 = vadd.f32 %v1753, %v1868
    %v1870 = vpop.f32.mrb[0].mxu0
    %v1871 = vadd.f32 %v1757, %v1870
    %1872 = vmatprep.mubr.f32.mxu0 %v1532
    %1873 = vmatmul.mubr.f32.gmra.mrb[0].mxu0 %v1516
    %v1874 = vpop.f32.mrb[0].mxu0
    %v1875 = vadd.f32 %v1753, %v1874
    %v1876 = vpop.f32.mrb[0].mxu0
    %v1877 = vadd.f32 %v1757, %v1876
    %1878 = vmatprep.mubr.f32.mxu0 %v1533
    %1879 = vmatmul.mubr.f32.gmra.mrb[0].mxu0 %v1517
    %v1880 = vpop.f32.mrb[0].mxu0
    %v1881 = vadd.f32 %v1753, %v1880
    %v1882 = vpop.f32.mrb[0].mxu0
    %v1883 = vadd.f32 %v1757, %v1882
    %1884 = vmatprep.mubr.f32.mxu0 %v1534
    %1885 = vmatmul.mubr.f32.gmra.mrb[0].mxu0 %v1518
    %v1886 = vpop.f32.mrb[0].mxu0
    %v1887 = vadd.f32 %v1753, %v1886
    %v1888 = vpop.f32.mrb[0].mxu0
    %v1889 = vadd.f32 %v1757, %v1888
    %1890 = vmatprep.mubr.f32.mxu0 %v1535
    %1891 = vmatmul.mubr.f32.gmra.mrb[0].mxu0 %v1519
    %v1892 = vpop.f32.mrb[0].mxu0
    %v1893 = vadd.f32 %v1753, %v1892
    %v1894 = vpop.f32.mrb[0].mxu0
    %v1895 = vadd.f32 %v1757, %v1894
    %1896 = vmatprep.mubr.f32.mxu0 %v1536
    %1897 = vmatmul.mubr.f32.gmra.mrb[0].mxu0 %v1520
    %v1898 = vpop.f32.mrb[0].mxu0
    %v1899 = vadd.f32 %v1753, %v1898
    %v1900 = vpop.f32.mrb[0].mxu0
    %v1901 = vadd.f32 %v1757, %v1900
    %1902 = vmatprep.mubr.f32.mxu0 %v1537
    %1903 = vmatmul.mubr.f32.gmra.mrb[0].mxu0 %v1521
    %v1904 = vpop.f32.mrb[0].mxu0
    %v1905 = vadd.f32 %v1753, %v1904
    %v1906 = vpop.f32.mrb[0].mxu0
    %v1907 = vadd.f32 %v1757, %v1906
    %1908 = vmatprep.mubr.f32.mxu0 %v1538
    %1909 = vmatmul.mubr.f32.gmra.mrb[0].mxu0 %v1522
    %v1910 = vpop.f32.mrb[0].mxu0
    %v1911 = vadd.f32 %v1753, %v1910
    %v1912 = vpop.f32.mrb[0].mxu0
    %v1913 = vadd.f32 %v1757, %v1912
    %1914 = vmatprep.mubr.f32.mxu0 %v1539
    %1915 = vmatmul.mubr.f32.gmra.mrb[0].mxu0 %v1523
    %v1916 = vpop.f32.mrb[0].mxu0
    %v1917 = vadd.f32 %v1753, %v1916
    %v1918 = vpop.f32.mrb[0].mxu0
    %v1919 = vadd.f32 %v1757, %v1918
    %1920 = vdwg.mxu0
    %1921 = vmatprep.subr.mxu0 %v1653
    %1922 = vmatpush1.msra.mxu0 %v1652
    %1923 = vmatprep.subr.mxu0 %v1655
    %1924 = vmatpush1.msra.mxu0 %v1654
    %1925 = vmatprep.subr.mxu0 %v1657
    %1926 = vmatpush1.msra.mxu0 %v1656
    %1927 = vmatprep.subr.mxu0 %v1659
    %1928 = vmatpush1.msra.mxu0 %v1658
    %1929 = vmatprep.subr.mxu0 %v1661
    %1930 = vmatpush1.msra.mxu0 %v1660
    %1931 = vmatprep.subr.mxu0 %v1663
    %1932 = vmatpush1.msra.mxu0 %v1662
    %1933 = vmatprep.subr.mxu0 %v1665
    %1934 = vmatpush1.msra.mxu0 %v1664
    %1935 = vmatprep.subr.mxu0 %v1667
    %1936 = vmatpush1.msra.mxu0 %v1666
    %1937 = vmatprep.subr.mxu0 %v1669
    %1938 = vmatpush1.msra.mxu0 %v1668
    %1939 = vmatprep.subr.mxu0 %v1671
    %1940 = vmatpush1.msra.mxu0 %v1670
    %1941 = vmatprep.subr.mxu0 %v1673
    %1942 = vmatpush1.msra.mxu0 %v1672
    %1943 = vmatprep.subr.mxu0 %v1675
    %1944 = vmatpush1.msra.mxu0 %v1674
    %1945 = vmatprep.subr.mxu0 %v1677
    %1946 = vmatpush1.msra.mxu0 %v1676
    %1947 = vmatprep.subr.mxu0 %v1679
    %1948 = vmatpush1.msra.mxu0 %v1678
    %1949 = vmatprep.subr.mxu0 %v1681
    %1950 = vmatpush1.msra.mxu0 %v1680
    %1951 = vmatprep.subr.mxu0 %v1683
    %1952 = vmatpush1.msra.mxu0 %v1682
    %1953 = vmatprep.subr.mxu0 %v1685
    %1954 = vmatpush1.msra.mxu0 %v1684
    %1955 = vmatprep.subr.mxu0 %v1687
    %1956 = vmatpush1.msra.mxu0 %v1686
    %1957 = vmatprep.subr.mxu0 %v1689
    %1958 = vmatpush1.msra.mxu0 %v1688
    %1959 = vmatprep.subr.mxu0 %v1691
    %1960 = vmatpush1.msra.mxu0 %v1690
    %1961 = vmatprep.subr.mxu0 %v1693
    %1962 = vmatpush1.msra.mxu0 %v1692
    %1963 = vmatprep.subr.mxu0 %v1695
    %1964 = vmatpush1.msra.mxu0 %v1694
    %1965 = vmatprep.subr.mxu0 %v1697
    %1966 = vmatpush1.msra.mxu0 %v1696
    %1967 = vmatprep.subr.mxu0 %v1699
    %1968 = vmatpush1.msra.mxu0 %v1698
    %1969 = vmatprep.subr.mxu0 %v1701
    %1970 = vmatpush1.msra.mxu0 %v1700
    %1971 = vmatprep.subr.mxu0 %v1703
    %1972 = vmatpush1.msra.mxu0 %v1702
    %1973 = vmatprep.subr.mxu0 %v1705
    %1974 = vmatpush1.msra.mxu0 %v1704
    %1975 = vmatprep.subr.mxu0 %v1707
    %1976 = vmatpush1.msra.mxu0 %v1706
    %1977 = vmatprep.subr.mxu0 %v1709
    %1978 = vmatpush1.msra.mxu0 %v1708
    %1979 = vmatprep.subr.mxu0 %v1711
    %1980 = vmatpush1.msra.mxu0 %v1710
    %1981 = vmatprep.subr.mxu0 %v1713
    %1982 = vmatpush1.msra.mxu0 %v1712
    %1983 = vmatprep.subr.mxu0 %v1715
    %1984 = vmatpush1.msra.mxu0 %v1714
    %1985 = vmatprep.mubr.f32.mxu0 %v1556
    %1986 = vmatmul.mubr.f32.gmra.mrb[0].mxu0 %v1540
    %v1987 = vpop.f32.mrb[0].mxu0
    %v1988 = vadd.f32 %v1827, %v1987
    %v1989 = vpop.f32.mrb[0].mxu0
    %v1990 = vadd.f32 %v1829, %v1989
    %1991 = vmatprep.mubr.f32.mxu0 %v1557
    %1992 = vmatmul.mubr.f32.gmra.mrb[0].mxu0 %v1541
    %v1993 = vpop.f32.mrb[0].mxu0
    %v1994 = vadd.f32 %v1833, %v1993
    %v1995 = vpop.f32.mrb[0].mxu0
    %v1996 = vadd.f32 %v1835, %v1995
    %1997 = vmatprep.mubr.f32.mxu0 %v1558
    %1998 = vmatmul.mubr.f32.gmra.mrb[0].mxu0 %v1542
    %v1999 = vpop.f32.mrb[0].mxu0
    %v2000 = vadd.f32 %v1839, %v1999
    %v2001 = vpop.f32.mrb[0].mxu0
    %v2002 = vadd.f32 %v1841, %v2001
    %2003 = vmatprep.mubr.f32.mxu0 %v1559
    %2004 = vmatmul.mubr.f32.gmra.mrb[0].mxu0 %v1543
    %v2005 = vpop.f32.mrb[0].mxu0
    %v2006 = vadd.f32 %v1845, %v2005
    %v2007 = vpop.f32.mrb[0].mxu0
    %v2008 = vadd.f32 %v1847, %v2007
    %2009 = vmatprep.mubr.f32.mxu0 %v1560
    %2010 = vmatmul.mubr.f32.gmra.mrb[0].mxu0 %v1544
    %v2011 = vpop.f32.mrb[0].mxu0
    %v2012 = vadd.f32 %v1851, %v2011
    %v2013 = vpop.f32.mrb[0].mxu0
    %v2014 = vadd.f32 %v1853, %v2013
    %2015 = vmatprep.mubr.f32.mxu0 %v1561
    %2016 = vmatmul.mubr.f32.gmra.mrb[0].mxu0 %v1545
    %v2017 = vpop.f32.mrb[0].mxu0
    %v2018 = vadd.f32 %v1857, %v2017
    %v2019 = vpop.f32.mrb[0].mxu0
    %v2020 = vadd.f32 %v1859, %v2019
    %2021 = vmatprep.mubr.f32.mxu0 %v1562
    %2022 = vmatmul.mubr.f32.gmra.mrb[0].mxu0 %v1546
    %v2023 = vpop.f32.mrb[0].mxu0
    %v2024 = vadd.f32 %v1863, %v2023
    %v2025 = vpop.f32.mrb[0].mxu0
    %v2026 = vadd.f32 %v1865, %v2025
    %2027 = vmatprep.mubr.f32.mxu0 %v1563
    %2028 = vmatmul.mubr.f32.gmra.mrb[0].mxu0 %v1547
    %v2029 = vpop.f32.mrb[0].mxu0
    %v2030 = vadd.f32 %v1869, %v2029
    %v2031 = vpop.f32.mrb[0].mxu0
    %v2032 = vadd.f32 %v1871, %v2031
    %2033 = vmatprep.mubr.f32.mxu0 %v1564
    %2034 = vmatmul.mubr.f32.gmra.mrb[0].mxu0 %v1548
    %v2035 = vpop.f32.mrb[0].mxu0
    %v2036 = vadd.f32 %v1875, %v2035
    %v2037 = vpop.f32.mrb[0].mxu0
    %v2038 = vadd.f32 %v1877, %v2037
    %2039 = vmatprep.mubr.f32.mxu0 %v1565
    %2040 = vmatmul.mubr.f32.gmra.mrb[0].mxu0 %v1549
    %v2041 = vpop.f32.mrb[0].mxu0
    %v2042 = vadd.f32 %v1881, %v2041
    %v2043 = vpop.f32.mrb[0].mxu0
    %v2044 = vadd.f32 %v1883, %v2043
    %2045 = vmatprep.mubr.f32.mxu0 %v1566
    %2046 = vmatmul.mubr.f32.gmra.mrb[0].mxu0 %v1550
    %v2047 = vpop.f32.mrb[0].mxu0
    %v2048 = vadd.f32 %v1887, %v2047
    %v2049 = vpop.f32.mrb[0].mxu0
    %v2050 = vadd.f32 %v1889, %v2049
    %2051 = vmatprep.mubr.f32.mxu0 %v1567
    %2052 = vmatmul.mubr.f32.gmra.mrb[0].mxu0 %v1551
    %v2053 = vpop.f32.mrb[0].mxu0
    %v2054 = vadd.f32 %v1893, %v2053
    %v2055 = vpop.f32.mrb[0].mxu0
    %v2056 = vadd.f32 %v1895, %v2055
    %2057 = vmatprep.mubr.f32.mxu0 %v1568
    %2058 = vmatmul.mubr.f32.gmra.mrb[0].mxu0 %v1552
    %v2059 = vpop.f32.mrb[0].mxu0
    %v2060 = vadd.f32 %v1899, %v2059
    %v2061 = vpop.f32.mrb[0].mxu0
    %v2062 = vadd.f32 %v1901, %v2061
    %2063 = vmatprep.mubr.f32.mxu0 %v1569
    %2064 = vmatmul.mubr.f32.gmra.mrb[0].mxu0 %v1553
    %v2065 = vpop.f32.mrb[0].mxu0
    %v2066 = vadd.f32 %v1905, %v2065
    %v2067 = vpop.f32.mrb[0].mxu0
    %v2068 = vadd.f32 %v1907, %v2067
    %2069 = vmatprep.mubr.f32.mxu0 %v1570
    %2070 = vmatmul.mubr.f32.gmra.mrb[0].mxu0 %v1554
    %v2071 = vpop.f32.mrb[0].mxu0
    %v2072 = vadd.f32 %v1911, %v2071
    %v2073 = vpop.f32.mrb[0].mxu0
    %v2074 = vadd.f32 %v1913, %v2073
    %2075 = vmatprep.mubr.f32.mxu0 %v1571
    %2076 = vmatmul.mubr.f32.gmra.mrb[0].mxu0 %v1555
    %v2077 = vpop.f32.mrb[0].mxu0
    %v2078 = vadd.f32 %v1917, %v2077
    %v2079 = vpop.f32.mrb[0].mxu0
    %v2080 = vadd.f32 %v1919, %v2079
    %2081 = vdwg.mxu0
    %2082 = vmatprep.subr.mxu0 %v1717
    %2083 = vmatpush1.msra.mxu0 %v1716
    %2084 = vmatprep.subr.mxu0 %v1719
    %2085 = vmatpush1.msra.mxu0 %v1718
    %2086 = vmatprep.subr.mxu0 %v1721
    %2087 = vmatpush1.msra.mxu0 %v1720
    %2088 = vmatprep.subr.mxu0 %v1723
    %2089 = vmatpush1.msra.mxu0 %v1722
    %2090 = vmatprep.subr.mxu0 %v1725
    %2091 = vmatpush1.msra.mxu0 %v1724
    %2092 = vmatprep.subr.mxu0 %v1727
    %2093 = vmatpush1.msra.mxu0 %v1726
    %2094 = vmatprep.subr.mxu0 %v1729
    %2095 = vmatpush1.msra.mxu0 %v1728
    %2096 = vmatprep.subr.mxu0 %v1731
    %2097 = vmatpush1.msra.mxu0 %v1730
    %2098 = vmatprep.subr.mxu0 %v1733
    %2099 = vmatpush1.msra.mxu0 %v1732
    %2100 = vmatprep.subr.mxu0 %v1735
    %2101 = vmatpush1.msra.mxu0 %v1734
    %2102 = vmatprep.subr.mxu0 %v1737
    %2103 = vmatpush1.msra.mxu0 %v1736
    %2104 = vmatprep.subr.mxu0 %v1739
    %2105 = vmatpush1.msra.mxu0 %v1738
    %2106 = vmatprep.subr.mxu0 %v1741
    %2107 = vmatpush1.msra.mxu0 %v1740
    %2108 = vmatprep.subr.mxu0 %v1743
    %2109 = vmatpush1.msra.mxu0 %v1742
    %2110 = vmatprep.subr.mxu0 %v1745
    %2111 = vmatpush1.msra.mxu0 %v1744
    %2112 = vmatprep.subr.mxu0 %v1747
    %2113 = vmatpush1.msra.mxu0 %v1746
    %2114 = vmatprep.subr.mxu0 0.0
    %2115 = vmatpush1.msra.mxu0 0.0
    %2116 = vmatprep.subr.mxu0 0.0
    %2117 = vmatpush1.msra.mxu0 0.0
    %2118 = vmatprep.subr.mxu0 0.0
    %2119 = vmatpush1.msra.mxu0 0.0
    %2120 = vmatprep.subr.mxu0 0.0
    %2121 = vmatpush1.msra.mxu0 0.0
    %2122 = vmatprep.subr.mxu0 0.0
    %2123 = vmatpush1.msra.mxu0 0.0
    %2124 = vmatprep.subr.mxu0 0.0
    %2125 = vmatpush1.msra.mxu0 0.0
    %2126 = vmatprep.subr.mxu0 0.0
    %2127 = vmatpush1.msra.mxu0 0.0
    %2128 = vmatprep.subr.mxu0 0.0
    %2129 = vmatpush1.msra.mxu0 0.0
    %2130 = vmatprep.subr.mxu0 0.0
    %2131 = vmatpush1.msra.mxu0 0.0
    %2132 = vmatprep.subr.mxu0 0.0
    %2133 = vmatpush1.msra.mxu0 0.0
    %2134 = vmatprep.subr.mxu0 0.0
    %2135 = vmatpush1.msra.mxu0 0.0
    %2136 = vmatprep.subr.mxu0 0.0
    %2137 = vmatpush1.msra.mxu0 0.0
    %2138 = vmatprep.subr.mxu0 0.0
    %2139 = vmatpush1.msra.mxu0 0.0
    %2140 = vmatprep.subr.mxu0 0.0
    %2141 = vmatpush1.msra.mxu0 0.0
    %2142 = vmatprep.subr.mxu0 0.0
    %2143 = vmatpush1.msra.mxu0 0.0
    %2144 = vmatprep.subr.mxu0 0.0
    %2145 = vmatpush1.msra.mxu0 0.0
    %2146 = vmatprep.mubr.f32.mxu0 0.0
    %2147 = vmatmul.mubr.f32.gmra.mrb[0].mxu0 %v1572
    %v2148 = vpop.f32.mrb[0].mxu0
    %v2149 = vadd.f32 %v1988, %v2148
    %v2150 = vpop.f32.mrb[0].mxu0
    %v2151 = vadd.f32 %v1990, %v2150
    %2152 = vmatprep.mubr.f32.mxu0 0.0
    %2153 = vmatmul.mubr.f32.gmra.mrb[0].mxu0 %v1573
    %v2154 = vpop.f32.mrb[0].mxu0
    %v2155 = vadd.f32 %v1994, %v2154
    %v2156 = vpop.f32.mrb[0].mxu0
    %v2157 = vadd.f32 %v1996, %v2156
    %2158 = vmatprep.mubr.f32.mxu0 0.0
    %2159 = vmatmul.mubr.f32.gmra.mrb[0].mxu0 %v1574
    %v2160 = vpop.f32.mrb[0].mxu0
    %v2161 = vadd.f32 %v2000, %v2160
    %v2162 = vpop.f32.mrb[0].mxu0
    %v2163 = vadd.f32 %v2002, %v2162
    %2164 = vmatprep.mubr.f32.mxu0 0.0
    %2165 = vmatmul.mubr.f32.gmra.mrb[0].mxu0 %v1575
    %v2166 = vpop.f32.mrb[0].mxu0
    %v2167 = vadd.f32 %v2006, %v2166
    %v2168 = vpop.f32.mrb[0].mxu0
    %v2169 = vadd.f32 %v2008, %v2168
    %2170 = vmatprep.mubr.f32.mxu0 0.0
    %2171 = vmatmul.mubr.f32.gmra.mrb[0].mxu0 %v1576
    %v2172 = vpop.f32.mrb[0].mxu0
    %v2173 = vadd.f32 %v2012, %v2172
    %v2174 = vpop.f32.mrb[0].mxu0
    %v2175 = vadd.f32 %v2014, %v2174
    %2176 = vmatprep.mubr.f32.mxu0 0.0
    %2177 = vmatmul.mubr.f32.gmra.mrb[0].mxu0 %v1577
    %v2178 = vpop.f32.mrb[0].mxu0
    %v2179 = vadd.f32 %v2018, %v2178
    %v2180 = vpop.f32.mrb[0].mxu0
    %v2181 = vadd.f32 %v2020, %v2180
    %2182 = vmatprep.mubr.f32.mxu0 0.0
    %2183 = vmatmul.mubr.f32.gmra.mrb[0].mxu0 %v1578
    %v2184 = vpop.f32.mrb[0].mxu0
    %v2185 = vadd.f32 %v2024, %v2184
    %v2186 = vpop.f32.mrb[0].mxu0
    %v2187 = vadd.f32 %v2026, %v2186
    %2188 = vmatprep.mubr.f32.mxu0 0.0
    %2189 = vmatmul.mubr.f32.gmra.mrb[0].mxu0 %v1579
    %v2190 = vpop.f32.mrb[0].mxu0
    %v2191 = vadd.f32 %v2030, %v2190
    %v2192 = vpop.f32.mrb[0].mxu0
    %v2193 = vadd.f32 %v2032, %v2192
    %2194 = vmatprep.mubr.f32.mxu0 0.0
    %2195 = vmatmul.mubr.f32.gmra.mrb[0].mxu0 %v1580
    %v2196 = vpop.f32.mrb[0].mxu0
    %v2197 = vadd.f32 %v2036, %v2196
    %v2198 = vpop.f32.mrb[0].mxu0
    %v2199 = vadd.f32 %v2038, %v2198
    %2200 = vmatprep.mubr.f32.mxu0 0.0
    %2201 = vmatmul.mubr.f32.gmra.mrb[0].mxu0 %v1581
    %v2202 = vpop.f32.mrb[0].mxu0
    %v2203 = vadd.f32 %v2042, %v2202
    %v2204 = vpop.f32.mrb[0].mxu0
    %v2205 = vadd.f32 %v2044, %v2204
    %2206 = vmatprep.mubr.f32.mxu0 0.0
    %2207 = vmatmul.mubr.f32.gmra.mrb[0].mxu0 %v1582
    %v2208 = vpop.f32.mrb[0].mxu0
    %v2209 = vadd.f32 %v2048, %v2208
    %v2210 = vpop.f32.mrb[0].mxu0
    %v2211 = vadd.f32 %v2050, %v2210
    %2212 = vmatprep.mubr.f32.mxu0 0.0
    %2213 = vmatmul.mubr.f32.gmra.mrb[0].mxu0 %v1583
    %v2214 = vpop.f32.mrb[0].mxu0
    %v2215 = vadd.f32 %v2054, %v2214
    %v2216 = vpop.f32.mrb[0].mxu0
    %v2217 = vadd.f32 %v2056, %v2216
    %2218 = vmatprep.mubr.f32.mxu0 0.0
    %2219 = vmatmul.mubr.f32.gmra.mrb[0].mxu0 %v1584
    %v2220 = vpop.f32.mrb[0].mxu0
    %v2221 = vadd.f32 %v2060, %v2220
    %v2222 = vpop.f32.mrb[0].mxu0
    %v2223 = vadd.f32 %v2062, %v2222
    %2224 = vmatprep.mubr.f32.mxu0 0.0
    %2225 = vmatmul.mubr.f32.gmra.mrb[0].mxu0 %v1585
    %v2226 = vpop.f32.mrb[0].mxu0
    %v2227 = vadd.f32 %v2066, %v2226
    %v2228 = vpop.f32.mrb[0].mxu0
    %v2229 = vadd.f32 %v2068, %v2228
    %2230 = vmatprep.mubr.f32.mxu0 0.0
    %2231 = vmatmul.mubr.f32.gmra.mrb[0].mxu0 %v1586
    %v2232 = vpop.f32.mrb[0].mxu0
    %v2233 = vadd.f32 %v2072, %v2232
    %v2234 = vpop.f32.mrb[0].mxu0
    %v2235 = vadd.f32 %v2074, %v2234
    %2236 = vmatprep.mubr.f32.mxu0 0.0
    %2237 = vmatmul.mubr.f32.gmra.mrb[0].mxu0 %v1587
    %v2238 = vpop.f32.mrb[0].mxu0
    %v2239 = vadd.f32 %v2078, %v2238
    %v2240 = vpop.f32.mrb[0].mxu0
    %v2241 = vadd.f32 %v2080, %v2240
    %2242 = vdwg.mxu0
    %v2243 = vmax.f32 %v2149, 0.0
    %v2244 = vmax.f32 %v2151, 0.0
    %v2245 = vmax.f32 %v2155, 0.0
    %v2246 = vmax.f32 %v2157, 0.0
    %v2247 = vmax.f32 %v2161, 0.0
    %v2248 = vmax.f32 %v2163, 0.0
    %v2249 = vmax.f32 %v2167, 0.0
    %v2250 = vmax.f32 %v2169, 0.0
    %v2251 = vmax.f32 %v2173, 0.0
    %v2252 = vmax.f32 %v2175, 0.0
    %v2253 = vmax.f32 %v2179, 0.0
    %v2254 = vmax.f32 %v2181, 0.0
    %v2255 = vmax.f32 %v2185, 0.0
    %v2256 = vmax.f32 %v2187, 0.0
    %v2257 = vmax.f32 %v2191, 0.0
    %v2258 = vmax.f32 %v2193, 0.0
    %v2259 = vmax.f32 %v2197, 0.0
    %v2260 = vmax.f32 %v2199, 0.0
    %v2261 = vmax.f32 %v2203, 0.0
    %v2262 = vmax.f32 %v2205, 0.0
    %v2263 = vmax.f32 %v2209, 0.0
    %v2264 = vmax.f32 %v2211, 0.0
    %v2265 = vmax.f32 %v2215, 0.0
    %v2266 = vmax.f32 %v2217, 0.0
    %v2267 = vmax.f32 %v2221, 0.0
    %v2268 = vmax.f32 %v2223, 0.0
    %v2269 = vmax.f32 %v2227, 0.0
    %v2270 = vmax.f32 %v2229, 0.0
    %v2271 = vmax.f32 %v2233, 0.0
    %v2272 = vmax.f32 %v2235, 0.0
    %v2273 = vmax.f32 %v2239, 0.0
    %v2274 = vmax.f32 %v2241, 0.0
    %v2275 = vmax.f32 %v2243, %v2244
    %v2276 = vmax.f32 %v2245, %v2246
    %v2277 = vmax.f32 %v2247, %v2248
    %v2278 = vmax.f32 %v2249, %v2250
    %v2279 = vmax.f32 %v2251, %v2252
    %v2280 = vmax.f32 %v2253, %v2254
    %v2281 = vmax.f32 %v2255, %v2256
    %v2282 = vmax.f32 %v2257, %v2258
    %v2283 = vmax.f32 %v2259, %v2260
    %v2284 = vmax.f32 %v2261, %v2262
    %v2285 = vmax.f32 %v2263, %v2264
    %v2286 = vmax.f32 %v2265, %v2266
    %v2287 = vmax.f32 %v2267, %v2268
    %v2288 = vmax.f32 %v2269, %v2270
    %v2289 = vmax.f32 %v2271, %v2272
    %v2290 = vmax.f32 %v2273, %v2274
    %2291 = vst [vmem:[#allocation5] sm:$0xff] %v2275
    %2292 = vst [vmem:[#allocation5 + $0x8] sm:$0xff] %v2276
    %2293 = vst [vmem:[#allocation5 + $0x10] sm:$0xff] %v2277
    %2294 = vst [vmem:[#allocation5 + $0x18] sm:$0xff] %v2278
    %2295 = vst [vmem:[#allocation5 + $0x20] sm:$0xff] %v2279
    %2296 = vst [vmem:[#allocation5 + $0x28] sm:$0xff] %v2280
    %2297 = vst [vmem:[#allocation5 + $0x30] sm:$0xff] %v2281
    %2298 = vst [vmem:[#allocation5 + $0x38] sm:$0xff] %v2282
    %2299 = vst [vmem:[#allocation5 + $0x40] sm:$0xff] %v2283
    %2300 = vst [vmem:[#allocation5 + $0x48] sm:$0xff] %v2284
    %2301 = vst [vmem:[#allocation5 + $0x50] sm:$0xff] %v2285
    %2302 = vst [vmem:[#allocation5 + $0x58] sm:$0xff] %v2286
    %2303 = vst [vmem:[#allocation5 + $0x60] sm:$0xff] %v2287
    %2304 = vst [vmem:[#allocation5 + $0x68] sm:$0xff] %v2288
    %2305 = vst [vmem:[#allocation5 + $0x70] sm:$0xff] %v2289
    %2306 = vst [vmem:[#allocation5 + $0x78] sm:$0xff] %v2290
    %v2307 = vld [vmem:[#allocation5] ss:$16 sm:$0x3]
    %v2308 = vld [vmem:[#allocation5] ss:$16 sm:$0xc]
    %v2309 = vor.u32 %v2307, %v2308
    %v2310 = vld [vmem:[#allocation5] ss:$16 sm:$0x30]
    %v2311 = vor.u32 %v2309, %v2310
    %v2312 = vld [vmem:[#allocation5] ss:$16 sm:$0xc0]
    %v2313 = vor.u32 %v2311, %v2312
    %s2314 = scalar_lea.vmem [#allocation5], 1
    %v2315 = vld [vmem:[%s2314] ss:$16 sm:$0x3]
    %v2316 = vld [vmem:[%s2314] ss:$16 sm:$0xc]
    %v2317 = vor.u32 %v2315, %v2316
    %v2318 = vld [vmem:[%s2314] ss:$16 sm:$0x30]
    %v2319 = vor.u32 %v2317, %v2318
    %v2320 = vld [vmem:[%s2314] ss:$16 sm:$0xc0]
    %v2321 = vor.u32 %v2319, %v2320
    %v2322 = vmax.f32 %v2313, %v2321
    %s2323 = scalar_lea.vmem [#allocation5], 2
    %v2324 = vld [vmem:[%s2323] ss:$16 sm:$0x3]
    %v2325 = vld [vmem:[%s2323] ss:$16 sm:$0xc]
    %v2326 = vor.u32 %v2324, %v2325
    %v2327 = vld [vmem:[%s2323] ss:$16 sm:$0x30]
    %v2328 = vor.u32 %v2326, %v2327
    %v2329 = vld [vmem:[%s2323] ss:$16 sm:$0xc0]
    %v2330 = vor.u32 %v2328, %v2329
    %s2331 = scalar_lea.vmem [#allocation5], 3
    %v2332 = vld [vmem:[%s2331] ss:$16 sm:$0x3]
    %v2333 = vld [vmem:[%s2331] ss:$16 sm:$0xc]
    %v2334 = vor.u32 %v2332, %v2333
    %v2335 = vld [vmem:[%s2331] ss:$16 sm:$0x30]
    %v2336 = vor.u32 %v2334, %v2335
    %v2337 = vld [vmem:[%s2331] ss:$16 sm:$0xc0]
    %v2338 = vor.u32 %v2336, %v2337
    %v2339 = vmax.f32 %v2330, %v2338
    %s2340 = scalar_lea.vmem [#allocation5], 4
    %v2341 = vld [vmem:[%s2340] ss:$16 sm:$0x3]
    %v2342 = vld [vmem:[%s2340] ss:$16 sm:$0xc]
    %v2343 = vor.u32 %v2341, %v2342
    %v2344 = vld [vmem:[%s2340] ss:$16 sm:$0x30]
    %v2345 = vor.u32 %v2343, %v2344
    %v2346 = vld [vmem:[%s2340] ss:$16 sm:$0xc0]
    %v2347 = vor.u32 %v2345, %v2346
    %s2348 = scalar_lea.vmem [#allocation5], 5
    %v2349 = vld [vmem:[%s2348] ss:$16 sm:$0x3]
    %v2350 = vld [vmem:[%s2348] ss:$16 sm:$0xc]
    %v2351 = vor.u32 %v2349, %v2350
    %v2352 = vld [vmem:[%s2348] ss:$16 sm:$0x30]
    %v2353 = vor.u32 %v2351, %v2352
    %v2354 = vld [vmem:[%s2348] ss:$16 sm:$0xc0]
    %v2355 = vor.u32 %v2353, %v2354
    %v2356 = vmax.f32 %v2347, %v2355
    %s2357 = scalar_lea.vmem [#allocation5], 6
    %v2358 = vld [vmem:[%s2357] ss:$16 sm:$0x3]
    %v2359 = vld [vmem:[%s2357] ss:$16 sm:$0xc]
    %v2360 = vor.u32 %v2358, %v2359
    %v2361 = vld [vmem:[%s2357] ss:$16 sm:$0x30]
    %v2362 = vor.u32 %v2360, %v2361
    %v2363 = vld [vmem:[%s2357] ss:$16 sm:$0xc0]
    %v2364 = vor.u32 %v2362, %v2363
    %s2365 = scalar_lea.vmem [#allocation5], 7
    %v2366 = vld [vmem:[%s2365] ss:$16 sm:$0x3]
    %v2367 = vld [vmem:[%s2365] ss:$16 sm:$0xc]
    %v2368 = vor.u32 %v2366, %v2367
    %v2369 = vld [vmem:[%s2365] ss:$16 sm:$0x30]
    %v2370 = vor.u32 %v2368, %v2369
    %v2371 = vld [vmem:[%s2365] ss:$16 sm:$0xc0]
    %v2372 = vor.u32 %v2370, %v2371
    %v2373 = vmax.f32 %v2364, %v2372
    %s2374 = scalar_lea.vmem [#allocation5], 8
    %v2375 = vld [vmem:[%s2374] ss:$16 sm:$0x3]
    %v2376 = vld [vmem:[%s2374] ss:$16 sm:$0xc]
    %v2377 = vor.u32 %v2375, %v2376
    %v2378 = vld [vmem:[%s2374] ss:$16 sm:$0x30]
    %v2379 = vor.u32 %v2377, %v2378
    %v2380 = vld [vmem:[%s2374] ss:$16 sm:$0xc0]
    %v2381 = vor.u32 %v2379, %v2380
    %s2382 = scalar_lea.vmem [#allocation5], 9
    %v2383 = vld [vmem:[%s2382] ss:$16 sm:$0x3]
    %v2384 = vld [vmem:[%s2382] ss:$16 sm:$0xc]
    %v2385 = vor.u32 %v2383, %v2384
    %v2386 = vld [vmem:[%s2382] ss:$16 sm:$0x30]
    %v2387 = vor.u32 %v2385, %v2386
    %v2388 = vld [vmem:[%s2382] ss:$16 sm:$0xc0]
    %v2389 = vor.u32 %v2387, %v2388
    %v2390 = vmax.f32 %v2381, %v2389
    %v2391 = vld [vmem:[#allocation10] sm:$0xff]
    %v2392 = vld [vmem:[#allocation10 + $0x8] sm:$0xff]
    %v2393 = vld [vmem:[#allocation10 + $0x10] sm:$0xff]
    %v2394 = vld [vmem:[#allocation10 + $0x18] sm:$0xff]
    %v2395 = vld [vmem:[#allocation10 + $0x20] sm:$0xff]
    %v2396 = vld [vmem:[#allocation10 + $0x28] sm:$0xff]
    %v2397 = vld [vmem:[#allocation10 + $0x30] sm:$0xff]
    %v2398 = vld [vmem:[#allocation10 + $0x38] sm:$0xff]
    %v2399 = vld [vmem:[#allocation10 + $0x40] sm:$0xff]
    %v2400 = vld [vmem:[#allocation10 + $0x48] sm:$0xff]
    %v2401 = vld [vmem:[#allocation10 + $0x50] sm:$0xff]
    %v2402 = vld [vmem:[#allocation10 + $0x58] sm:$0xff]
    %v2403 = vld [vmem:[#allocation10 + $0x60] sm:$0xff]
    %v2404 = vld [vmem:[#allocation10 + $0x68] sm:$0xff]
    %v2405 = vld [vmem:[#allocation10 + $0x70] sm:$0xff]
    %v2406 = vld [vmem:[#allocation10 + $0x78] sm:$0xff]
    %v2407 = vld [vmem:[#allocation10 + $0x80] sm:$0xff]
    %v2408 = vld [vmem:[#allocation10 + $0x88] sm:$0xff]
    %v2409 = vld [vmem:[#allocation10 + $0x90] sm:$0xff]
    %v2410 = vld [vmem:[#allocation10 + $0x98] sm:$0xff]
    %v2411 = vld [vmem:[#allocation10 + $0xa0] sm:$0xff]
    %v2412 = vld [vmem:[#allocation10 + $0xa8] sm:$0xff]
    %v2413 = vld [vmem:[#allocation10 + $0xb0] sm:$0xff]
    %v2414 = vld [vmem:[#allocation10 + $0xb8] sm:$0xff]
    %v2415 = vld [vmem:[#allocation10 + $0xc0] sm:$0xff]
    %v2416 = vld [vmem:[#allocation10 + $0xc8] sm:$0xff]
    %v2417 = vld [vmem:[#allocation10 + $0xd0] sm:$0xff]
    %v2418 = vld [vmem:[#allocation10 + $0xd8] sm:$0xff]
    %v2419 = vld [vmem:[#allocation10 + $0xe0] sm:$0xff]
    %v2420 = vld [vmem:[#allocation10 + $0xe8] sm:$0xff]
    %v2421 = vld [vmem:[#allocation10 + $0xf0] sm:$0xff]
    %v2422 = vld [vmem:[#allocation10 + $0xf8] sm:$0xff]
    %v2423 = vld [vmem:[#allocation10 + $0x100] sm:$0xff]
    %v2424 = vld [vmem:[#allocation10 + $0x108] sm:$0xff]
    %v2425 = vld [vmem:[#allocation10 + $0x110] sm:$0xff]
    %v2426 = vld [vmem:[#allocation10 + $0x118] sm:$0xff]
    %v2427 = vld [vmem:[#allocation10 + $0x120] sm:$0xff]
    %v2428 = vld [vmem:[#allocation10 + $0x128] sm:$0xff]
    %v2429 = vld [vmem:[#allocation10 + $0x130] sm:$0xff]
    %v2430 = vld [vmem:[#allocation10 + $0x138] sm:$0xff]
    %v2431 = vld [vmem:[#allocation10 + $0x140] sm:$0xff]
    %v2432 = vld [vmem:[#allocation10 + $0x148] sm:$0xff]
    %v2433 = vld [vmem:[#allocation10 + $0x150] sm:$0xff]
    %v2434 = vld [vmem:[#allocation10 + $0x158] sm:$0xff]
    %v2435 = vld [vmem:[#allocation10 + $0x160] sm:$0xff]
    %v2436 = vld [vmem:[#allocation10 + $0x168] sm:$0xff]
    %v2437 = vld [vmem:[#allocation10 + $0x170] sm:$0xff]
    %v2438 = vld [vmem:[#allocation10 + $0x178] sm:$0xff]
    %v2439 = vld [vmem:[#allocation10 + $0x180] sm:$0xff]
    %v2440 = vld [vmem:[#allocation10 + $0x188] sm:$0xff]
    %v2441 = vld [vmem:[#allocation10 + $0x190] sm:$0xff]
    %v2442 = vld [vmem:[#allocation10 + $0x198] sm:$0xff]
    %v2443 = vld [vmem:[#allocation10 + $0x1a0] sm:$0xff]
    %v2444 = vld [vmem:[#allocation10 + $0x1a8] sm:$0xff]
    %v2445 = vld [vmem:[#allocation10 + $0x1b0] sm:$0xff]
    %v2446 = vld [vmem:[#allocation10 + $0x1b8] sm:$0xff]
    %v2447 = vld [vmem:[#allocation10 + $0x1c0] sm:$0xff]
    %v2448 = vld [vmem:[#allocation10 + $0x1c8] sm:$0xff]
    %v2449 = vld [vmem:[#allocation10 + $0x1d0] sm:$0xff]
    %v2450 = vld [vmem:[#allocation10 + $0x1d8] sm:$0xff]
    %v2451 = vld [vmem:[#allocation10 + $0x1e0] sm:$0xff]
    %v2452 = vld [vmem:[#allocation10 + $0x1e8] sm:$0xff]
    %v2453 = vld [vmem:[#allocation10 + $0x1f0] sm:$0xff]
    %v2454 = vld [vmem:[#allocation10 + $0x1f8] sm:$0xff]
    %v2455 = vld [vmem:[#allocation10 + $0x200] sm:$0xff]
    %v2456 = vld [vmem:[#allocation10 + $0x208] sm:$0xff]
    %v2457 = vld [vmem:[#allocation10 + $0x210] sm:$0xff]
    %v2458 = vld [vmem:[#allocation10 + $0x218] sm:$0xff]
    %v2459 = vld [vmem:[#allocation10 + $0x220] sm:$0xff]
    %v2460 = vld [vmem:[#allocation10 + $0x228] sm:$0xff]
    %v2461 = vld [vmem:[#allocation10 + $0x230] sm:$0xff]
    %v2462 = vld [vmem:[#allocation10 + $0x238] sm:$0xff]
    %v2463 = vld [vmem:[#allocation10 + $0x240] sm:$0xff]
    %v2464 = vld [vmem:[#allocation10 + $0x248] sm:$0xff]
    %v2465 = vld [vmem:[#allocation10 + $0x250] sm:$0xff]
    %v2466 = vld [vmem:[#allocation10 + $0x258] sm:$0xff]
    %v2467 = vld [vmem:[#allocation10 + $0x260] sm:$0xff]
    %v2468 = vld [vmem:[#allocation10 + $0x268] sm:$0xff]
    %v2469 = vld [vmem:[#allocation10 + $0x270] sm:$0xff]
    %v2470 = vld [vmem:[#allocation10 + $0x278] sm:$0xff]
    %v2471 = vld [vmem:[%s6] sm:$0x1]
    %v2473 = vlaneseq
    %v2474 = vshrl.u32 %v2473, 7
    %v2475 = vsub.s32 0, %v2474
    %v2476 = vrot.slane %v2471, %v2475
    %2478 = vmatprep.subr.mxu0 0.0
    %2479 = vmatpush1.msra.mxu0 %v2391
    %2480 = vmatprep.subr.mxu0 0.0
    %2481 = vmatpush1.msra.mxu0 %v2392
    %2482 = vmatprep.subr.mxu0 0.0
    %2483 = vmatpush1.msra.mxu0 %v2393
    %2484 = vmatprep.subr.mxu0 0.0
    %2485 = vmatpush1.msra.mxu0 %v2394
    %2486 = vmatprep.subr.mxu0 0.0
    %2487 = vmatpush1.msra.mxu0 %v2395
    %2488 = vmatprep.subr.mxu0 0.0
    %2489 = vmatpush1.msra.mxu0 %v2396
    %2490 = vmatprep.subr.mxu0 0.0
    %2491 = vmatpush1.msra.mxu0 %v2397
    %2492 = vmatprep.subr.mxu0 0.0
    %2493 = vmatpush1.msra.mxu0 %v2398
    %2494 = vmatprep.subr.mxu0 0.0
    %2495 = vmatpush1.msra.mxu0 %v2399
    %2496 = vmatprep.subr.mxu0 0.0
    %2497 = vmatpush1.msra.mxu0 %v2400
    %2498 = vmatprep.subr.mxu0 0.0
    %2499 = vmatpush1.msra.mxu0 %v2401
    %2500 = vmatprep.subr.mxu0 0.0
    %2501 = vmatpush1.msra.mxu0 %v2402
    %2502 = vmatprep.subr.mxu0 0.0
    %2503 = vmatpush1.msra.mxu0 %v2403
    %2504 = vmatprep.subr.mxu0 0.0
    %2505 = vmatpush1.msra.mxu0 %v2404
    %2506 = vmatprep.subr.mxu0 0.0
    %2507 = vmatpush1.msra.mxu0 %v2405
    %2508 = vmatprep.subr.mxu0 0.0
    %2509 = vmatpush1.msra.mxu0 %v2406
    %2510 = vmatprep.subr.mxu0 0.0
    %2511 = vmatpush1.msra.mxu0 %v2407
    %2512 = vmatprep.subr.mxu0 0.0
    %2513 = vmatpush1.msra.mxu0 %v2408
    %2514 = vmatprep.subr.mxu0 0.0
    %2515 = vmatpush1.msra.mxu0 %v2409
    %2516 = vmatprep.subr.mxu0 0.0
    %2517 = vmatpush1.msra.mxu0 %v2410
    %2518 = vmatprep.subr.mxu0 0.0
    %2519 = vmatpush1.msra.mxu0 %v2411
    %2520 = vmatprep.subr.mxu0 0.0
    %2521 = vmatpush1.msra.mxu0 %v2412
    %2522 = vmatprep.subr.mxu0 0.0
    %2523 = vmatpush1.msra.mxu0 %v2413
    %2524 = vmatprep.subr.mxu0 0.0
    %2525 = vmatpush1.msra.mxu0 %v2414
    %2526 = vmatprep.subr.mxu0 0.0
    %2527 = vmatpush1.msra.mxu0 %v2415
    %2528 = vmatprep.subr.mxu0 0.0
    %2529 = vmatpush1.msra.mxu0 %v2416
    %2530 = vmatprep.subr.mxu0 0.0
    %2531 = vmatpush1.msra.mxu0 %v2417
    %2532 = vmatprep.subr.mxu0 0.0
    %2533 = vmatpush1.msra.mxu0 %v2418
    %2534 = vmatprep.subr.mxu0 0.0
    %2535 = vmatpush1.msra.mxu0 %v2419
    %2536 = vmatprep.subr.mxu0 0.0
    %2537 = vmatpush1.msra.mxu0 %v2420
    %2538 = vmatprep.subr.mxu0 0.0
    %2539 = vmatpush1.msra.mxu0 %v2421
    %2540 = vmatprep.subr.mxu0 0.0
    %2541 = vmatpush1.msra.mxu0 %v2422
    %2542 = vmatprep.mubr.f32.mxu0 %v2339
    %2543 = vmatmul.mubr.f32.gmra.mrb[0].mxu0 %v2322
    %v2544 = vpop.f32.mrb[0].mxu0
    %v2545 = vadd.f32 %v2476, %v2544
    %v2546 = vpop.f32.mrb[0].mxu0
    %2547 = vdwg.mxu0
    %2548 = vmatprep.subr.mxu0 0.0
    %2549 = vmatpush1.msra.mxu0 %v2423
    %2550 = vmatprep.subr.mxu0 0.0
    %2551 = vmatpush1.msra.mxu0 %v2424
    %2552 = vmatprep.subr.mxu0 0.0
    %2553 = vmatpush1.msra.mxu0 %v2425
    %2554 = vmatprep.subr.mxu0 0.0
    %2555 = vmatpush1.msra.mxu0 %v2426
    %2556 = vmatprep.subr.mxu0 0.0
    %2557 = vmatpush1.msra.mxu0 %v2427
    %2558 = vmatprep.subr.mxu0 0.0
    %2559 = vmatpush1.msra.mxu0 %v2428
    %2560 = vmatprep.subr.mxu0 0.0
    %2561 = vmatpush1.msra.mxu0 %v2429
    %2562 = vmatprep.subr.mxu0 0.0
    %2563 = vmatpush1.msra.mxu0 %v2430
    %2564 = vmatprep.subr.mxu0 0.0
    %2565 = vmatpush1.msra.mxu0 %v2431
    %2566 = vmatprep.subr.mxu0 0.0
    %2567 = vmatpush1.msra.mxu0 %v2432
    %2568 = vmatprep.subr.mxu0 0.0
    %2569 = vmatpush1.msra.mxu0 %v2433
    %2570 = vmatprep.subr.mxu0 0.0
    %2571 = vmatpush1.msra.mxu0 %v2434
    %2572 = vmatprep.subr.mxu0 0.0
    %2573 = vmatpush1.msra.mxu0 %v2435
    %2574 = vmatprep.subr.mxu0 0.0
    %2575 = vmatpush1.msra.mxu0 %v2436
    %2576 = vmatprep.subr.mxu0 0.0
    %2577 = vmatpush1.msra.mxu0 %v2437
    %2578 = vmatprep.subr.mxu0 0.0
    %2579 = vmatpush1.msra.mxu0 %v2438
    %2580 = vmatprep.subr.mxu0 0.0
    %2581 = vmatpush1.msra.mxu0 %v2439
    %2582 = vmatprep.subr.mxu0 0.0
    %2583 = vmatpush1.msra.mxu0 %v2440
    %2584 = vmatprep.subr.mxu0 0.0
    %2585 = vmatpush1.msra.mxu0 %v2441
    %2586 = vmatprep.subr.mxu0 0.0
    %2587 = vmatpush1.msra.mxu0 %v2442
    %2588 = vmatprep.subr.mxu0 0.0
    %2589 = vmatpush1.msra.mxu0 %v2443
    %2590 = vmatprep.subr.mxu0 0.0
    %2591 = vmatpush1.msra.mxu0 %v2444
    %2592 = vmatprep.subr.mxu0 0.0
    %2593 = vmatpush1.msra.mxu0 %v2445
    %2594 = vmatprep.subr.mxu0 0.0
    %2595 = vmatpush1.msra.mxu0 %v2446
    %2596 = vmatprep.subr.mxu0 0.0
    %2597 = vmatpush1.msra.mxu0 %v2447
    %2598 = vmatprep.subr.mxu0 0.0
    %2599 = vmatpush1.msra.mxu0 %v2448
    %2600 = vmatprep.subr.mxu0 0.0
    %2601 = vmatpush1.msra.mxu0 %v2449
    %2602 = vmatprep.subr.mxu0 0.0
    %2603 = vmatpush1.msra.mxu0 %v2450
    %2604 = vmatprep.subr.mxu0 0.0
    %2605 = vmatpush1.msra.mxu0 %v2451
    %2606 = vmatprep.subr.mxu0 0.0
    %2607 = vmatpush1.msra.mxu0 %v2452
    %2608 = vmatprep.subr.mxu0 0.0
    %2609 = vmatpush1.msra.mxu0 %v2453
    %2610 = vmatprep.subr.mxu0 0.0
    %2611 = vmatpush1.msra.mxu0 %v2454
    %2612 = vmatprep.mubr.f32.mxu0 %v2373
    %2613 = vmatmul.mubr.f32.gmra.mrb[0].mxu0 %v2356
    %v2614 = vpop.f32.mrb[0].mxu0
    %v2615 = vadd.f32 %v2545, %v2614
    %v2616 = vpop.f32.mrb[0].mxu0
    %2617 = vdwg.mxu0
    %2618 = vmatprep.subr.mxu0 0.0
    %2619 = vmatpush1.msra.mxu0 %v2455
    %2620 = vmatprep.subr.mxu0 0.0
    %2621 = vmatpush1.msra.mxu0 %v2456
    %2622 = vmatprep.subr.mxu0 0.0
    %2623 = vmatpush1.msra.mxu0 %v2457
    %2624 = vmatprep.subr.mxu0 0.0
    %2625 = vmatpush1.msra.mxu0 %v2458
    %2626 = vmatprep.subr.mxu0 0.0
    %2627 = vmatpush1.msra.mxu0 %v2459
    %2628 = vmatprep.subr.mxu0 0.0
    %2629 = vmatpush1.msra.mxu0 %v2460
    %2630 = vmatprep.subr.mxu0 0.0
    %2631 = vmatpush1.msra.mxu0 %v2461
    %2632 = vmatprep.subr.mxu0 0.0
    %2633 = vmatpush1.msra.mxu0 %v2462
    %2634 = vmatprep.subr.mxu0 0.0
    %2635 = vmatpush1.msra.mxu0 %v2463
    %2636 = vmatprep.subr.mxu0 0.0
    %2637 = vmatpush1.msra.mxu0 %v2464
    %2638 = vmatprep.subr.mxu0 0.0
    %2639 = vmatpush1.msra.mxu0 %v2465
    %2640 = vmatprep.subr.mxu0 0.0
    %2641 = vmatpush1.msra.mxu0 %v2466
    %2642 = vmatprep.subr.mxu0 0.0
    %2643 = vmatpush1.msra.mxu0 %v2467
    %2644 = vmatprep.subr.mxu0 0.0
    %2645 = vmatpush1.msra.mxu0 %v2468
    %2646 = vmatprep.subr.mxu0 0.0
    %2647 = vmatpush1.msra.mxu0 %v2469
    %2648 = vmatprep.subr.mxu0 0.0
    %2649 = vmatpush1.msra.mxu0 %v2470
    %2650 = vmatprep.subr.mxu0 0.0
    %2651 = vmatpush1.msra.mxu0 0.0
    %2652 = vmatprep.subr.mxu0 0.0
    %2653 = vmatpush1.msra.mxu0 0.0
    %2654 = vmatprep.subr.mxu0 0.0
    %2655 = vmatpush1.msra.mxu0 0.0
    %2656 = vmatprep.subr.mxu0 0.0
    %2657 = vmatpush1.msra.mxu0 0.0
    %2658 = vmatprep.subr.mxu0 0.0
    %2659 = vmatpush1.msra.mxu0 0.0
    %2660 = vmatprep.subr.mxu0 0.0
    %2661 = vmatpush1.msra.mxu0 0.0
    %2662 = vmatprep.subr.mxu0 0.0
    %2663 = vmatpush1.msra.mxu0 0.0
    %2664 = vmatprep.subr.mxu0 0.0
    %2665 = vmatpush1.msra.mxu0 0.0
    %2666 = vmatprep.subr.mxu0 0.0
    %2667 = vmatpush1.msra.mxu0 0.0
    %2668 = vmatprep.subr.mxu0 0.0
    %2669 = vmatpush1.msra.mxu0 0.0
    %2670 = vmatprep.subr.mxu0 0.0
    %2671 = vmatpush1.msra.mxu0 0.0
    %2672 = vmatprep.subr.mxu0 0.0
    %2673 = vmatpush1.msra.mxu0 0.0
    %2674 = vmatprep.subr.mxu0 0.0
    %2675 = vmatpush1.msra.mxu0 0.0
    %2676 = vmatprep.subr.mxu0 0.0
    %2677 = vmatpush1.msra.mxu0 0.0
    %2678 = vmatprep.subr.mxu0 0.0
    %2679 = vmatpush1.msra.mxu0 0.0
    %2680 = vmatprep.subr.mxu0 0.0
    %2681 = vmatpush1.msra.mxu0 0.0
    %2682 = vmatprep.mubr.f32.mxu0 0.0
    %2683 = vmatmul.mubr.f32.gmra.mrb[0].mxu0 %v2390
    %v2684 = vpop.f32.mrb[0].mxu0
    %v2685 = vadd.f32 %v2615, %v2684
    %v2686 = vpop.f32.mrb[0].mxu0
    %2687 = vdwg.mxu0
    %v2688 = vmax.f32 %v2685, 0.0
    %v2689 = vld [vmem:[%s7] sm:$0xff]
    %v2690 = vld [vmem:[%s7 + $0x8] sm:$0xff]
    %v2691 = vld [vmem:[%s7 + $0x10] sm:$0xff]
    %v2692 = vld [vmem:[%s7 + $0x18] sm:$0xff]
    %v2693 = vld [vmem:[%s7 + $0x20] sm:$0xff]
    %v2694 = vld [vmem:[%s7 + $0x28] sm:$0xff]
    %v2695 = vld [vmem:[%s7 + $0x30] sm:$0xff]
    %v2696 = vld [vmem:[%s7 + $0x38] sm:$0xff]
    %v2697 = vld [vmem:[%s7 + $0x40] sm:$0xff]
    %v2698 = vld [vmem:[%s7 + $0x48] sm:$0xff]
    %v2699 = vld [vmem:[%s7 + $0x50] sm:$0xff]
    %v2700 = vld [vmem:[%s7 + $0x58] sm:$0xff]
    %v2701 = vld [vmem:[%s7 + $0x60] sm:$0xff]
    %v2702 = vld [vmem:[%s7 + $0x68] sm:$0xff]
    %v2703 = vld [vmem:[%s7 + $0x70] sm:$0xff]
    %v2704 = vld [vmem:[%s7 + $0x78] sm:$0xff]
    %v2705 = vld [vmem:[%s8] sm:$0x1]
    %v2707 = vlaneseq
    %v2708 = vshrl.u32 %v2707, 7
    %v2709 = vsub.s32 0, %v2708
    %v2710 = vrot.slane %v2705, %v2709
    %2712 = vmatprep.subr.mxu0 0.0
    %2713 = vmatpush1.msra.mxu0 %v2689
    %2714 = vmatprep.subr.mxu0 0.0
    %2715 = vmatpush1.msra.mxu0 %v2690
    %2716 = vmatprep.subr.mxu0 0.0
    %2717 = vmatpush1.msra.mxu0 %v2691
    %2718 = vmatprep.subr.mxu0 0.0
    %2719 = vmatpush1.msra.mxu0 %v2692
    %2720 = vmatprep.subr.mxu0 0.0
    %2721 = vmatpush1.msra.mxu0 %v2693
    %2722 = vmatprep.subr.mxu0 0.0
    %2723 = vmatpush1.msra.mxu0 %v2694
    %2724 = vmatprep.subr.mxu0 0.0
    %2725 = vmatpush1.msra.mxu0 %v2695
    %2726 = vmatprep.subr.mxu0 0.0
    %2727 = vmatpush1.msra.mxu0 %v2696
    %2728 = vmatprep.subr.mxu0 0.0
    %2729 = vmatpush1.msra.mxu0 %v2697
    %2730 = vmatprep.subr.mxu0 0.0
    %2731 = vmatpush1.msra.mxu0 %v2698
    %2732 = vmatprep.subr.mxu0 0.0
    %2733 = vmatpush1.msra.mxu0 %v2699
    %2734 = vmatprep.subr.mxu0 0.0
    %2735 = vmatpush1.msra.mxu0 %v2700
    %2736 = vmatprep.subr.mxu0 0.0
    %2737 = vmatpush1.msra.mxu0 %v2701
    %2738 = vmatprep.subr.mxu0 0.0
    %2739 = vmatpush1.msra.mxu0 %v2702
    %2740 = vmatprep.subr.mxu0 0.0
    %2741 = vmatpush1.msra.mxu0 %v2703
    %2742 = vmatprep.subr.mxu0 0.0
    %2743 = vmatpush1.msra.mxu0 %v2704
    %2744 = vmatprep.subr.mxu0 0.0
    %2745 = vmatpush1.msra.mxu0 0.0
    %2746 = vmatprep.subr.mxu0 0.0
    %2747 = vmatpush1.msra.mxu0 0.0
    %2748 = vmatprep.subr.mxu0 0.0
    %2749 = vmatpush1.msra.mxu0 0.0
    %2750 = vmatprep.subr.mxu0 0.0
    %2751 = vmatpush1.msra.mxu0 0.0
    %2752 = vmatprep.subr.mxu0 0.0
    %2753 = vmatpush1.msra.mxu0 0.0
    %2754 = vmatprep.subr.mxu0 0.0
    %2755 = vmatpush1.msra.mxu0 0.0
    %2756 = vmatprep.subr.mxu0 0.0
    %2757 = vmatpush1.msra.mxu0 0.0
    %2758 = vmatprep.subr.mxu0 0.0
    %2759 = vmatpush1.msra.mxu0 0.0
    %2760 = vmatprep.subr.mxu0 0.0
    %2761 = vmatpush1.msra.mxu0 0.0
    %2762 = vmatprep.subr.mxu0 0.0
    %2763 = vmatpush1.msra.mxu0 0.0
    %2764 = vmatprep.subr.mxu0 0.0
    %2765 = vmatpush1.msra.mxu0 0.0
    %2766 = vmatprep.subr.mxu0 0.0
    %2767 = vmatpush1.msra.mxu0 0.0
    %2768 = vmatprep.subr.mxu0 0.0
    %2769 = vmatpush1.msra.mxu0 0.0
    %2770 = vmatprep.subr.mxu0 0.0
    %2771 = vmatpush1.msra.mxu0 0.0
    %2772 = vmatprep.subr.mxu0 0.0
    %2773 = vmatpush1.msra.mxu0 0.0
    %2774 = vmatprep.subr.mxu0 0.0
    %2775 = vmatpush1.msra.mxu0 0.0
    %2776 = vmatprep.mubr.f32.mxu0 0.0
    %2777 = vmatmul.mubr.f32.gmra.mrb[0].mxu0 %v2688
    %v2778 = vpop.f32.mrb[0].mxu0
    %v2779 = vadd.f32 %v2710, %v2778
    %v2780 = vpop.f32.mrb[0].mxu0
    %2781 = vdwg.mxu0
    %v2782 = vmax.f32 %v2779, 0.0
    %v2783 = vld [vmem:[%s9] sm:$0xff]
    %v2784 = vld [vmem:[%s9 + $0x8] sm:$0xff]
    %v2785 = vld [vmem:[%s9 + $0x10] sm:$0xff]
    %v2786 = vld [vmem:[%s9 + $0x18] sm:$0xff]
    %v2787 = vld [vmem:[%s9 + $0x20] sm:$0xff]
    %v2788 = vld [vmem:[%s9 + $0x28] sm:$0xff]
    %v2789 = vld [vmem:[%s9 + $0x30] sm:$0xff]
    %v2790 = vld [vmem:[%s9 + $0x38] sm:$0xff]
    %v2791 = vld [vmem:[%s9 + $0x40] sm:$0xff]
    %v2792 = vld [vmem:[%s9 + $0x48] sm:$0xff]
    %v2793 = vld [vmem:[%s9 + $0x50] sm:$0xff]
    %v2794 = vld [vmem:[%s9 + $0x58] sm:$0xff]
    %v2795 = vld [vmem:[%s9 + $0x60] sm:$0xff]
    %v2796 = vld [vmem:[%s9 + $0x68] sm:$0xff]
    %v2797 = vld [vmem:[%s9 + $0x70] sm:$0xff]
    %v2798 = vld [vmem:[%s9 + $0x78] sm:$0xff]
    %v2799 = vld [vmem:[%s10] sm:$0x1]
    %v2801 = vlaneseq
    %v2802 = vshrl.u32 %v2801, 7
    %v2803 = vsub.s32 0, %v2802
    %v2804 = vrot.slane %v2799, %v2803
    %2806 = vmatprep.subr.mxu0 0.0
    %2807 = vmatpush1.msra.mxu0 %v2783
    %2808 = vmatprep.subr.mxu0 0.0
    %2809 = vmatpush1.msra.mxu0 %v2784
    %2810 = vmatprep.subr.mxu0 0.0
    %2811 = vmatpush1.msra.mxu0 %v2785
    %2812 = vmatprep.subr.mxu0 0.0
    %2813 = vmatpush1.msra.mxu0 %v2786
    %2814 = vmatprep.subr.mxu0 0.0
    %2815 = vmatpush1.msra.mxu0 %v2787
    %2816 = vmatprep.subr.mxu0 0.0
    %2817 = vmatpush1.msra.mxu0 %v2788
    %2818 = vmatprep.subr.mxu0 0.0
    %2819 = vmatpush1.msra.mxu0 %v2789
    %2820 = vmatprep.subr.mxu0 0.0
    %2821 = vmatpush1.msra.mxu0 %v2790
    %2822 = vmatprep.subr.mxu0 0.0
    %2823 = vmatpush1.msra.mxu0 %v2791
    %2824 = vmatprep.subr.mxu0 0.0
    %2825 = vmatpush1.msra.mxu0 %v2792
    %2826 = vmatprep.subr.mxu0 0.0
    %2827 = vmatpush1.msra.mxu0 %v2793
    %2828 = vmatprep.subr.mxu0 0.0
    %2829 = vmatpush1.msra.mxu0 %v2794
    %2830 = vmatprep.subr.mxu0 0.0
    %2831 = vmatpush1.msra.mxu0 %v2795
    %2832 = vmatprep.subr.mxu0 0.0
    %2833 = vmatpush1.msra.mxu0 %v2796
    %2834 = vmatprep.subr.mxu0 0.0
    %2835 = vmatpush1.msra.mxu0 %v2797
    %2836 = vmatprep.subr.mxu0 0.0
    %2837 = vmatpush1.msra.mxu0 %v2798
    %2838 = vmatprep.subr.mxu0 0.0
    %2839 = vmatpush1.msra.mxu0 0.0
    %2840 = vmatprep.subr.mxu0 0.0
    %2841 = vmatpush1.msra.mxu0 0.0
    %2842 = vmatprep.subr.mxu0 0.0
    %2843 = vmatpush1.msra.mxu0 0.0
    %2844 = vmatprep.subr.mxu0 0.0
    %2845 = vmatpush1.msra.mxu0 0.0
    %2846 = vmatprep.subr.mxu0 0.0
    %2847 = vmatpush1.msra.mxu0 0.0
    %2848 = vmatprep.subr.mxu0 0.0
    %2849 = vmatpush1.msra.mxu0 0.0
    %2850 = vmatprep.subr.mxu0 0.0
    %2851 = vmatpush1.msra.mxu0 0.0
    %2852 = vmatprep.subr.mxu0 0.0
    %2853 = vmatpush1.msra.mxu0 0.0
    %2854 = vmatprep.subr.mxu0 0.0
    %2855 = vmatpush1.msra.mxu0 0.0
    %2856 = vmatprep.subr.mxu0 0.0
    %2857 = vmatpush1.msra.mxu0 0.0
    %2858 = vmatprep.subr.mxu0 0.0
    %2859 = vmatpush1.msra.mxu0 0.0
    %2860 = vmatprep.subr.mxu0 0.0
    %2861 = vmatpush1.msra.mxu0 0.0
    %2862 = vmatprep.subr.mxu0 0.0
    %2863 = vmatpush1.msra.mxu0 0.0
    %2864 = vmatprep.subr.mxu0 0.0
    %2865 = vmatpush1.msra.mxu0 0.0
    %2866 = vmatprep.subr.mxu0 0.0
    %2867 = vmatpush1.msra.mxu0 0.0
    %2868 = vmatprep.subr.mxu0 0.0
    %2869 = vmatpush1.msra.mxu0 0.0
    %2870 = vmatprep.mubr.f32.mxu0 0.0
    %2871 = vmatmul.mubr.f32.gmra.mrb[0].mxu0 %v2782
    %v2872 = vpop.f32.mrb[0].mxu0
    %v2873 = vadd.f32 %v2804, %v2872
    %v2874 = vpop.f32.mrb[0].mxu0
    %2875 = vdwg.mxu0
    %2876 = vst [vmem:[%s11] sm:$0xff] %v2873
    // Predicated region
    $region62: #{lenet_forward.1} parent=1 // pred_check
      _
    $region63: #{lenet_forward.1} parent=1 // pred_check_branch
      %2878 = sbr.rel (0) target = $region65
    $region64: #{lenet_forward.1} parent=1 // pred_region
      _
    $region65: #{lenet_forward.1} parent=1 // pred_fallthru
      _
    // Predicated region
    $region66: #{lenet_forward.1} parent=1 // pred_check
      _
    $region67: #{lenet_forward.1} parent=1 // pred_check_branch
      %2880 = sbr.rel (0) target = $region69
    $region68: #{lenet_forward.1} parent=1 // pred_region
      _
    $region69: #{lenet_forward.1} parent=1 // pred_fallthru
      _
    %2881 = vsyncpa [#allocation7], 1
    %2882 = vsyncpa [#allocation9], 1

</llo_original>
